<compile_context>
chip_gen: v7x
topology: tpu7x:2x2x1
jax: 0.10.0
libtpu: 0.0.40
codegen_flags: <defaults>
</compile_context>

<pallas_src>
import math
import numpy as np
import jax
import jax.numpy as jnp
from jax import lax
from jax.experimental import pallas as pl
from jax.experimental.pallas import tpu as pltpu


# ---------------------------------------------------------------------------
# Gate networks (plain JAX). conv1's gates depend only on the block input x,
# so they are evaluated here and folded into conv1's weights before the
# kernel. conv2's gates depend on the intermediate h and are evaluated
# *inside* the kernel (h never leaves VMEM).
# ---------------------------------------------------------------------------
def conv1d_k3_same(x, w, b):
    # x: (B, Cin, L), w: (Cout, Cin, 3), b: (Cout,); padding=1, stride=1
    L = x.shape[-1]
    xp = jnp.pad(x, ((0, 0), (0, 0), (1, 1)))
    out = b[None, :, None]
    for k in range(3):
        out = out + jnp.einsum('oc,bcl->bol', w[:, :, k], xp[:, :, k:k + L],
                               precision=lax.Precision.HIGHEST)
    return out


def channel_freq_gate(x, w1, b1, w2, b2):
    # x: (B, C, F, T) -> (B, 3, C), indexed [b, kh, c]
    m = jnp.swapaxes(jnp.mean(x, axis=3), 1, 2)      # (B, F, C)
    h = jax.nn.relu(conv1d_k3_same(m, w1, b1))
    return conv1d_k3_same(h, w2, b2)


def channel_time_gate(x, w1, b1, w2, b2):
    # x: (B, C, F, T) -> (B, 3, C), indexed [b, kw, c]
    m = jnp.swapaxes(jnp.mean(x, axis=2), 1, 2)      # (B, T, C)
    h = jax.nn.relu(conv1d_k3_same(m, w1, b1))
    return conv1d_k3_same(h, w2, b2)


# ---------------------------------------------------------------------------
# BasicBlock forward (stride=1, downsample=None).
# Flat spatial layout: q = f*(T+2) + t with 2 zero "junk" lanes per row and a
# zero tail up to WA (multiple of 128).  A conv tap (kh,kw) is a circular lane
# rotation by (kh-1)*(T+2)+(kw-1); the zero tail/junk lanes reproduce the
# conv's zero padding exactly for all valid output positions.
# TODO(synk): BatchNorm2d is applied in inference mode (running stats); the
# PyTorch training-mode batch-statistics path is not reproduced.
# ---------------------------------------------------------------------------
def basic_block_forward(x, p):
    B, C, F, T = x.shape
    O = p['W1'].shape[0]
    assert p['W2'].shape == (O, O, 3, 3) and C == O, "residual needs inplanes == planes"
    T2 = T + 2
    W = F * T2
    # lane-dense compute width: multiple of 128 with a zero tail >= T2+1
    WA = pl.cdiv(W + T2 + 1, 128) * 128
    # channels padded to the bf16 sublane tile so im2col row-block stores are
    # tile aligned (and sublane utilization improves at real sizes)
    P = max(16, ((O + 15) // 16) * 16)

    eps = 1e-5
    sc1 = p['bn1_gamma'] / jnp.sqrt(p['bn1_var'] + eps)
    bi1 = p['bn1_beta'] - p['bn1_mean'] * sc1
    sc2 = p['bn2_gamma'] / jnp.sqrt(p['bn2_var'] + eps)
    bi2 = p['bn2_beta'] - p['bn2_mean'] * sc2

    # conv1 gates depend only on x -> evaluate here, fold gate & bn1 scale into weight
    gf1 = channel_freq_gate(x, *p['freq1'])                           # (B, 3, C)
    gt1 = channel_time_gate(x, *p['time1'])                           # (B, 3, C)
    gate1 = jax.nn.sigmoid(gf1[:, :, None, :] + gt1[:, None, :, :])   # (B, kh, kw, C)
    w1_t = jnp.transpose(p['W1'], (0, 2, 3, 1))                       # (O, kh, kw, C)
    wg1 = w1_t[None] * gate1[:, None] * sc1[None, :, None, None, None]  # (B,O,3,3,C)
    wg1 = jnp.pad(wg1, ((0, 0), (0, P - O), (0, 0), (0, 0), (0, P - C)))
    wg1 = wg1.reshape(B, P, 9 * P).astype(jnp.bfloat16)

    # conv2 weight with bn2-scale folded, transposed to rows = (tap, c_in) so the
    # in-kernel gate multiplies weight ROWS (weight-side gating)
    w2t = jnp.transpose(p['W2'], (2, 3, 1, 0)) * sc2[None, None, None, :]  # (kh,kw,Cin,O)
    w2t = jnp.pad(w2t, ((0, 0), (0, 0), (0, P - O), (0, P - O)))
    w2t = w2t.reshape(9 * P, P).astype(jnp.float32)

    bias = jnp.pad(jnp.stack([bi1, bi2], axis=1),
                   ((0, P - O), (0, 0))).astype(jnp.float32)          # (P, 2)

    # flat, lane-dense bf16 input: xin[b,c,f*T2+t] = x[b,c,f,t]; zeros elsewhere
    xin = jnp.pad(x, ((0, 0), (0, P - C), (0, 0), (0, 2))).reshape(B, P, W)
    xin = jnp.pad(xin, ((0, 0), (0, 0), (0, WA - W))).astype(jnp.bfloat16)

    # validity mask and mean-pooling matrices for the flat layout
    q = jnp.arange(WA)
    f_idx, t_idx = q // T2, q % T2
    valid = ((q < W) & (t_idx < T)).astype(jnp.float32)
    mask = valid[None, :]                                             # (1, WA)
    pool_t = valid[:, None] * (f_idx[:, None] == jnp.arange(F)[None, :]
                               ).astype(jnp.float32) / T              # (WA, F)
    pool_f = valid[:, None] * (t_idx[:, None] == jnp.arange(T)[None, :]
                               ).astype(jnp.float32) / F              # (WA, T)

    # gate-head weights: the 3 conv1d taps pre-concatenated -> ONE matmul/layer
    def head_params(w1, b1, w2, b2):
        w1c = jnp.concatenate([w1[:, :, k].T for k in range(3)], axis=0)   # (3L, L)
        w2c = jnp.concatenate([w2[:, :, k].T for k in range(3)], axis=0)   # (3L, 3)
        return (w1c.astype(jnp.float32), b1[None, :].astype(jnp.float32),
                w2c.astype(jnp.float32), b2[None, :].astype(jnp.float32))

    gfw1, gfb1, gfw2, gfb2 = head_params(*p['freq2'])
    gtw1, gtb1, gtw2, gtb2 = head_params(*p['time2'])

    taps = [(kh, kw) for kh in range(3) for kw in range(3)]

    def rot(a, s):
        # out[:, q] = a[:, (q + s) mod WA]; zero tail == conv zero padding.
        s = s % WA
        if s == 0:
            return a
        return jnp.concatenate([a[:, s:], a[:, :s]], axis=1)

    # ---------------- fused BasicBlock kernel (one batch element / step) ----
    def kernel(xin_ref, wg1_ref, w2t_ref, bias_ref, mask_ref,
               pool_t_ref, pool_f_ref,
               gfw1_ref, gfb1_ref, gfw2_ref, gfb2_ref,
               gtw1_ref, gtb1_ref, gtw2_ref, gtb2_ref,
               out_ref, xcols_ref, hcols_ref):
        xin = xin_ref[0]                              # (P, WA) bf16, offset-0 aligned
        mask_v = mask_ref[...]                        # (1, WA) f32

        # ---- conv1 (+BN1 scale folded): bf16 im2col via lane rolls + 1 MXU matmul
        for i, (kh, kw) in enumerate(taps):
            xcols_ref[i * P:(i + 1) * P, :] = rot(xin, (kh - 1) * T2 + (kw - 1))
        y1 = jnp.dot(wg1_ref[0], xcols_ref[...],
                     preferred_element_type=jnp.float32)              # (P, WA)
        # relu(bn1(conv1(x))); zeros at junk/tail lanes (feeds conv2 padding)
        h = jnp.maximum(y1 + bias_ref[:, 0:1], 0.0) * mask_v          # (P, WA) f32

        # ---- conv2 gates (ChannelFreqGate / ChannelTimeGate on h), f32, tiny
        mean_t = jnp.dot(h, pool_t_ref[...], preferred_element_type=jnp.float32)  # (P,F)
        mean_f = jnp.dot(h, pool_f_ref[...], preferred_element_type=jnp.float32)  # (P,T)
        cmask = (lax.broadcasted_iota(jnp.int32, (P, 1), 0) < C).astype(jnp.float32)

        def gate_head(m, w1c, b1, w2c, b2):
            # Conv1d(k=3, pad=1) over the channel axis: sublane shifts + one matmul.
            def shift3(a):
                z = jnp.zeros((1, a.shape[1]), a.dtype)
                dn = jnp.concatenate([z, a[:-1, :]], axis=0)          # a[c-1]
                up = jnp.concatenate([a[1:, :], z], axis=0)           # a[c+1]
                return jnp.concatenate([dn, a, up], axis=1)           # (P, 3L)
            g1 = jnp.maximum(jnp.dot(shift3(m), w1c[...],
                                     preferred_element_type=jnp.float32) + b1[...], 0.0)
            g1 = g1 * cmask      # padded channels act as the conv1d zero padding
            return jnp.dot(shift3(g1), w2c[...],
                           preferred_element_type=jnp.float32) + b2[...]   # (P, 3)

        gf2 = gate_head(mean_t, gfw1_ref, gfb1_ref, gfw2_ref, gfb2_ref)  # [c, kh]
        gt2 = gate_head(mean_f, gtw1_ref, gtb1_ref, gtw2_ref, gtb2_ref)  # [c, kw]

        # ---- conv2: ungated bf16 im2col of h (lane rolls, decoupled from gates)
        hb = h.astype(jnp.bfloat16)
        for i, (kh, kw) in enumerate(taps):
            hcols_ref[i * P:(i + 1) * P, :] = rot(hb, (kh - 1) * T2 + (kw - 1))

        # ---- gate folded into the weight (9*P*P mults) + one MXU matmul
        wblocks = []
        for i, (kh, kw) in enumerate(taps):
            g = jax.nn.sigmoid(gf2[:, kh:kh + 1] + gt2[:, kw:kw + 1])    # (P, 1)
            wblocks.append(w2t_ref[i * P:(i + 1) * P, :] * g)
        w2g = jnp.concatenate(wblocks, axis=0).astype(jnp.bfloat16)      # (9P, P)
        y2 = lax.dot_general(w2g, hcols_ref[...],
                             dimension_numbers=(((0,), (0,)), ((), ())),
                             preferred_element_type=jnp.float32)         # (P, WA)

        # ---- +residual (already resident, offset 0) + BN2 bias + ReLU
        res = xin.astype(jnp.float32)
        out_ref[0] = jnp.maximum(y2 + bias_ref[:, 1:2] + res, 0.0).astype(out_ref.dtype)

    grid_spec = pltpu.PrefetchScalarGridSpec(
        num_scalar_prefetch=0,
        grid=(B,),
        in_specs=[
            pl.BlockSpec((1, P, WA), lambda b: (b, 0, 0)),        # flat bf16 input
            pl.BlockSpec((1, P, 9 * P), lambda b: (b, 0, 0)),     # gated conv1 weight
            pl.BlockSpec((9 * P, P), lambda b: (0, 0)),           # conv2 weight^T (bn2 folded)
            pl.BlockSpec((P, 2), lambda b: (0, 0)),               # bn biases
            pl.BlockSpec((1, WA), lambda b: (0, 0)),              # validity mask
            pl.BlockSpec((WA, F), lambda b: (0, 0)),              # mean-over-T pooling
            pl.BlockSpec((WA, T), lambda b: (0, 0)),              # mean-over-F pooling
            pl.BlockSpec((3 * F, F), lambda b: (0, 0)),           # freq-gate conv1 w (fused taps)
            pl.BlockSpec((1, F), lambda b: (0, 0)),               # freq-gate conv1 b
            pl.BlockSpec((3 * F, 3), lambda b: (0, 0)),           # freq-gate conv2 w
            pl.BlockSpec((1, 3), lambda b: (0, 0)),               # freq-gate conv2 b
            pl.BlockSpec((3 * T, T), lambda b: (0, 0)),           # time-gate conv1 w
            pl.BlockSpec((1, T), lambda b: (0, 0)),               # time-gate conv1 b
            pl.BlockSpec((3 * T, 3), lambda b: (0, 0)),           # time-gate conv2 w
            pl.BlockSpec((1, 3), lambda b: (0, 0)),               # time-gate conv2 b
        ],
        out_specs=pl.BlockSpec((1, P, WA), lambda b: (b, 0, 0)),
        scratch_shapes=[
            pltpu.VMEM((9 * P, WA), jnp.bfloat16),                # conv1 im2col (bf16)
            pltpu.VMEM((9 * P, WA), jnp.bfloat16),                # conv2 im2col (bf16)
        ],
    )

    out_flat = pl.pallas_call(
        kernel,
        out_shape=jax.ShapeDtypeStruct((B, P, WA), jnp.float32),
        grid_spec=grid_spec,
        compiler_params=pltpu.CompilerParams(
            dimension_semantics=("parallel",),
            vmem_limit_bytes=32 * 1024 * 1024),
    )(xin, wg1, w2t, bias, mask, pool_t, pool_f,
      gfw1, gfb1, gfw2, gfb2, gtw1, gtb1, gtw2, gtb2)

    # crop padded channels, the zero tail and the 2 junk lanes per frequency row
    return out_flat[:, :O, :W].reshape(B, O, F, T2)[:, :, :, :T]


# ---------------------------------------------------------------------------
# Deterministic parameter init (mirrors the PyTorch __init__ shapes).
# ---------------------------------------------------------------------------
def init_params(key, inplanes, planes, flen, tlen):
    ks = jax.random.split(key, 10)

    def kconv1d(k, cout, cin):
        std = math.sqrt(2.0 / (cout * 3))
        return jax.random.normal(k, (cout, cin, 3), jnp.float32) * std

    def kconv2d(k, cout, cin):
        std = math.sqrt(2.0 / (cout * 9))
        return jax.random.normal(k, (cout, cin, 3, 3), jnp.float32) * std

    def gate_params(k1, k2, length):
        return (kconv1d(k1, length, length), jnp.zeros((length,), jnp.float32),
                kconv1d(k2, 3, length), jnp.zeros((3,), jnp.float32))

    return dict(
        W1=kconv2d(ks[0], planes, inplanes),
        freq1=gate_params(ks[1], ks[2], flen),
        time1=gate_params(ks[3], ks[4], tlen),
        W2=kconv2d(ks[5], planes, planes),
        freq2=gate_params(ks[6], ks[7], flen),
        time2=gate_params(ks[8], ks[9], tlen),
        bn1_gamma=jnp.ones((planes,), jnp.float32),
        bn1_beta=jnp.zeros((planes,), jnp.float32),
        bn1_mean=jnp.zeros((planes,), jnp.float32),
        bn1_var=jnp.ones((planes,), jnp.float32),
        bn2_gamma=jnp.ones((planes,), jnp.float32),
        bn2_beta=jnp.zeros((planes,), jnp.float32),
        bn2_mean=jnp.zeros((planes,), jnp.float32),
        bn2_var=jnp.ones((planes,), jnp.float32),
    )


# ---------------------------------------------------------------------------
# Pure-JAX reference (independent path via lax.conv) for a correctness check.
# ---------------------------------------------------------------------------
def acnn2d_ref(x, W, freq_params, time_params):
    gf = channel_freq_gate(x, *freq_params)                         # (B, 3, C)
    gt = channel_time_gate(x, *time_params)                         # (B, 3, C)
    gate = jax.nn.sigmoid(gf[:, :, None, :] + gt[:, None, :, :])    # (B,kh,kw,C)
    wmod = W[None] * jnp.transpose(gate, (0, 3, 1, 2))[:, None]     # (B,O,C,3,3)

    def conv_one(xb, wb):
        return lax.conv_general_dilated(
            xb[None], wb, window_strides=(1, 1), padding=((1, 1), (1, 1)),
            dimension_numbers=('NCHW', 'OIHW', 'NCHW'),
            precision=lax.Precision.HIGHEST)[0]

    return jax.vmap(conv_one)(x, wmod)


def basic_block_ref(x, p):
    eps = 1e-5

    def bn(y, g, b, m, v):
        return ((y - m[None, :, None, None])
                / jnp.sqrt(v[None, :, None, None] + eps)
                * g[None, :, None, None] + b[None, :, None, None])

    h = jax.nn.relu(bn(acnn2d_ref(x, p['W1'], p['freq1'], p['time1']),
                       p['bn1_gamma'], p['bn1_beta'], p['bn1_mean'], p['bn1_var']))
    out = bn(acnn2d_ref(h, p['W2'], p['freq2'], p['time2']),
             p['bn2_gamma'], p['bn2_beta'], p['bn2_mean'], p['bn2_var'])
    return jax.nn.relu(out + x)


if __name__ == "__main__":
    B, C, F, T = 2, 4, 16, 16          # inplanes = planes = 4, flen = F, tlen = T
    key = jax.random.PRNGKey(0)
    kx, kp = jax.random.split(key)
    x = jax.random.normal(kx, (B, C, F, T), jnp.float32)
    params = init_params(kp, C, C, F, T)

    out = jax.block_until_ready(jax.jit(basic_block_forward)(x, params))
    assert out.shape == (B, C, F, T)

    ref = jax.block_until_ready(basic_block_ref(x, params))
    # tolerance accounts for bf16 operands (input, im2col, folded weights) with
    # f32 accumulation inside the kernel
    np.testing.assert_allclose(np.asarray(out), np.asarray(ref),
                               rtol=4e-2, atol=4e-2)
    print("KERNEL_OK")
</pallas_src>

<mosaic_0001>
module attributes {stable_mosaic.version = 11 : i64} {
  func.func @kernel(%arg0: i32, %arg1: memref<1x16x384xbf16, #tpu.memory_space<vmem>>, %arg2: memref<1x16x144xbf16, #tpu.memory_space<vmem>>, %arg3: memref<144x16xf32, #tpu.memory_space<vmem>>, %arg4: memref<16x2xf32, #tpu.memory_space<vmem>>, %arg5: memref<1x384xf32, #tpu.memory_space<vmem>>, %arg6: memref<384x16xf32, #tpu.memory_space<vmem>>, %arg7: memref<384x16xf32, #tpu.memory_space<vmem>>, %arg8: memref<48x16xf32, #tpu.memory_space<vmem>>, %arg9: memref<1x16xf32, #tpu.memory_space<vmem>>, %arg10: memref<48x3xf32, #tpu.memory_space<vmem>>, %arg11: memref<1x3xf32, #tpu.memory_space<vmem>>, %arg12: memref<48x16xf32, #tpu.memory_space<vmem>>, %arg13: memref<1x16xf32, #tpu.memory_space<vmem>>, %arg14: memref<48x3xf32, #tpu.memory_space<vmem>>, %arg15: memref<1x3xf32, #tpu.memory_space<vmem>>, %arg16: memref<1x16x384xf32, #tpu.memory_space<vmem>>, %arg17: memref<144x384xbf16, #tpu.memory_space<vmem>>, %arg18: memref<144x384xbf16, #tpu.memory_space<vmem>>) attributes {dimension_semantics = [#tpu.dimension_semantics<parallel>], iteration_bounds = array<i64: 2>, scalar_prefetch = 0 : i64, scratch_operands = 2 : i64, tpu.core_type = #tpu.core_type<tc>, window_params = [{transform_indices = @transform_0, window_bounds = array<i64: 1, 16, 384>}, {transform_indices = @transform_1, window_bounds = array<i64: 1, 16, 144>}, {pipeline_mode = #tpu.pipeline_mode<synchronous>, transform_indices = @transform_2, window_bounds = array<i64: 144, 16>}, {pipeline_mode = #tpu.pipeline_mode<synchronous>, transform_indices = @transform_3, window_bounds = array<i64: 16, 2>}, {pipeline_mode = #tpu.pipeline_mode<synchronous>, transform_indices = @transform_4, window_bounds = array<i64: 1, 384>}, {pipeline_mode = #tpu.pipeline_mode<synchronous>, transform_indices = @transform_5, window_bounds = array<i64: 384, 16>}, {pipeline_mode = #tpu.pipeline_mode<synchronous>, transform_indices = @transform_6, window_bounds = array<i64: 384, 16>}, {pipeline_mode = #tpu.pipeline_mode<synchronous>, transform_indices = @transform_7, window_bounds = array<i64: 48, 16>}, {pipeline_mode = #tpu.pipeline_mode<synchronous>, transform_indices = @transform_8, window_bounds = array<i64: 1, 16>}, {pipeline_mode = #tpu.pipeline_mode<synchronous>, transform_indices = @transform_9, window_bounds = array<i64: 48, 3>}, {pipeline_mode = #tpu.pipeline_mode<synchronous>, transform_indices = @transform_10, window_bounds = array<i64: 1, 3>}, {pipeline_mode = #tpu.pipeline_mode<synchronous>, transform_indices = @transform_11, window_bounds = array<i64: 48, 16>}, {pipeline_mode = #tpu.pipeline_mode<synchronous>, transform_indices = @transform_12, window_bounds = array<i64: 1, 16>}, {pipeline_mode = #tpu.pipeline_mode<synchronous>, transform_indices = @transform_13, window_bounds = array<i64: 48, 3>}, {pipeline_mode = #tpu.pipeline_mode<synchronous>, transform_indices = @transform_14, window_bounds = array<i64: 1, 3>}, {transform_indices = @transform_15, window_bounds = array<i64: 1, 16, 384>}]} {
    %c0 = arith.constant 0 : index
    %c0_0 = arith.constant 0 : index
    %c0_1 = arith.constant 0 : index
    %0 = vector.load %arg1[%c0, %c0_0, %c0_1] : memref<1x16x384xbf16, #tpu.memory_space<vmem>>, vector<1x16x384xbf16>
    %1 = vector.shape_cast %0 : vector<1x16x384xbf16> to vector<16x384xbf16>
    %c0_2 = arith.constant 0 : index
    %c0_3 = arith.constant 0 : index
    %2 = vector.load %arg5[%c0_2, %c0_3] : memref<1x384xf32, #tpu.memory_space<vmem>>, vector<1x384xf32>
    %3 = vector.extract_strided_slice %1 {offsets = [0, 365], sizes = [16, 19], strides = [1, 1]} : vector<16x384xbf16> to vector<16x19xbf16>
    %4 = vector.extract_strided_slice %1 {offsets = [0, 0], sizes = [16, 365], strides = [1, 1]} : vector<16x384xbf16> to vector<16x365xbf16>
    %5 = tpu.concatenate %3, %4 in 1 : vector<16x19xbf16>, vector<16x365xbf16> -> vector<16x384xbf16>
    %c0_4 = arith.constant 0 : index
    %c0_5 = arith.constant 0 : index
    %6 = vector.load %arg17[%c0_4, %c0_5] : memref<144x384xbf16, #tpu.memory_space<vmem>>, vector<16x384xbf16>
    tpu.vector_store %arg17[%c0_4, %c0_5], %5 {strides = array<i32>} : memref<144x384xbf16, #tpu.memory_space<vmem>>, vector<16x384xbf16>,
    %7 = vector.extract_strided_slice %1 {offsets = [0, 366], sizes = [16, 18], strides = [1, 1]} : vector<16x384xbf16> to vector<16x18xbf16>
    %8 = vector.extract_strided_slice %1 {offsets = [0, 0], sizes = [16, 366], strides = [1, 1]} : vector<16x384xbf16> to vector<16x366xbf16>
    %9 = tpu.concatenate %7, %8 in 1 : vector<16x18xbf16>, vector<16x366xbf16> -> vector<16x384xbf16>
    %c16 = arith.constant 16 : index
    %c0_6 = arith.constant 0 : index
    %10 = vector.load %arg17[%c16, %c0_6] : memref<144x384xbf16, #tpu.memory_space<vmem>>, vector<16x384xbf16>
    tpu.vector_store %arg17[%c16, %c0_6], %9 {strides = array<i32>} : memref<144x384xbf16, #tpu.memory_space<vmem>>, vector<16x384xbf16>,
    %11 = vector.extract_strided_slice %1 {offsets = [0, 367], sizes = [16, 17], strides = [1, 1]} : vector<16x384xbf16> to vector<16x17xbf16>
    %12 = vector.extract_strided_slice %1 {offsets = [0, 0], sizes = [16, 367], strides = [1, 1]} : vector<16x384xbf16> to vector<16x367xbf16>
    %13 = tpu.concatenate %11, %12 in 1 : vector<16x17xbf16>, vector<16x367xbf16> -> vector<16x384xbf16>
    %c32 = arith.constant 32 : index
    %c0_7 = arith.constant 0 : index
    %14 = vector.load %arg17[%c32, %c0_7] : memref<144x384xbf16, #tpu.memory_space<vmem>>, vector<16x384xbf16>
    tpu.vector_store %arg17[%c32, %c0_7], %13 {strides = array<i32>} : memref<144x384xbf16, #tpu.memory_space<vmem>>, vector<16x384xbf16>,
    %15 = vector.extract_strided_slice %1 {offsets = [0, 383], sizes = [16, 1], strides = [1, 1]} : vector<16x384xbf16> to vector<16x1xbf16>
    %16 = vector.extract_strided_slice %1 {offsets = [0, 0], sizes = [16, 383], strides = [1, 1]} : vector<16x384xbf16> to vector<16x383xbf16>
    %17 = tpu.concatenate %15, %16 in 1 : vector<16x1xbf16>, vector<16x383xbf16> -> vector<16x384xbf16>
    %c48 = arith.constant 48 : index
    %c0_8 = arith.constant 0 : index
    %18 = vector.load %arg17[%c48, %c0_8] : memref<144x384xbf16, #tpu.memory_space<vmem>>, vector<16x384xbf16>
    tpu.vector_store %arg17[%c48, %c0_8], %17 {strides = array<i32>} : memref<144x384xbf16, #tpu.memory_space<vmem>>, vector<16x384xbf16>,
    %c64 = arith.constant 64 : index
    %c0_9 = arith.constant 0 : index
    %19 = vector.load %arg17[%c64, %c0_9] : memref<144x384xbf16, #tpu.memory_space<vmem>>, vector<16x384xbf16>
    tpu.vector_store %arg17[%c64, %c0_9], %1 {strides = array<i32>} : memref<144x384xbf16, #tpu.memory_space<vmem>>, vector<16x384xbf16>,
    %20 = vector.extract_strided_slice %1 {offsets = [0, 1], sizes = [16, 383], strides = [1, 1]} : vector<16x384xbf16> to vector<16x383xbf16>
    %21 = vector.extract_strided_slice %1 {offsets = [0, 0], sizes = [16, 1], strides = [1, 1]} : vector<16x384xbf16> to vector<16x1xbf16>
    %22 = tpu.concatenate %20, %21 in 1 : vector<16x383xbf16>, vector<16x1xbf16> -> vector<16x384xbf16>
    %c80 = arith.constant 80 : index
    %c0_10 = arith.constant 0 : index
    %23 = vector.load %arg17[%c80, %c0_10] : memref<144x384xbf16, #tpu.memory_space<vmem>>, vector<16x384xbf16>
    tpu.vector_store %arg17[%c80, %c0_10], %22 {strides = array<i32>} : memref<144x384xbf16, #tpu.memory_space<vmem>>, vector<16x384xbf16>,
    %24 = vector.extract_strided_slice %1 {offsets = [0, 17], sizes = [16, 367], strides = [1, 1]} : vector<16x384xbf16> to vector<16x367xbf16>
    %25 = vector.extract_strided_slice %1 {offsets = [0, 0], sizes = [16, 17], strides = [1, 1]} : vector<16x384xbf16> to vector<16x17xbf16>
    %26 = tpu.concatenate %24, %25 in 1 : vector<16x367xbf16>, vector<16x17xbf16> -> vector<16x384xbf16>
    %c96 = arith.constant 96 : index
    %c0_11 = arith.constant 0 : index
    %27 = vector.load %arg17[%c96, %c0_11] : memref<144x384xbf16, #tpu.memory_space<vmem>>, vector<16x384xbf16>
    tpu.vector_store %arg17[%c96, %c0_11], %26 {strides = array<i32>} : memref<144x384xbf16, #tpu.memory_space<vmem>>, vector<16x384xbf16>,
    %28 = vector.extract_strided_slice %1 {offsets = [0, 18], sizes = [16, 366], strides = [1, 1]} : vector<16x384xbf16> to vector<16x366xbf16>
    %29 = vector.extract_strided_slice %1 {offsets = [0, 0], sizes = [16, 18], strides = [1, 1]} : vector<16x384xbf16> to vector<16x18xbf16>
    %30 = tpu.concatenate %28, %29 in 1 : vector<16x366xbf16>, vector<16x18xbf16> -> vector<16x384xbf16>
    %c112 = arith.constant 112 : index
    %c0_12 = arith.constant 0 : index
    %31 = vector.load %arg17[%c112, %c0_12] : memref<144x384xbf16, #tpu.memory_space<vmem>>, vector<16x384xbf16>
    tpu.vector_store %arg17[%c112, %c0_12], %30 {strides = array<i32>} : memref<144x384xbf16, #tpu.memory_space<vmem>>, vector<16x384xbf16>,
    %32 = vector.extract_strided_slice %1 {offsets = [0, 19], sizes = [16, 365], strides = [1, 1]} : vector<16x384xbf16> to vector<16x365xbf16>
    %33 = vector.extract_strided_slice %1 {offsets = [0, 0], sizes = [16, 19], strides = [1, 1]} : vector<16x384xbf16> to vector<16x19xbf16>
    %34 = tpu.concatenate %32, %33 in 1 : vector<16x365xbf16>, vector<16x19xbf16> -> vector<16x384xbf16>
    %c128 = arith.constant 128 : index
    %c0_13 = arith.constant 0 : index
    %35 = vector.load %arg17[%c128, %c0_13] : memref<144x384xbf16, #tpu.memory_space<vmem>>, vector<16x384xbf16>
    tpu.vector_store %arg17[%c128, %c0_13], %34 {strides = array<i32>} : memref<144x384xbf16, #tpu.memory_space<vmem>>, vector<16x384xbf16>,
    %c0_14 = arith.constant 0 : index
    %c0_15 = arith.constant 0 : index
    %c0_16 = arith.constant 0 : index
    %36 = vector.load %arg2[%c0_14, %c0_15, %c0_16] : memref<1x16x144xbf16, #tpu.memory_space<vmem>>, vector<1x16x144xbf16>
    %37 = vector.shape_cast %36 : vector<1x16x144xbf16> to vector<16x144xbf16>
    %c0_17 = arith.constant 0 : index
    %c0_18 = arith.constant 0 : index
    %38 = vector.load %arg17[%c0_17, %c0_18] : memref<144x384xbf16, #tpu.memory_space<vmem>>, vector<144x384xbf16>
    %cst = arith.constant dense<0.000000e+00> : vector<16x384xf32>
    %39 = tpu.matmul %37, %38, %cst {dimension_numbers = #tpu.dot_dimension_numbers<[1], [0], [0], [1], [0, 0, 1, 1], [], []>} : vector<16x144xbf16>, vector<144x384xbf16>, vector<16x384xf32> -> vector<16x384xf32>
    %c0_19 = arith.constant 0 : index
    %c0_20 = arith.constant 0 : index
    %40 = vector.load %arg4[%c0_19, %c0_20] : memref<16x2xf32, #tpu.memory_space<vmem>>, vector<16x1xf32>
    %41 = vector.broadcast %40 : vector<16x1xf32> to vector<16x384xf32>
    %42 = arith.addf %39, %41 : vector<16x384xf32>
    %cst_21 = arith.constant 0.000000e+00 : f32
    %43 = vector.broadcast %cst_21 : f32 to vector<16x384xf32>
    %44 = arith.maximumf %42, %43 : vector<16x384xf32>
    %45 = vector.broadcast %2 : vector<1x384xf32> to vector<16x384xf32>
    %46 = arith.mulf %44, %45 : vector<16x384xf32>
    %c0_22 = arith.constant 0 : index
    %c0_23 = arith.constant 0 : index
    %47 = vector.load %arg6[%c0_22, %c0_23] : memref<384x16xf32, #tpu.memory_space<vmem>>, vector<384x16xf32>
    %cst_24 = arith.constant dense<0.000000e+00> : vector<16x16xf32>
    %48 = tpu.matmul %46, %47, %cst_24 {dimension_numbers = #tpu.dot_dimension_numbers<[1], [0], [0], [1], [0, 0, 1, 1], [], []>} : vector<16x384xf32>, vector<384x16xf32>, vector<16x16xf32> -> vector<16x16xf32>
    %c0_25 = arith.constant 0 : index
    %c0_26 = arith.constant 0 : index
    %49 = vector.load %arg7[%c0_25, %c0_26] : memref<384x16xf32, #tpu.memory_space<vmem>>, vector<384x16xf32>
    %cst_27 = arith.constant dense<0.000000e+00> : vector<16x16xf32>
    %50 = tpu.matmul %46, %49, %cst_27 {dimension_numbers = #tpu.dot_dimension_numbers<[1], [0], [0], [1], [0, 0, 1, 1], [], []>} : vector<16x384xf32>, vector<384x16xf32>, vector<16x16xf32> -> vector<16x16xf32>
    %51 = tpu.iota {dimensions = array<i32: 0>} : vector<16x1xi32>
    %c4_i32 = arith.constant 4 : i32
    %52 = vector.broadcast %c4_i32 : i32 to vector<16x1xi32>
    %53 = arith.cmpi slt, %51, %52 : vector<16x1xi32>
    %54 = arith.extui %53 : vector<16x1xi1> to vector<16x1xi32>
    %55 = arith.sitofp %54 : vector<16x1xi32> to vector<16x1xf32>
    %cst_28 = arith.constant 0.000000e+00 : f32
    %56 = vector.broadcast %cst_28 : f32 to vector<1x16xf32>
    %57 = vector.extract_strided_slice %48 {offsets = [0, 0], sizes = [15, 16], strides = [1, 1]} : vector<16x16xf32> to vector<15x16xf32>
    %58 = tpu.concatenate %56, %57 in 0 : vector<1x16xf32>, vector<15x16xf32> -> vector<16x16xf32>
    %59 = vector.extract_strided_slice %48 {offsets = [1, 0], sizes = [15, 16], strides = [1, 1]} : vector<16x16xf32> to vector<15x16xf32>
    %60 = tpu.concatenate %59, %56 in 0 : vector<15x16xf32>, vector<1x16xf32> -> vector<16x16xf32>
    %61 = tpu.concatenate %58, %48, %60 in 1 : vector<16x16xf32>, vector<16x16xf32>, vector<16x16xf32> -> vector<16x48xf32>
    %c0_29 = arith.constant 0 : index
    %c0_30 = arith.constant 0 : index
    %62 = vector.load %arg8[%c0_29, %c0_30] : memref<48x16xf32, #tpu.memory_space<vmem>>, vector<48x16xf32>
    %cst_31 = arith.constant dense<0.000000e+00> : vector<16x16xf32>
    %63 = tpu.matmul %61, %62, %cst_31 {dimension_numbers = #tpu.dot_dimension_numbers<[1], [0], [0], [1], [0, 0, 1, 1], [], []>} : vector<16x48xf32>, vector<48x16xf32>, vector<16x16xf32> -> vector<16x16xf32>
    %c0_32 = arith.constant 0 : index
    %c0_33 = arith.constant 0 : index
    %64 = vector.load %arg9[%c0_32, %c0_33] : memref<1x16xf32, #tpu.memory_space<vmem>>, vector<1x16xf32>
    %65 = vector.broadcast %64 : vector<1x16xf32> to vector<16x16xf32>
    %66 = arith.addf %63, %65 : vector<16x16xf32>
    %cst_34 = arith.constant 0.000000e+00 : f32
    %67 = vector.broadcast %cst_34 : f32 to vector<16x16xf32>
    %68 = arith.maximumf %66, %67 : vector<16x16xf32>
    %69 = vector.broadcast %55 : vector<16x1xf32> to vector<16x16xf32>
    %70 = arith.mulf %68, %69 : vector<16x16xf32>
    %cst_35 = arith.constant 0.000000e+00 : f32
    %71 = vector.broadcast %cst_35 : f32 to vector<1x16xf32>
    %72 = vector.extract_strided_slice %70 {offsets = [0, 0], sizes = [15, 16], strides = [1, 1]} : vector<16x16xf32> to vector<15x16xf32>
    %73 = tpu.concatenate %71, %72 in 0 : vector<1x16xf32>, vector<15x16xf32> -> vector<16x16xf32>
    %74 = vector.extract_strided_slice %70 {offsets = [1, 0], sizes = [15, 16], strides = [1, 1]} : vector<16x16xf32> to vector<15x16xf32>
    %75 = tpu.concatenate %74, %71 in 0 : vector<15x16xf32>, vector<1x16xf32> -> vector<16x16xf32>
    %76 = tpu.concatenate %73, %70, %75 in 1 : vector<16x16xf32>, vector<16x16xf32>, vector<16x16xf32> -> vector<16x48xf32>
    %c0_36 = arith.constant 0 : index
    %c0_37 = arith.constant 0 : index
    %77 = vector.load %arg10[%c0_36, %c0_37] : memref<48x3xf32, #tpu.memory_space<vmem>>, vector<48x3xf32>
    %cst_38 = arith.constant dense<0.000000e+00> : vector<16x3xf32>
    %78 = tpu.matmul %76, %77, %cst_38 {dimension_numbers = #tpu.dot_dimension_numbers<[1], [0], [0], [1], [0, 0, 1, 1], [], []>} : vector<16x48xf32>, vector<48x3xf32>, vector<16x3xf32> -> vector<16x3xf32>
    %c0_39 = arith.constant 0 : index
    %c0_40 = arith.constant 0 : index
    %79 = vector.load %arg11[%c0_39, %c0_40] : memref<1x3xf32, #tpu.memory_space<vmem>>, vector<1x3xf32>
    %80 = vector.broadcast %79 : vector<1x3xf32> to vector<16x3xf32>
    %81 = arith.addf %78, %80 : vector<16x3xf32>
    %cst_41 = arith.constant 0.000000e+00 : f32
    %82 = vector.broadcast %cst_41 : f32 to vector<1x16xf32>
    %83 = vector.extract_strided_slice %50 {offsets = [0, 0], sizes = [15, 16], strides = [1, 1]} : vector<16x16xf32> to vector<15x16xf32>
    %84 = tpu.concatenate %82, %83 in 0 : vector<1x16xf32>, vector<15x16xf32> -> vector<16x16xf32>
    %85 = vector.extract_strided_slice %50 {offsets = [1, 0], sizes = [15, 16], strides = [1, 1]} : vector<16x16xf32> to vector<15x16xf32>
    %86 = tpu.concatenate %85, %82 in 0 : vector<15x16xf32>, vector<1x16xf32> -> vector<16x16xf32>
    %87 = tpu.concatenate %84, %50, %86 in 1 : vector<16x16xf32>, vector<16x16xf32>, vector<16x16xf32> -> vector<16x48xf32>
    %c0_42 = arith.constant 0 : index
    %c0_43 = arith.constant 0 : index
    %88 = vector.load %arg12[%c0_42, %c0_43] : memref<48x16xf32, #tpu.memory_space<vmem>>, vector<48x16xf32>
    %cst_44 = arith.constant dense<0.000000e+00> : vector<16x16xf32>
    %89 = tpu.matmul %87, %88, %cst_44 {dimension_numbers = #tpu.dot_dimension_numbers<[1], [0], [0], [1], [0, 0, 1, 1], [], []>} : vector<16x48xf32>, vector<48x16xf32>, vector<16x16xf32> -> vector<16x16xf32>
    %c0_45 = arith.constant 0 : index
    %c0_46 = arith.constant 0 : index
    %90 = vector.load %arg13[%c0_45, %c0_46] : memref<1x16xf32, #tpu.memory_space<vmem>>, vector<1x16xf32>
    %91 = vector.broadcast %90 : vector<1x16xf32> to vector<16x16xf32>
    %92 = arith.addf %89, %91 : vector<16x16xf32>
    %cst_47 = arith.constant 0.000000e+00 : f32
    %93 = vector.broadcast %cst_47 : f32 to vector<16x16xf32>
    %94 = arith.maximumf %92, %93 : vector<16x16xf32>
    %95 = vector.broadcast %55 : vector<16x1xf32> to vector<16x16xf32>
    %96 = arith.mulf %94, %95 : vector<16x16xf32>
    %cst_48 = arith.constant 0.000000e+00 : f32
    %97 = vector.broadcast %cst_48 : f32 to vector<1x16xf32>
    %98 = vector.extract_strided_slice %96 {offsets = [0, 0], sizes = [15, 16], strides = [1, 1]} : vector<16x16xf32> to vector<15x16xf32>
    %99 = tpu.concatenate %97, %98 in 0 : vector<1x16xf32>, vector<15x16xf32> -> vector<16x16xf32>
    %100 = vector.extract_strided_slice %96 {offsets = [1, 0], sizes = [15, 16], strides = [1, 1]} : vector<16x16xf32> to vector<15x16xf32>
    %101 = tpu.concatenate %100, %97 in 0 : vector<15x16xf32>, vector<1x16xf32> -> vector<16x16xf32>
    %102 = tpu.concatenate %99, %96, %101 in 1 : vector<16x16xf32>, vector<16x16xf32>, vector<16x16xf32> -> vector<16x48xf32>
    %c0_49 = arith.constant 0 : index
    %c0_50 = arith.constant 0 : index
    %103 = vector.load %arg14[%c0_49, %c0_50] : memref<48x3xf32, #tpu.memory_space<vmem>>, vector<48x3xf32>
    %cst_51 = arith.constant dense<0.000000e+00> : vector<16x3xf32>
    %104 = tpu.matmul %102, %103, %cst_51 {dimension_numbers = #tpu.dot_dimension_numbers<[1], [0], [0], [1], [0, 0, 1, 1], [], []>} : vector<16x48xf32>, vector<48x3xf32>, vector<16x3xf32> -> vector<16x3xf32>
    %c0_52 = arith.constant 0 : index
    %c0_53 = arith.constant 0 : index
    %105 = vector.load %arg15[%c0_52, %c0_53] : memref<1x3xf32, #tpu.memory_space<vmem>>, vector<1x3xf32>
    %106 = vector.broadcast %105 : vector<1x3xf32> to vector<16x3xf32>
    %107 = arith.addf %104, %106 : vector<16x3xf32>
    %108 = arith.truncf %46 : vector<16x384xf32> to vector<16x384xbf16>
    %109 = vector.extract_strided_slice %108 {offsets = [0, 365], sizes = [16, 19], strides = [1, 1]} : vector<16x384xbf16> to vector<16x19xbf16>
    %110 = vector.extract_strided_slice %108 {offsets = [0, 0], sizes = [16, 365], strides = [1, 1]} : vector<16x384xbf16> to vector<16x365xbf16>
    %111 = tpu.concatenate %109, %110 in 1 : vector<16x19xbf16>, vector<16x365xbf16> -> vector<16x384xbf16>
    %c0_54 = arith.constant 0 : index
    %c0_55 = arith.constant 0 : index
    %112 = vector.load %arg18[%c0_54, %c0_55] : memref<144x384xbf16, #tpu.memory_space<vmem>>, vector<16x384xbf16>
    tpu.vector_store %arg18[%c0_54, %c0_55], %111 {strides = array<i32>} : memref<144x384xbf16, #tpu.memory_space<vmem>>, vector<16x384xbf16>,
    %113 = vector.extract_strided_slice %108 {offsets = [0, 366], sizes = [16, 18], strides = [1, 1]} : vector<16x384xbf16> to vector<16x18xbf16>
    %114 = vector.extract_strided_slice %108 {offsets = [0, 0], sizes = [16, 366], strides = [1, 1]} : vector<16x384xbf16> to vector<16x366xbf16>
    %115 = tpu.concatenate %113, %114 in 1 : vector<16x18xbf16>, vector<16x366xbf16> -> vector<16x384xbf16>
    %c16_56 = arith.constant 16 : index
    %c0_57 = arith.constant 0 : index
    %116 = vector.load %arg18[%c16_56, %c0_57] : memref<144x384xbf16, #tpu.memory_space<vmem>>, vector<16x384xbf16>
    tpu.vector_store %arg18[%c16_56, %c0_57], %115 {strides = array<i32>} : memref<144x384xbf16, #tpu.memory_space<vmem>>, vector<16x384xbf16>,
    %117 = vector.extract_strided_slice %108 {offsets = [0, 367], sizes = [16, 17], strides = [1, 1]} : vector<16x384xbf16> to vector<16x17xbf16>
    %118 = vector.extract_strided_slice %108 {offsets = [0, 0], sizes = [16, 367], strides = [1, 1]} : vector<16x384xbf16> to vector<16x367xbf16>
    %119 = tpu.concatenate %117, %118 in 1 : vector<16x17xbf16>, vector<16x367xbf16> -> vector<16x384xbf16>
    %c32_58 = arith.constant 32 : index
    %c0_59 = arith.constant 0 : index
    %120 = vector.load %arg18[%c32_58, %c0_59] : memref<144x384xbf16, #tpu.memory_space<vmem>>, vector<16x384xbf16>
    tpu.vector_store %arg18[%c32_58, %c0_59], %119 {strides = array<i32>} : memref<144x384xbf16, #tpu.memory_space<vmem>>, vector<16x384xbf16>,
    %121 = vector.extract_strided_slice %108 {offsets = [0, 383], sizes = [16, 1], strides = [1, 1]} : vector<16x384xbf16> to vector<16x1xbf16>
    %122 = vector.extract_strided_slice %108 {offsets = [0, 0], sizes = [16, 383], strides = [1, 1]} : vector<16x384xbf16> to vector<16x383xbf16>
    %123 = tpu.concatenate %121, %122 in 1 : vector<16x1xbf16>, vector<16x383xbf16> -> vector<16x384xbf16>
    %c48_60 = arith.constant 48 : index
    %c0_61 = arith.constant 0 : index
    %124 = vector.load %arg18[%c48_60, %c0_61] : memref<144x384xbf16, #tpu.memory_space<vmem>>, vector<16x384xbf16>
    tpu.vector_store %arg18[%c48_60, %c0_61], %123 {strides = array<i32>} : memref<144x384xbf16, #tpu.memory_space<vmem>>, vector<16x384xbf16>,
    %c64_62 = arith.constant 64 : index
    %c0_63 = arith.constant 0 : index
    %125 = vector.load %arg18[%c64_62, %c0_63] : memref<144x384xbf16, #tpu.memory_space<vmem>>, vector<16x384xbf16>
    tpu.vector_store %arg18[%c64_62, %c0_63], %108 {strides = array<i32>} : memref<144x384xbf16, #tpu.memory_space<vmem>>, vector<16x384xbf16>,
    %126 = vector.extract_strided_slice %108 {offsets = [0, 1], sizes = [16, 383], strides = [1, 1]} : vector<16x384xbf16> to vector<16x383xbf16>
    %127 = vector.extract_strided_slice %108 {offsets = [0, 0], sizes = [16, 1], strides = [1, 1]} : vector<16x384xbf16> to vector<16x1xbf16>
    %128 = tpu.concatenate %126, %127 in 1 : vector<16x383xbf16>, vector<16x1xbf16> -> vector<16x384xbf16>
    %c80_64 = arith.constant 80 : index
    %c0_65 = arith.constant 0 : index
    %129 = vector.load %arg18[%c80_64, %c0_65] : memref<144x384xbf16, #tpu.memory_space<vmem>>, vector<16x384xbf16>
    tpu.vector_store %arg18[%c80_64, %c0_65], %128 {strides = array<i32>} : memref<144x384xbf16, #tpu.memory_space<vmem>>, vector<16x384xbf16>,
    %130 = vector.extract_strided_slice %108 {offsets = [0, 17], sizes = [16, 367], strides = [1, 1]} : vector<16x384xbf16> to vector<16x367xbf16>
    %131 = vector.extract_strided_slice %108 {offsets = [0, 0], sizes = [16, 17], strides = [1, 1]} : vector<16x384xbf16> to vector<16x17xbf16>
    %132 = tpu.concatenate %130, %131 in 1 : vector<16x367xbf16>, vector<16x17xbf16> -> vector<16x384xbf16>
    %c96_66 = arith.constant 96 : index
    %c0_67 = arith.constant 0 : index
    %133 = vector.load %arg18[%c96_66, %c0_67] : memref<144x384xbf16, #tpu.memory_space<vmem>>, vector<16x384xbf16>
    tpu.vector_store %arg18[%c96_66, %c0_67], %132 {strides = array<i32>} : memref<144x384xbf16, #tpu.memory_space<vmem>>, vector<16x384xbf16>,
    %134 = vector.extract_strided_slice %108 {offsets = [0, 18], sizes = [16, 366], strides = [1, 1]} : vector<16x384xbf16> to vector<16x366xbf16>
    %135 = vector.extract_strided_slice %108 {offsets = [0, 0], sizes = [16, 18], strides = [1, 1]} : vector<16x384xbf16> to vector<16x18xbf16>
    %136 = tpu.concatenate %134, %135 in 1 : vector<16x366xbf16>, vector<16x18xbf16> -> vector<16x384xbf16>
    %c112_68 = arith.constant 112 : index
    %c0_69 = arith.constant 0 : index
    %137 = vector.load %arg18[%c112_68, %c0_69] : memref<144x384xbf16, #tpu.memory_space<vmem>>, vector<16x384xbf16>
    tpu.vector_store %arg18[%c112_68, %c0_69], %136 {strides = array<i32>} : memref<144x384xbf16, #tpu.memory_space<vmem>>, vector<16x384xbf16>,
    %138 = vector.extract_strided_slice %108 {offsets = [0, 19], sizes = [16, 365], strides = [1, 1]} : vector<16x384xbf16> to vector<16x365xbf16>
    %139 = vector.extract_strided_slice %108 {offsets = [0, 0], sizes = [16, 19], strides = [1, 1]} : vector<16x384xbf16> to vector<16x19xbf16>
    %140 = tpu.concatenate %138, %139 in 1 : vector<16x365xbf16>, vector<16x19xbf16> -> vector<16x384xbf16>
    %c128_70 = arith.constant 128 : index
    %c0_71 = arith.constant 0 : index
    %141 = vector.load %arg18[%c128_70, %c0_71] : memref<144x384xbf16, #tpu.memory_space<vmem>>, vector<16x384xbf16>
    tpu.vector_store %arg18[%c128_70, %c0_71], %140 {strides = array<i32>} : memref<144x384xbf16, #tpu.memory_space<vmem>>, vector<16x384xbf16>,
    %142 = vector.extract_strided_slice %81 {offsets = [0, 0], sizes = [16, 1], strides = [1, 1]} : vector<16x3xf32> to vector<16x1xf32>
    %143 = vector.extract_strided_slice %107 {offsets = [0, 0], sizes = [16, 1], strides = [1, 1]} : vector<16x3xf32> to vector<16x1xf32>
    %144 = arith.addf %142, %143 : vector<16x1xf32>
    %145 = arith.negf %144 : vector<16x1xf32>
    %146 = math.exp %145 : vector<16x1xf32>
    %cst_72 = arith.constant 1.000000e+00 : f32
    %147 = vector.broadcast %cst_72 : f32 to vector<16x1xf32>
    %148 = arith.addf %147, %146 : vector<16x1xf32>
    %149 = arith.divf %147, %148 : vector<16x1xf32>
    %c0_73 = arith.constant 0 : index
    %c0_74 = arith.constant 0 : index
    %150 = vector.load %arg3[%c0_73, %c0_74] : memref<144x16xf32, #tpu.memory_space<vmem>>, vector<16x16xf32>
    %151 = vector.broadcast %149 : vector<16x1xf32> to vector<16x16xf32>
    %152 = arith.mulf %150, %151 : vector<16x16xf32>
    %153 = vector.extract_strided_slice %81 {offsets = [0, 0], sizes = [16, 1], strides = [1, 1]} : vector<16x3xf32> to vector<16x1xf32>
    %154 = vector.extract_strided_slice %107 {offsets = [0, 1], sizes = [16, 1], strides = [1, 1]} : vector<16x3xf32> to vector<16x1xf32>
    %155 = arith.addf %153, %154 : vector<16x1xf32>
    %156 = arith.negf %155 : vector<16x1xf32>
    %157 = math.exp %156 : vector<16x1xf32>
    %cst_75 = arith.constant 1.000000e+00 : f32
    %158 = vector.broadcast %cst_75 : f32 to vector<16x1xf32>
    %159 = arith.addf %158, %157 : vector<16x1xf32>
    %160 = arith.divf %158, %159 : vector<16x1xf32>
    %c16_76 = arith.constant 16 : index
    %c0_77 = arith.constant 0 : index
    %161 = vector.load %arg3[%c16_76, %c0_77] : memref<144x16xf32, #tpu.memory_space<vmem>>, vector<16x16xf32>
    %162 = vector.broadcast %160 : vector<16x1xf32> to vector<16x16xf32>
    %163 = arith.mulf %161, %162 : vector<16x16xf32>
    %164 = vector.extract_strided_slice %81 {offsets = [0, 0], sizes = [16, 1], strides = [1, 1]} : vector<16x3xf32> to vector<16x1xf32>
    %165 = vector.extract_strided_slice %107 {offsets = [0, 2], sizes = [16, 1], strides = [1, 1]} : vector<16x3xf32> to vector<16x1xf32>
    %166 = arith.addf %164, %165 : vector<16x1xf32>
    %167 = arith.negf %166 : vector<16x1xf32>
    %168 = math.exp %167 : vector<16x1xf32>
    %cst_78 = arith.constant 1.000000e+00 : f32
    %169 = vector.broadcast %cst_78 : f32 to vector<16x1xf32>
    %170 = arith.addf %169, %168 : vector<16x1xf32>
    %171 = arith.divf %169, %170 : vector<16x1xf32>
    %c32_79 = arith.constant 32 : index
    %c0_80 = arith.constant 0 : index
    %172 = vector.load %arg3[%c32_79, %c0_80] : memref<144x16xf32, #tpu.memory_space<vmem>>, vector<16x16xf32>
    %173 = vector.broadcast %171 : vector<16x1xf32> to vector<16x16xf32>
    %174 = arith.mulf %172, %173 : vector<16x16xf32>
    %175 = vector.extract_strided_slice %81 {offsets = [0, 1], sizes = [16, 1], strides = [1, 1]} : vector<16x3xf32> to vector<16x1xf32>
    %176 = vector.extract_strided_slice %107 {offsets = [0, 0], sizes = [16, 1], strides = [1, 1]} : vector<16x3xf32> to vector<16x1xf32>
    %177 = arith.addf %175, %176 : vector<16x1xf32>
    %178 = arith.negf %177 : vector<16x1xf32>
    %179 = math.exp %178 : vector<16x1xf32>
    %cst_81 = arith.constant 1.000000e+00 : f32
    %180 = vector.broadcast %cst_81 : f32 to vector<16x1xf32>
    %181 = arith.addf %180, %179 : vector<16x1xf32>
    %182 = arith.divf %180, %181 : vector<16x1xf32>
    %c48_82 = arith.constant 48 : index
    %c0_83 = arith.constant 0 : index
    %183 = vector.load %arg3[%c48_82, %c0_83] : memref<144x16xf32, #tpu.memory_space<vmem>>, vector<16x16xf32>
    %184 = vector.broadcast %182 : vector<16x1xf32> to vector<16x16xf32>
    %185 = arith.mulf %183, %184 : vector<16x16xf32>
    %186 = vector.extract_strided_slice %81 {offsets = [0, 1], sizes = [16, 1], strides = [1, 1]} : vector<16x3xf32> to vector<16x1xf32>
    %187 = vector.extract_strided_slice %107 {offsets = [0, 1], sizes = [16, 1], strides = [1, 1]} : vector<16x3xf32> to vector<16x1xf32>
    %188 = arith.addf %186, %187 : vector<16x1xf32>
    %189 = arith.negf %188 : vector<16x1xf32>
    %190 = math.exp %189 : vector<16x1xf32>
    %cst_84 = arith.constant 1.000000e+00 : f32
    %191 = vector.broadcast %cst_84 : f32 to vector<16x1xf32>
    %192 = arith.addf %191, %190 : vector<16x1xf32>
    %193 = arith.divf %191, %192 : vector<16x1xf32>
    %c64_85 = arith.constant 64 : index
    %c0_86 = arith.constant 0 : index
    %194 = vector.load %arg3[%c64_85, %c0_86] : memref<144x16xf32, #tpu.memory_space<vmem>>, vector<16x16xf32>
    %195 = vector.broadcast %193 : vector<16x1xf32> to vector<16x16xf32>
    %196 = arith.mulf %194, %195 : vector<16x16xf32>
    %197 = vector.extract_strided_slice %81 {offsets = [0, 1], sizes = [16, 1], strides = [1, 1]} : vector<16x3xf32> to vector<16x1xf32>
    %198 = vector.extract_strided_slice %107 {offsets = [0, 2], sizes = [16, 1], strides = [1, 1]} : vector<16x3xf32> to vector<16x1xf32>
    %199 = arith.addf %197, %198 : vector<16x1xf32>
    %200 = arith.negf %199 : vector<16x1xf32>
    %201 = math.exp %200 : vector<16x1xf32>
    %cst_87 = arith.constant 1.000000e+00 : f32
    %202 = vector.broadcast %cst_87 : f32 to vector<16x1xf32>
    %203 = arith.addf %202, %201 : vector<16x1xf32>
    %204 = arith.divf %202, %203 : vector<16x1xf32>
    %c80_88 = arith.constant 80 : index
    %c0_89 = arith.constant 0 : index
    %205 = vector.load %arg3[%c80_88, %c0_89] : memref<144x16xf32, #tpu.memory_space<vmem>>, vector<16x16xf32>
    %206 = vector.broadcast %204 : vector<16x1xf32> to vector<16x16xf32>
    %207 = arith.mulf %205, %206 : vector<16x16xf32>
    %208 = vector.extract_strided_slice %81 {offsets = [0, 2], sizes = [16, 1], strides = [1, 1]} : vector<16x3xf32> to vector<16x1xf32>
    %209 = vector.extract_strided_slice %107 {offsets = [0, 0], sizes = [16, 1], strides = [1, 1]} : vector<16x3xf32> to vector<16x1xf32>
    %210 = arith.addf %208, %209 : vector<16x1xf32>
    %211 = arith.negf %210 : vector<16x1xf32>
    %212 = math.exp %211 : vector<16x1xf32>
    %cst_90 = arith.constant 1.000000e+00 : f32
    %213 = vector.broadcast %cst_90 : f32 to vector<16x1xf32>
    %214 = arith.addf %213, %212 : vector<16x1xf32>
    %215 = arith.divf %213, %214 : vector<16x1xf32>
    %c96_91 = arith.constant 96 : index
    %c0_92 = arith.constant 0 : index
    %216 = vector.load %arg3[%c96_91, %c0_92] : memref<144x16xf32, #tpu.memory_space<vmem>>, vector<16x16xf32>
    %217 = vector.broadcast %215 : vector<16x1xf32> to vector<16x16xf32>
    %218 = arith.mulf %216, %217 : vector<16x16xf32>
    %219 = vector.extract_strided_slice %81 {offsets = [0, 2], sizes = [16, 1], strides = [1, 1]} : vector<16x3xf32> to vector<16x1xf32>
    %220 = vector.extract_strided_slice %107 {offsets = [0, 1], sizes = [16, 1], strides = [1, 1]} : vector<16x3xf32> to vector<16x1xf32>
    %221 = arith.addf %219, %220 : vector<16x1xf32>
    %222 = arith.negf %221 : vector<16x1xf32>
    %223 = math.exp %222 : vector<16x1xf32>
    %cst_93 = arith.constant 1.000000e+00 : f32
    %224 = vector.broadcast %cst_93 : f32 to vector<16x1xf32>
    %225 = arith.addf %224, %223 : vector<16x1xf32>
    %226 = arith.divf %224, %225 : vector<16x1xf32>
    %c112_94 = arith.constant 112 : index
    %c0_95 = arith.constant 0 : index
    %227 = vector.load %arg3[%c112_94, %c0_95] : memref<144x16xf32, #tpu.memory_space<vmem>>, vector<16x16xf32>
    %228 = vector.broadcast %226 : vector<16x1xf32> to vector<16x16xf32>
    %229 = arith.mulf %227, %228 : vector<16x16xf32>
    %230 = vector.extract_strided_slice %81 {offsets = [0, 2], sizes = [16, 1], strides = [1, 1]} : vector<16x3xf32> to vector<16x1xf32>
    %231 = vector.extract_strided_slice %107 {offsets = [0, 2], sizes = [16, 1], strides = [1, 1]} : vector<16x3xf32> to vector<16x1xf32>
    %232 = arith.addf %230, %231 : vector<16x1xf32>
    %233 = arith.negf %232 : vector<16x1xf32>
    %234 = math.exp %233 : vector<16x1xf32>
    %cst_96 = arith.constant 1.000000e+00 : f32
    %235 = vector.broadcast %cst_96 : f32 to vector<16x1xf32>
    %236 = arith.addf %235, %234 : vector<16x1xf32>
    %237 = arith.divf %235, %236 : vector<16x1xf32>
    %c128_97 = arith.constant 128 : index
    %c0_98 = arith.constant 0 : index
    %238 = vector.load %arg3[%c128_97, %c0_98] : memref<144x16xf32, #tpu.memory_space<vmem>>, vector<16x16xf32>
    %239 = vector.broadcast %237 : vector<16x1xf32> to vector<16x16xf32>
    %240 = arith.mulf %238, %239 : vector<16x16xf32>
    %241 = tpu.concatenate %152, %163, %174, %185, %196, %207, %218, %229, %240 in 0 : vector<16x16xf32>, vector<16x16xf32>, vector<16x16xf32>, vector<16x16xf32>, vector<16x16xf32>, vector<16x16xf32>, vector<16x16xf32>, vector<16x16xf32>, vector<16x16xf32> -> vector<144x16xf32>
    %242 = arith.truncf %241 : vector<144x16xf32> to vector<144x16xbf16>
    %c0_99 = arith.constant 0 : index
    %c0_100 = arith.constant 0 : index
    %243 = vector.load %arg18[%c0_99, %c0_100] : memref<144x384xbf16, #tpu.memory_space<vmem>>, vector<144x384xbf16>
    %cst_101 = arith.constant dense<0.000000e+00> : vector<16x384xf32>
    %244 = tpu.matmul %242, %243, %cst_101 {dimension_numbers = #tpu.dot_dimension_numbers<[0], [0], [1], [1], [0, 1, 1, 1], [], []>} : vector<144x16xbf16>, vector<144x384xbf16>, vector<16x384xf32> -> vector<16x384xf32>
    %245 = arith.extf %1 : vector<16x384xbf16> to vector<16x384xf32>
    %c0_102 = arith.constant 0 : index
    %c1 = arith.constant 1 : index
    %246 = vector.load %arg4[%c0_102, %c1] : memref<16x2xf32, #tpu.memory_space<vmem>>, vector<16x1xf32>
    %247 = vector.broadcast %246 : vector<16x1xf32> to vector<16x384xf32>
    %248 = arith.addf %244, %247 : vector<16x384xf32>
    %249 = arith.addf %248, %245 : vector<16x384xf32>
    %cst_103 = arith.constant 0.000000e+00 : f32
    %250 = vector.broadcast %cst_103 : f32 to vector<16x384xf32>
    %251 = arith.maximumf %249, %250 : vector<16x384xf32>
    %c0_104 = arith.constant 0 : index
    %c0_105 = arith.constant 0 : index
    %c0_106 = arith.constant 0 : index
    %252 = vector.load %arg16[%c0_104, %c0_105, %c0_106] : memref<1x16x384xf32, #tpu.memory_space<vmem>>, vector<1x16x384xf32>
    %253 = vector.shape_cast %252 : vector<1x16x384xf32> to vector<16x384xf32>
    %254 = vector.shape_cast %251 : vector<16x384xf32> to vector<1x16x384xf32>
    tpu.vector_store %arg16[%c0_104, %c0_105, %c0_106], %254 {strides = array<i32>} : memref<1x16x384xf32, #tpu.memory_space<vmem>>, vector<1x16x384xf32>,
    return
  }
  func.func @transform_0(%arg0: i32) -> (i32, i32, i32) {
    %c0_i32 = arith.constant 0 : i32
    %c0_i32_0 = arith.constant 0 : i32
    %c0_i32_1 = arith.constant 0 : i32
    return %arg0, %c0_i32, %c0_i32_0 : i32, i32, i32
  }
  func.func @transform_1(%arg0: i32) -> (i32, i32, i32) {
    %c0_i32 = arith.constant 0 : i32
    %c0_i32_0 = arith.constant 0 : i32
    %c0_i32_1 = arith.constant 0 : i32
    return %arg0, %c0_i32, %c0_i32_0 : i32, i32, i32
  }
  func.func @transform_2(%arg0: i32) -> (i32, i32) {
    %c0_i32 = arith.constant 0 : i32
    %c0_i32_0 = arith.constant 0 : i32
    %c0_i32_1 = arith.constant 0 : i32
    return %c0_i32, %c0_i32_0 : i32, i32
  }
  func.func @transform_3(%arg0: i32) -> (i32, i32) {
    %c0_i32 = arith.constant 0 : i32
    %c0_i32_0 = arith.constant 0 : i32
    %c0_i32_1 = arith.constant 0 : i32
    return %c0_i32, %c0_i32_0 : i32, i32
  }
  func.func @transform_4(%arg0: i32) -> (i32, i32) {
    %c0_i32 = arith.constant 0 : i32
    %c0_i32_0 = arith.constant 0 : i32
    %c0_i32_1 = arith.constant 0 : i32
    return %c0_i32, %c0_i32_0 : i32, i32
  }
  func.func @transform_5(%arg0: i32) -> (i32, i32) {
    %c0_i32 = arith.constant 0 : i32
    %c0_i32_0 = arith.constant 0 : i32
    %c0_i32_1 = arith.constant 0 : i32
    return %c0_i32, %c0_i32_0 : i32, i32
  }
  func.func @transform_6(%arg0: i32) -> (i32, i32) {
    %c0_i32 = arith.constant 0 : i32
    %c0_i32_0 = arith.constant 0 : i32
    %c0_i32_1 = arith.constant 0 : i32
    return %c0_i32, %c0_i32_0 : i32, i32
  }
  func.func @transform_7(%arg0: i32) -> (i32, i32) {
    %c0_i32 = arith.constant 0 : i32
    %c0_i32_0 = arith.constant 0 : i32
    %c0_i32_1 = arith.constant 0 : i32
    return %c0_i32, %c0_i32_0 : i32, i32
  }
  func.func @transform_8(%arg0: i32) -> (i32, i32) {
    %c0_i32 = arith.constant 0 : i32
    %c0_i32_0 = arith.constant 0 : i32
    %c0_i32_1 = arith.constant 0 : i32
    return %c0_i32, %c0_i32_0 : i32, i32
  }
  func.func @transform_9(%arg0: i32) -> (i32, i32) {
    %c0_i32 = arith.constant 0 : i32
    %c0_i32_0 = arith.constant 0 : i32
    %c0_i32_1 = arith.constant 0 : i32
    return %c0_i32, %c0_i32_0 : i32, i32
  }
  func.func @transform_10(%arg0: i32) -> (i32, i32) {
    %c0_i32 = arith.constant 0 : i32
    %c0_i32_0 = arith.constant 0 : i32
    %c0_i32_1 = arith.constant 0 : i32
    return %c0_i32, %c0_i32_0 : i32, i32
  }
  func.func @transform_11(%arg0: i32) -> (i32, i32) {
    %c0_i32 = arith.constant 0 : i32
    %c0_i32_0 = arith.constant 0 : i32
    %c0_i32_1 = arith.constant 0 : i32
    return %c0_i32, %c0_i32_0 : i32, i32
  }
  func.func @transform_12(%arg0: i32) -> (i32, i32) {
    %c0_i32 = arith.constant 0 : i32
    %c0_i32_0 = arith.constant 0 : i32
    %c0_i32_1 = arith.constant 0 : i32
    return %c0_i32, %c0_i32_0 : i32, i32
  }
  func.func @transform_13(%arg0: i32) -> (i32, i32) {
    %c0_i32 = arith.constant 0 : i32
    %c0_i32_0 = arith.constant 0 : i32
    %c0_i32_1 = arith.constant 0 : i32
    return %c0_i32, %c0_i32_0 : i32, i32
  }
  func.func @transform_14(%arg0: i32) -> (i32, i32) {
    %c0_i32 = arith.constant 0 : i32
    %c0_i32_0 = arith.constant 0 : i32
    %c0_i32_1 = arith.constant 0 : i32
    return %c0_i32, %c0_i32_0 : i32, i32
  }
  func.func @transform_15(%arg0: i32) -> (i32, i32, i32) {
    %c0_i32 = arith.constant 0 : i32
    %c0_i32_0 = arith.constant 0 : i32
    %c0_i32_1 = arith.constant 0 : i32
    return %arg0, %c0_i32, %c0_i32_0 : i32, i32, i32
  }
}

</mosaic_0001>

<llo_original>
// kernel: basic_block_forward.1
$region0: #{basic_block_forward.1}
  #allocation0 [shape = 'u32[]', space=smem, size = 0x4, offset = 0x4, fixed_abs, tag = 'smem constant byte address 0x4 - core index']
  #allocation1 [shape = 'u32[144,128]{1,0:T(1,128)}', space=vmem, size = 0x12000, scoped, tag = 'internal scratch']
  #allocation2 [shape = 'bf16[144,384]{1,0:T(16,128)(2,1)}', space=vmem, size = 0x1b000, scoped, tag = 'scratch operand']
  #allocation3 [shape = 'bf16[144,384]{1,0:T(16,128)(2,1)}', space=vmem, size = 0x1b000, scoped, tag = 'scratch operand']
  %s0 = inlined_call_operand.vmem [shape: bf16[2,16,384], index: 0, kind: input, shape index: {}]
  %s1 = inlined_call_operand.vmem [shape: bf16[2,16,144], index: 1, kind: input, shape index: {}]
  %s2 = inlined_call_operand.vmem [shape: f32[144,16], index: 2, kind: input, shape index: {}]
  %s3 = inlined_call_operand.vmem [shape: f32[16,2], index: 3, kind: input, shape index: {}]
  %s4 = inlined_call_operand.vmem [shape: f32[1,384], index: 4, kind: input, shape index: {}]
  %s5 = inlined_call_operand.vmem [shape: f32[384,16], index: 5, kind: input, shape index: {}]
  %s6 = inlined_call_operand.vmem [shape: f32[384,16], index: 6, kind: input, shape index: {}]
  %s7 = inlined_call_operand.vmem [shape: f32[48,16], index: 7, kind: input, shape index: {}]
  %s8 = inlined_call_operand.vmem [shape: f32[1,16], index: 8, kind: input, shape index: {}]
  %s9 = inlined_call_operand.vmem [shape: f32[48,3], index: 9, kind: input, shape index: {}]
  %s10 = inlined_call_operand.vmem [shape: f32[1,3], index: 10, kind: input, shape index: {}]
  %s11 = inlined_call_operand.vmem [shape: f32[48,16], index: 11, kind: input, shape index: {}]
  %s12 = inlined_call_operand.vmem [shape: f32[1,16], index: 12, kind: input, shape index: {}]
  %s13 = inlined_call_operand.vmem [shape: f32[48,3], index: 13, kind: input, shape index: {}]
  %s14 = inlined_call_operand.vmem [shape: f32[1,3], index: 14, kind: input, shape index: {}]
  %s15 = inlined_call_operand.vmem [shape: f32[2,16,384], index: 15, kind: output, shape index: {}]
  %s16 = sld [smem:[#allocation0]]
  $region93: #{basic_block_forward.1} parent=0
    _
  %s18 = ssub.s32 1, %s16
  %s19 = scalar_select 0, %s18, %s16
  loop: start=0, step=1, limit=4
  $region2: #{basic_block_forward.1} parent=0 // loop_pre_header
    _
  $region3: #{basic_block_forward.1} parent=0 // loop_header
    %s21 = sphi 0, %s25
    %p22 = scmp.ge.s32.totalorder %s21, 4
    %s31 = sphi 0, %s33
    %s34 = sphi 0, %s31
    %s35 = sphi 0, %s34
    %s51 = sphi 0, %s35
    %s57 = sphi 0, %s59
    %s60 = sphi 0, %s57
    %s61 = sphi 0, %s60
    %s77 = sphi 0, %s61
    %s81 = sphi 0, %s81
    %s83 = sphi 0, %s81
    %s84 = sphi 0, %s83
    %s98 = sphi 0, %s84
    %s102 = sphi 0, %s102
    %s104 = sphi 0, %s102
    %s105 = sphi 0, %s104
    %s119 = sphi 0, %s105
    %s123 = sphi 0, %s123
    %s125 = sphi 0, %s123
    %s126 = sphi 0, %s125
    %s140 = sphi 0, %s126
    %s144 = sphi 0, %s144
    %s146 = sphi 0, %s144
    %s147 = sphi 0, %s146
    %s161 = sphi 0, %s147
    %s165 = sphi 0, %s165
    %s167 = sphi 0, %s165
    %s168 = sphi 0, %s167
    %s182 = sphi 0, %s168
    %s186 = sphi 0, %s186
    %s188 = sphi 0, %s186
    %s189 = sphi 0, %s188
    %s203 = sphi 0, %s189
    %s207 = sphi 0, %s207
    %s209 = sphi 0, %s207
    %s210 = sphi 0, %s209
    %s224 = sphi 0, %s210
    %s228 = sphi 0, %s228
    %s230 = sphi 0, %s228
    %s231 = sphi 0, %s230
    %s245 = sphi 0, %s231
    %s249 = sphi 0, %s249
    %s251 = sphi 0, %s249
    %s252 = sphi 0, %s251
    %s266 = sphi 0, %s252
    %s270 = sphi 0, %s270
    %s272 = sphi 0, %s270
    %s273 = sphi 0, %s272
    %s287 = sphi 0, %s273
    %s291 = sphi 0, %s291
    %s293 = sphi 0, %s291
    %s294 = sphi 0, %s293
    %s308 = sphi 0, %s294
    %s312 = sphi 0, %s312
    %s314 = sphi 0, %s312
    %s315 = sphi 0, %s314
    %s329 = sphi 0, %s315
    %s333 = sphi 0, %s333
    %s335 = sphi 0, %s333
    %s336 = sphi 0, %s335
    %s350 = sphi 0, %s336
    %s356 = sphi 0, %s358
    %s359 = sphi 0, %s356
    %s360 = sphi 0, %s359
    %s376 = sphi 0, %s360
  $region4: #{basic_block_forward.1} parent=0 // loop_header_branch
    %24 = sbr.rel (%p22) target = $region8
  $region5: #{basic_block_forward.1} parent=0 // loop_body
    %s26 = ssub.s32 %s21, 1
    %s27 = ssub.s32 %s21, 2
    %s28 = sadd.s32 %s21, 1
    %s29 = ssub.s32 %s21, %s28
    %p30 = scmp.eq.s32.totalorder %s29, 0
    %s32 = sadd.s32 %s31, 1
    %s33 = scalar_select %p30, %s31, %s32
    %p36 = pneg %p30
    %p37 = scmp.eq.s32.totalorder %s21, 1
    %p38 = por %p36, %p37
    %p39 = scmp.ne.s32.totalorder %s31, %s34
    %p40 = scmp.eq.s32.totalorder %s21, 0
    %p41 = por %p39, %p40
    %p42 = scmp.ne.s32.totalorder %s31, %s34
    %p43 = scmp.eq.s32.totalorder %s26, 1
    %p44 = por %p42, %p43
    %p45 = scmp.ne.s32.totalorder %s34, %s35
    %p46 = scmp.eq.s32.totalorder %s26, 0
    %p47 = por %p45, %p46
    %p48 = scmp.ne.s32.totalorder %s34, %s35
    %p49 = scmp.eq.s32.totalorder %s27, 1
    %p50 = por %p48, %p49
    %p52 = scmp.ne.s32.totalorder %s35, %s51
    %p53 = scmp.eq.s32.totalorder %s27, 0
    %p54 = por %p52, %p53
    %s55 = ssub.s32 %s21, %s28
    %p56 = scmp.eq.s32.totalorder %s55, 0
    %s58 = sadd.s32 %s57, 1
    %s59 = scalar_select %p56, %s57, %s58
    %p62 = pneg %p56
    %p63 = scmp.eq.s32.totalorder %s21, 1
    %p64 = por %p62, %p63
    %p65 = scmp.ne.s32.totalorder %s57, %s60
    %p66 = scmp.eq.s32.totalorder %s21, 0
    %p67 = por %p65, %p66
    %p68 = scmp.ne.s32.totalorder %s57, %s60
    %p69 = scmp.eq.s32.totalorder %s26, 1
    %p70 = por %p68, %p69
    %p71 = scmp.ne.s32.totalorder %s60, %s61
    %p72 = scmp.eq.s32.totalorder %s26, 0
    %p73 = por %p71, %p72
    %p74 = scmp.ne.s32.totalorder %s60, %s61
    %p75 = scmp.eq.s32.totalorder %s27, 1
    %p76 = por %p74, %p75
    %p78 = scmp.ne.s32.totalorder %s61, %s77
    %p79 = scmp.eq.s32.totalorder %s27, 0
    %p80 = por %p78, %p79
    %s82 = sadd.s32 %s81, 1
    %p85 = scmp.eq.s32.totalorder %s21, 1
    %p86 = scmp.ne.s32.totalorder %s81, %s83
    %p87 = scmp.eq.s32.totalorder %s21, 0
    %p88 = por %p86, %p87
    %p89 = scmp.ne.s32.totalorder %s81, %s83
    %p90 = scmp.eq.s32.totalorder %s26, 1
    %p91 = por %p89, %p90
    %p92 = scmp.ne.s32.totalorder %s83, %s84
    %p93 = scmp.eq.s32.totalorder %s26, 0
    %p94 = por %p92, %p93
    %p95 = scmp.ne.s32.totalorder %s83, %s84
    %p96 = scmp.eq.s32.totalorder %s27, 1
    %p97 = por %p95, %p96
    %p99 = scmp.ne.s32.totalorder %s84, %s98
    %p100 = scmp.eq.s32.totalorder %s27, 0
    %p101 = por %p99, %p100
    %s103 = sadd.s32 %s102, 1
    %p106 = scmp.eq.s32.totalorder %s21, 1
    %p107 = scmp.ne.s32.totalorder %s102, %s104
    %p108 = scmp.eq.s32.totalorder %s21, 0
    %p109 = por %p107, %p108
    %p110 = scmp.ne.s32.totalorder %s102, %s104
    %p111 = scmp.eq.s32.totalorder %s26, 1
    %p112 = por %p110, %p111
    %p113 = scmp.ne.s32.totalorder %s104, %s105
    %p114 = scmp.eq.s32.totalorder %s26, 0
    %p115 = por %p113, %p114
    %p116 = scmp.ne.s32.totalorder %s104, %s105
    %p117 = scmp.eq.s32.totalorder %s27, 1
    %p118 = por %p116, %p117
    %p120 = scmp.ne.s32.totalorder %s105, %s119
    %p121 = scmp.eq.s32.totalorder %s27, 0
    %p122 = por %p120, %p121
    %s124 = sadd.s32 %s123, 1
    %p127 = scmp.eq.s32.totalorder %s21, 1
    %p128 = scmp.ne.s32.totalorder %s123, %s125
    %p129 = scmp.eq.s32.totalorder %s21, 0
    %p130 = por %p128, %p129
    %p131 = scmp.ne.s32.totalorder %s123, %s125
    %p132 = scmp.eq.s32.totalorder %s26, 1
    %p133 = por %p131, %p132
    %p134 = scmp.ne.s32.totalorder %s125, %s126
    %p135 = scmp.eq.s32.totalorder %s26, 0
    %p136 = por %p134, %p135
    %p137 = scmp.ne.s32.totalorder %s125, %s126
    %p138 = scmp.eq.s32.totalorder %s27, 1
    %p139 = por %p137, %p138
    %p141 = scmp.ne.s32.totalorder %s126, %s140
    %p142 = scmp.eq.s32.totalorder %s27, 0
    %p143 = por %p141, %p142
    %s145 = sadd.s32 %s144, 1
    %p148 = scmp.eq.s32.totalorder %s21, 1
    %p149 = scmp.ne.s32.totalorder %s144, %s146
    %p150 = scmp.eq.s32.totalorder %s21, 0
    %p151 = por %p149, %p150
    %p152 = scmp.ne.s32.totalorder %s144, %s146
    %p153 = scmp.eq.s32.totalorder %s26, 1
    %p154 = por %p152, %p153
    %p155 = scmp.ne.s32.totalorder %s146, %s147
    %p156 = scmp.eq.s32.totalorder %s26, 0
    %p157 = por %p155, %p156
    %p158 = scmp.ne.s32.totalorder %s146, %s147
    %p159 = scmp.eq.s32.totalorder %s27, 1
    %p160 = por %p158, %p159
    %p162 = scmp.ne.s32.totalorder %s147, %s161
    %p163 = scmp.eq.s32.totalorder %s27, 0
    %p164 = por %p162, %p163
    %s166 = sadd.s32 %s165, 1
    %p169 = scmp.eq.s32.totalorder %s21, 1
    %p170 = scmp.ne.s32.totalorder %s165, %s167
    %p171 = scmp.eq.s32.totalorder %s21, 0
    %p172 = por %p170, %p171
    %p173 = scmp.ne.s32.totalorder %s165, %s167
    %p174 = scmp.eq.s32.totalorder %s26, 1
    %p175 = por %p173, %p174
    %p176 = scmp.ne.s32.totalorder %s167, %s168
    %p177 = scmp.eq.s32.totalorder %s26, 0
    %p178 = por %p176, %p177
    %p179 = scmp.ne.s32.totalorder %s167, %s168
    %p180 = scmp.eq.s32.totalorder %s27, 1
    %p181 = por %p179, %p180
    %p183 = scmp.ne.s32.totalorder %s168, %s182
    %p184 = scmp.eq.s32.totalorder %s27, 0
    %p185 = por %p183, %p184
    %s187 = sadd.s32 %s186, 1
    %p190 = scmp.eq.s32.totalorder %s21, 1
    %p191 = scmp.ne.s32.totalorder %s186, %s188
    %p192 = scmp.eq.s32.totalorder %s21, 0
    %p193 = por %p191, %p192
    %p194 = scmp.ne.s32.totalorder %s186, %s188
    %p195 = scmp.eq.s32.totalorder %s26, 1
    %p196 = por %p194, %p195
    %p197 = scmp.ne.s32.totalorder %s188, %s189
    %p198 = scmp.eq.s32.totalorder %s26, 0
    %p199 = por %p197, %p198
    %p200 = scmp.ne.s32.totalorder %s188, %s189
    %p201 = scmp.eq.s32.totalorder %s27, 1
    %p202 = por %p200, %p201
    %p204 = scmp.ne.s32.totalorder %s189, %s203
    %p205 = scmp.eq.s32.totalorder %s27, 0
    %p206 = por %p204, %p205
    %s208 = sadd.s32 %s207, 1
    %p211 = scmp.eq.s32.totalorder %s21, 1
    %p212 = scmp.ne.s32.totalorder %s207, %s209
    %p213 = scmp.eq.s32.totalorder %s21, 0
    %p214 = por %p212, %p213
    %p215 = scmp.ne.s32.totalorder %s207, %s209
    %p216 = scmp.eq.s32.totalorder %s26, 1
    %p217 = por %p215, %p216
    %p218 = scmp.ne.s32.totalorder %s209, %s210
    %p219 = scmp.eq.s32.totalorder %s26, 0
    %p220 = por %p218, %p219
    %p221 = scmp.ne.s32.totalorder %s209, %s210
    %p222 = scmp.eq.s32.totalorder %s27, 1
    %p223 = por %p221, %p222
    %p225 = scmp.ne.s32.totalorder %s210, %s224
    %p226 = scmp.eq.s32.totalorder %s27, 0
    %p227 = por %p225, %p226
    %s229 = sadd.s32 %s228, 1
    %p232 = scmp.eq.s32.totalorder %s21, 1
    %p233 = scmp.ne.s32.totalorder %s228, %s230
    %p234 = scmp.eq.s32.totalorder %s21, 0
    %p235 = por %p233, %p234
    %p236 = scmp.ne.s32.totalorder %s228, %s230
    %p237 = scmp.eq.s32.totalorder %s26, 1
    %p238 = por %p236, %p237
    %p239 = scmp.ne.s32.totalorder %s230, %s231
    %p240 = scmp.eq.s32.totalorder %s26, 0
    %p241 = por %p239, %p240
    %p242 = scmp.ne.s32.totalorder %s230, %s231
    %p243 = scmp.eq.s32.totalorder %s27, 1
    %p244 = por %p242, %p243
    %p246 = scmp.ne.s32.totalorder %s231, %s245
    %p247 = scmp.eq.s32.totalorder %s27, 0
    %p248 = por %p246, %p247
    %s250 = sadd.s32 %s249, 1
    %p253 = scmp.eq.s32.totalorder %s21, 1
    %p254 = scmp.ne.s32.totalorder %s249, %s251
    %p255 = scmp.eq.s32.totalorder %s21, 0
    %p256 = por %p254, %p255
    %p257 = scmp.ne.s32.totalorder %s249, %s251
    %p258 = scmp.eq.s32.totalorder %s26, 1
    %p259 = por %p257, %p258
    %p260 = scmp.ne.s32.totalorder %s251, %s252
    %p261 = scmp.eq.s32.totalorder %s26, 0
    %p262 = por %p260, %p261
    %p263 = scmp.ne.s32.totalorder %s251, %s252
    %p264 = scmp.eq.s32.totalorder %s27, 1
    %p265 = por %p263, %p264
    %p267 = scmp.ne.s32.totalorder %s252, %s266
    %p268 = scmp.eq.s32.totalorder %s27, 0
    %p269 = por %p267, %p268
    %s271 = sadd.s32 %s270, 1
    %p274 = scmp.eq.s32.totalorder %s21, 1
    %p275 = scmp.ne.s32.totalorder %s270, %s272
    %p276 = scmp.eq.s32.totalorder %s21, 0
    %p277 = por %p275, %p276
    %p278 = scmp.ne.s32.totalorder %s270, %s272
    %p279 = scmp.eq.s32.totalorder %s26, 1
    %p280 = por %p278, %p279
    %p281 = scmp.ne.s32.totalorder %s272, %s273
    %p282 = scmp.eq.s32.totalorder %s26, 0
    %p283 = por %p281, %p282
    %p284 = scmp.ne.s32.totalorder %s272, %s273
    %p285 = scmp.eq.s32.totalorder %s27, 1
    %p286 = por %p284, %p285
    %p288 = scmp.ne.s32.totalorder %s273, %s287
    %p289 = scmp.eq.s32.totalorder %s27, 0
    %p290 = por %p288, %p289
    %s292 = sadd.s32 %s291, 1
    %p295 = scmp.eq.s32.totalorder %s21, 1
    %p296 = scmp.ne.s32.totalorder %s291, %s293
    %p297 = scmp.eq.s32.totalorder %s21, 0
    %p298 = por %p296, %p297
    %p299 = scmp.ne.s32.totalorder %s291, %s293
    %p300 = scmp.eq.s32.totalorder %s26, 1
    %p301 = por %p299, %p300
    %p302 = scmp.ne.s32.totalorder %s293, %s294
    %p303 = scmp.eq.s32.totalorder %s26, 0
    %p304 = por %p302, %p303
    %p305 = scmp.ne.s32.totalorder %s293, %s294
    %p306 = scmp.eq.s32.totalorder %s27, 1
    %p307 = por %p305, %p306
    %p309 = scmp.ne.s32.totalorder %s294, %s308
    %p310 = scmp.eq.s32.totalorder %s27, 0
    %p311 = por %p309, %p310
    %s313 = sadd.s32 %s312, 1
    %p316 = scmp.eq.s32.totalorder %s21, 1
    %p317 = scmp.ne.s32.totalorder %s312, %s314
    %p318 = scmp.eq.s32.totalorder %s21, 0
    %p319 = por %p317, %p318
    %p320 = scmp.ne.s32.totalorder %s312, %s314
    %p321 = scmp.eq.s32.totalorder %s26, 1
    %p322 = por %p320, %p321
    %p323 = scmp.ne.s32.totalorder %s314, %s315
    %p324 = scmp.eq.s32.totalorder %s26, 0
    %p325 = por %p323, %p324
    %p326 = scmp.ne.s32.totalorder %s314, %s315
    %p327 = scmp.eq.s32.totalorder %s27, 1
    %p328 = por %p326, %p327
    %p330 = scmp.ne.s32.totalorder %s315, %s329
    %p331 = scmp.eq.s32.totalorder %s27, 0
    %p332 = por %p330, %p331
    %s334 = sadd.s32 %s333, 1
    %p337 = scmp.eq.s32.totalorder %s21, 1
    %p338 = scmp.ne.s32.totalorder %s333, %s335
    %p339 = scmp.eq.s32.totalorder %s21, 0
    %p340 = por %p338, %p339
    %p341 = scmp.ne.s32.totalorder %s333, %s335
    %p342 = scmp.eq.s32.totalorder %s26, 1
    %p343 = por %p341, %p342
    %p344 = scmp.ne.s32.totalorder %s335, %s336
    %p345 = scmp.eq.s32.totalorder %s26, 0
    %p346 = por %p344, %p345
    %p347 = scmp.ne.s32.totalorder %s335, %s336
    %p348 = scmp.eq.s32.totalorder %s27, 1
    %p349 = por %p347, %p348
    %p351 = scmp.ne.s32.totalorder %s336, %s350
    %p352 = scmp.eq.s32.totalorder %s27, 0
    %p353 = por %p351, %p352
    %s354 = ssub.s32 %s21, %s28
    %p355 = scmp.eq.s32.totalorder %s354, 0
    %s357 = sadd.s32 %s356, 1
    %s358 = scalar_select %p355, %s356, %s357
    %p361 = pneg %p355
    %p362 = scmp.eq.s32.totalorder %s21, 1
    %p363 = por %p361, %p362
    %p364 = scmp.ne.s32.totalorder %s356, %s359
    %p365 = scmp.eq.s32.totalorder %s21, 0
    %p366 = por %p364, %p365
    %p367 = scmp.ne.s32.totalorder %s356, %s359
    %p368 = scmp.eq.s32.totalorder %s26, 1
    %p369 = por %p367, %p368
    %p370 = scmp.ne.s32.totalorder %s359, %s360
    %p371 = scmp.eq.s32.totalorder %s26, 0
    %p372 = por %p370, %p371
    %p373 = scmp.ne.s32.totalorder %s359, %s360
    %p374 = scmp.eq.s32.totalorder %s27, 1
    %p375 = por %p373, %p374
    %p377 = scmp.ne.s32.totalorder %s360, %s376
    %p378 = scmp.eq.s32.totalorder %s27, 0
    %p379 = por %p377, %p378
    %p380 = scmp.le.s32.totalorder 1, %s21
    %p381 = scmp.lt.s32.totalorder %s21, 3
    %p382 = pnand %p380, %p381
    %p383 = pneg %p382
    // Predicated region
    $region9: #{basic_block_forward.1} parent=5 // pred_check
      _
    $region10: #{basic_block_forward.1} parent=5 // pred_check_branch
      %385 = sbr.rel (%p382) target = $region12
    $region11: #{basic_block_forward.1} parent=5 // pred_region
      %s386 = ssub.s32 %s21, 1
      // Predicated region
      $region13: #{basic_block_forward.1} parent=11 // pred_check
        %p387 = pneg %p94
      $region14: #{basic_block_forward.1} parent=11 // pred_check_branch
        %389 = sbr.rel (%p387) target = $region16
      $region15: #{basic_block_forward.1} parent=11 // pred_region
        _
      $region16: #{basic_block_forward.1} parent=11 // pred_fallthru
        _
      // Predicated region
      $region17: #{basic_block_forward.1} parent=11 // pred_check
        %p390 = pneg %p115
      $region18: #{basic_block_forward.1} parent=11 // pred_check_branch
        %392 = sbr.rel (%p390) target = $region20
      $region19: #{basic_block_forward.1} parent=11 // pred_region
        _
      $region20: #{basic_block_forward.1} parent=11 // pred_fallthru
        _
      // Predicated region
      $region21: #{basic_block_forward.1} parent=11 // pred_check
        %p393 = pneg %p136
      $region22: #{basic_block_forward.1} parent=11 // pred_check_branch
        %395 = sbr.rel (%p393) target = $region24
      $region23: #{basic_block_forward.1} parent=11 // pred_region
        _
      $region24: #{basic_block_forward.1} parent=11 // pred_fallthru
        _
      // Predicated region
      $region25: #{basic_block_forward.1} parent=11 // pred_check
        %p396 = pneg %p157
      $region26: #{basic_block_forward.1} parent=11 // pred_check_branch
        %398 = sbr.rel (%p396) target = $region28
      $region27: #{basic_block_forward.1} parent=11 // pred_region
        _
      $region28: #{basic_block_forward.1} parent=11 // pred_fallthru
        _
      // Predicated region
      $region29: #{basic_block_forward.1} parent=11 // pred_check
        %p399 = pneg %p178
      $region30: #{basic_block_forward.1} parent=11 // pred_check_branch
        %401 = sbr.rel (%p399) target = $region32
      $region31: #{basic_block_forward.1} parent=11 // pred_region
        _
      $region32: #{basic_block_forward.1} parent=11 // pred_fallthru
        _
      // Predicated region
      $region33: #{basic_block_forward.1} parent=11 // pred_check
        %p402 = pneg %p199
      $region34: #{basic_block_forward.1} parent=11 // pred_check_branch
        %404 = sbr.rel (%p402) target = $region36
      $region35: #{basic_block_forward.1} parent=11 // pred_region
        _
      $region36: #{basic_block_forward.1} parent=11 // pred_fallthru
        _
      // Predicated region
      $region37: #{basic_block_forward.1} parent=11 // pred_check
        %p405 = pneg %p220
      $region38: #{basic_block_forward.1} parent=11 // pred_check_branch
        %407 = sbr.rel (%p405) target = $region40
      $region39: #{basic_block_forward.1} parent=11 // pred_region
        _
      $region40: #{basic_block_forward.1} parent=11 // pred_fallthru
        _
      // Predicated region
      $region41: #{basic_block_forward.1} parent=11 // pred_check
        %p408 = pneg %p241
      $region42: #{basic_block_forward.1} parent=11 // pred_check_branch
        %410 = sbr.rel (%p408) target = $region44
      $region43: #{basic_block_forward.1} parent=11 // pred_region
        _
      $region44: #{basic_block_forward.1} parent=11 // pred_fallthru
        _
      // Predicated region
      $region45: #{basic_block_forward.1} parent=11 // pred_check
        %p411 = pneg %p262
      $region46: #{basic_block_forward.1} parent=11 // pred_check_branch
        %413 = sbr.rel (%p411) target = $region48
      $region47: #{basic_block_forward.1} parent=11 // pred_region
        _
      $region48: #{basic_block_forward.1} parent=11 // pred_fallthru
        _
      // Predicated region
      $region49: #{basic_block_forward.1} parent=11 // pred_check
        %p414 = pneg %p283
      $region50: #{basic_block_forward.1} parent=11 // pred_check_branch
        %416 = sbr.rel (%p414) target = $region52
      $region51: #{basic_block_forward.1} parent=11 // pred_region
        _
      $region52: #{basic_block_forward.1} parent=11 // pred_fallthru
        _
      // Predicated region
      $region53: #{basic_block_forward.1} parent=11 // pred_check
        %p417 = pneg %p304
      $region54: #{basic_block_forward.1} parent=11 // pred_check_branch
        %419 = sbr.rel (%p417) target = $region56
      $region55: #{basic_block_forward.1} parent=11 // pred_region
        _
      $region56: #{basic_block_forward.1} parent=11 // pred_fallthru
        _
      // Predicated region
      $region57: #{basic_block_forward.1} parent=11 // pred_check
        %p420 = pneg %p325
      $region58: #{basic_block_forward.1} parent=11 // pred_check_branch
        %422 = sbr.rel (%p420) target = $region60
      $region59: #{basic_block_forward.1} parent=11 // pred_region
        _
      $region60: #{basic_block_forward.1} parent=11 // pred_fallthru
        _
      // Predicated region
      $region61: #{basic_block_forward.1} parent=11 // pred_check
        %p423 = pneg %p346
      $region62: #{basic_block_forward.1} parent=11 // pred_check_branch
        %425 = sbr.rel (%p423) target = $region64
      $region63: #{basic_block_forward.1} parent=11 // pred_region
        _
      $region64: #{basic_block_forward.1} parent=11 // pred_fallthru
        _
    $region12: #{basic_block_forward.1} parent=5 // pred_fallthru
      _
    %p426 = scmp.lt.s32.totalorder %s21, 2
    // Predicated region
    $region65: #{basic_block_forward.1} parent=5 // pred_check
      %p427 = pneg %p426
    $region66: #{basic_block_forward.1} parent=5 // pred_check_branch
      %429 = sbr.rel (%p427) target = $region68
    $region67: #{basic_block_forward.1} parent=5 // pred_region
      // Predicated region
      $region69: #{basic_block_forward.1} parent=67 // pred_check
        %p430 = pneg %p41
      $region70: #{basic_block_forward.1} parent=67 // pred_check_branch
        %432 = sbr.rel (%p430) target = $region72
      $region71: #{basic_block_forward.1} parent=67 // pred_region
        %p433 = scmp.lt.s32.totalorder %s21, 1
        %s434 = scalar_select %p433, %s21, 1
        %s435 = smul.addr %s434, 6
        %s436 = smul.addr %s435, 4
        %s437 = scalar_lea.vmem %s0, %s436
      $region72: #{basic_block_forward.1} parent=67 // pred_fallthru
        _
      // Predicated region
      $region73: #{basic_block_forward.1} parent=67 // pred_check
        %p438 = pneg %p67
      $region74: #{basic_block_forward.1} parent=67 // pred_check_branch
        %440 = sbr.rel (%p438) target = $region76
      $region75: #{basic_block_forward.1} parent=67 // pred_region
        %p441 = scmp.lt.s32.totalorder %s21, 1
        %s442 = scalar_select %p441, %s21, 1
        %s443 = smul.addr %s442, 4
        %s444 = smul.addr %s443, 4
        %s445 = scalar_lea.vmem %s1, %s444
      $region76: #{basic_block_forward.1} parent=67 // pred_fallthru
        _
    $region68: #{basic_block_forward.1} parent=5 // pred_fallthru
      _
    %p446 = scmp.le.s32.totalorder 1, %s21
    %p447 = scmp.lt.s32.totalorder %s21, 3
    %p448 = pnand %p446, %p447
    %p449 = pneg %p448
    // Predicated region
    $region77: #{basic_block_forward.1} parent=5 // pred_check
      _
    $region78: #{basic_block_forward.1} parent=5 // pred_check_branch
      %451 = sbr.rel (%p448) target = $region80
    $region79: #{basic_block_forward.1} parent=5 // pred_region
      %s452 = ssub.s32 %s21, 1
      %p453 = scmp.lt.s32.totalorder %s26, 1
      %s454 = scalar_select %p453, %s26, 1
      %s455 = smul.addr %s454, 6
      %s456 = smul.addr %s455, 4
      %s457 = scalar_lea.vmem %s0, %s456
      %p458 = pneg %p47
      %p459 = pneg %p44
      %p460 = scmp.lt.s32.totalorder %s26, 1
      %s461 = scalar_select %p460, %s26, 1
      %s462 = smul.addr %s461, 4
      %s463 = smul.addr %s462, 4
      %s464 = scalar_lea.vmem %s1, %s463
      %p465 = pneg %p73
      %p466 = pneg %p70
      %p467 = pneg %p94
      %p468 = pneg %p91
      %p469 = pneg %p115
      %p470 = pneg %p112
      %p471 = pneg %p136
      %p472 = pneg %p133
      %p473 = pneg %p157
      %p474 = pneg %p154
      %p475 = pneg %p178
      %p476 = pneg %p175
      %p477 = pneg %p199
      %p478 = pneg %p196
      %p479 = pneg %p220
      %p480 = pneg %p217
      %p481 = pneg %p241
      %p482 = pneg %p238
      %p483 = pneg %p262
      %p484 = pneg %p259
      %p485 = pneg %p283
      %p486 = pneg %p280
      %p487 = pneg %p304
      %p488 = pneg %p301
      %p489 = pneg %p325
      %p490 = pneg %p322
      %p491 = pneg %p346
      %p492 = pneg %p343
      %p493 = pneg %p372
      %p494 = pneg %p369
      %p495 = scmp.lt.s32.totalorder %s26, 1
      %s496 = scalar_select %p495, %s26, 1
      %s497 = smul.addr %s496, 6
      %s498 = smul.addr %s497, 8
      %s499 = scalar_lea.vmem %s15, %s498
      %p500 = scmp.lt.s32.totalorder %s26, 1
      %s501 = scalar_select %p500, %s26, 1
      %s502 = smul.addr %s501, 6
      %s503 = smul.addr %s502, 4
      %s504 = scalar_lea.vmem %s0, %s503
      %p505 = scmp.lt.s32.totalorder %s26, 1
      %s506 = scalar_select %p505, %s26, 1
      %s507 = smul.addr %s506, 4
      %s508 = smul.addr %s507, 4
      %s509 = scalar_lea.vmem %s1, %s508
      %p510 = scmp.lt.s32.totalorder %s26, 1
      %s511 = scalar_select %p510, %s26, 1
      %s512 = smul.addr %s511, 6
      %s513 = smul.addr %s512, 8
      %s514 = scalar_lea.vmem %s15, %s513
      %v516 = vld [vmem:[%s504] sm:$0xff]
      %v517 = vld [vmem:[%s504 + $0x8] sm:$0xf]
      %v518 = vld [vmem:[%s504 + $0xc] sm:$0xff]
      %v519 = vld [vmem:[%s504 + $0x14] sm:$0xf]
      %v520 = vld [vmem:[%s4] sm:$0x7]
      %v523 = vunpack.c.l.b16 %v517
      %v524 = vunpack.c.l.b16 %v519
      %v525 = vpack.c.b16 %v524, %v523
      %526 = vrot.lane.b32.xlu0 %v525, 19
      %v527 = vpop.permute.xlu0 %526
      %v530 = vunpack.c.l.b16 %v516
      %v531 = vunpack.c.h.b16 %v516
      %v532 = vunpack.c.l.b16 %v518
      %v533 = vunpack.c.h.b16 %v518
      %v534 = vpack.c.b16 %v532, %v530
      %v535 = vpack.c.b16 %v533, %v531
      %536 = vrot.lane.b32.xlu0 %v534, 19
      %v537 = vpop.permute.xlu0 %536
      %538 = vrot.lane.b32.xlu0 %v535, 19
      %v539 = vpop.permute.xlu0 %538
      %vm540 = vcmask 154624
      %v541 = vsel %vm540, %v537, %v539
      %v542 = vsel %vm540, %v539, %v527
      %vm545 = vcmask 154624
      %v548 = vsel %vm545, %v527, %v537
      %550 = vst [vmem:[#allocation2] sm:$0xff] %v548
      %551 = vst [vmem:[#allocation2 + $0x8] sm:$0xff] %v541
      %552 = vst [vmem:[#allocation2 + $0x10] sm:$0xff] %v542
      %553 = vrot.lane.b32.xlu0 %v525, 18
      %v554 = vpop.permute.xlu0 %553
      %555 = vrot.lane.b32.xlu0 %v534, 18
      %v556 = vpop.permute.xlu0 %555
      %557 = vrot.lane.b32.xlu0 %v535, 18
      %v558 = vpop.permute.xlu0 %557
      %vm559 = vcmask 146432
      %v560 = vsel %vm559, %v556, %v558
      %v561 = vsel %vm559, %v558, %v554
      %vm564 = vcmask 146432
      %v567 = vsel %vm564, %v554, %v556
      %569 = vst [vmem:[#allocation2 + $0x18] sm:$0xff] %v567
      %570 = vst [vmem:[#allocation2 + $0x20] sm:$0xff] %v560
      %571 = vst [vmem:[#allocation2 + $0x28] sm:$0xff] %v561
      %572 = vrot.lane.b32.xlu0 %v525, 17
      %v573 = vpop.permute.xlu0 %572
      %574 = vrot.lane.b32.xlu0 %v534, 17
      %v575 = vpop.permute.xlu0 %574
      %576 = vrot.lane.b32.xlu0 %v535, 17
      %v577 = vpop.permute.xlu0 %576
      %vm578 = vcmask 138240
      %v579 = vsel %vm578, %v575, %v577
      %v580 = vsel %vm578, %v577, %v573
      %vm583 = vcmask 138240
      %v586 = vsel %vm583, %v573, %v575
      %588 = vst [vmem:[#allocation2 + $0x30] sm:$0xff] %v586
      %589 = vst [vmem:[#allocation2 + $0x38] sm:$0xff] %v579
      %590 = vst [vmem:[#allocation2 + $0x40] sm:$0xff] %v580
      %591 = vrot.lane.b32.xlu0 %v525, 1
      %v592 = vpop.permute.xlu0 %591
      %593 = vrot.lane.b32.xlu0 %v534, 1
      %v594 = vpop.permute.xlu0 %593
      %595 = vrot.lane.b32.xlu0 %v535, 1
      %v596 = vpop.permute.xlu0 %595
      %vm597 = vcmask 7168
      %v598 = vsel %vm597, %v594, %v596
      %v599 = vsel %vm597, %v596, %v592
      %vm602 = vcmask 7168
      %v605 = vsel %vm602, %v592, %v594
      %607 = vst [vmem:[#allocation2 + $0x48] sm:$0xff] %v605
      %608 = vst [vmem:[#allocation2 + $0x50] sm:$0xff] %v598
      %609 = vst [vmem:[#allocation2 + $0x58] sm:$0xff] %v599
      %613 = vst [vmem:[#allocation2 + $0x60] sm:$0xff] %v534
      %614 = vst [vmem:[#allocation2 + $0x68] sm:$0xff] %v535
      %615 = vst [vmem:[#allocation2 + $0x70] sm:$0xff] %v525
      %616 = vrot.lane.b32.xlu0 %v534, 127
      %v617 = vpop.permute.xlu0 %616
      %618 = vrot.lane.b32.xlu0 %v535, 127
      %v619 = vpop.permute.xlu0 %618
      %620 = vrot.lane.b32.xlu0 %v525, 127
      %v621 = vpop.permute.xlu0 %620
      %vm622 = vcmask 1039360
      %v623 = vsel %vm622, %v617, %v619
      %v624 = vsel %vm622, %v619, %v621
      %vm627 = vcmask 1039360
      %v630 = vsel %vm627, %v621, %v617
      %632 = vst [vmem:[#allocation2 + $0x78] sm:$0xff] %v623
      %633 = vst [vmem:[#allocation2 + $0x80] sm:$0xff] %v624
      %634 = vst [vmem:[#allocation2 + $0x88] sm:$0xff] %v630
      %635 = vrot.lane.b32.xlu0 %v534, 111
      %v636 = vpop.permute.xlu0 %635
      %637 = vrot.lane.b32.xlu0 %v535, 111
      %v638 = vpop.permute.xlu0 %637
      %639 = vrot.lane.b32.xlu0 %v525, 111
      %v640 = vpop.permute.xlu0 %639
      %vm641 = vcmask 908288
      %v642 = vsel %vm641, %v636, %v638
      %v643 = vsel %vm641, %v638, %v640
      %vm646 = vcmask 908288
      %v649 = vsel %vm646, %v640, %v636
      %651 = vst [vmem:[#allocation2 + $0x90] sm:$0xff] %v642
      %652 = vst [vmem:[#allocation2 + $0x98] sm:$0xff] %v643
      %653 = vst [vmem:[#allocation2 + $0xa0] sm:$0xff] %v649
      %654 = vrot.lane.b32.xlu0 %v534, 110
      %v655 = vpop.permute.xlu0 %654
      %656 = vrot.lane.b32.xlu0 %v535, 110
      %v657 = vpop.permute.xlu0 %656
      %658 = vrot.lane.b32.xlu0 %v525, 110
      %v659 = vpop.permute.xlu0 %658
      %vm660 = vcmask 900096
      %v661 = vsel %vm660, %v655, %v657
      %v662 = vsel %vm660, %v657, %v659
      %vm665 = vcmask 900096
      %v668 = vsel %vm665, %v659, %v655
      %670 = vst [vmem:[#allocation2 + $0xa8] sm:$0xff] %v661
      %671 = vst [vmem:[#allocation2 + $0xb0] sm:$0xff] %v662
      %672 = vst [vmem:[#allocation2 + $0xb8] sm:$0xff] %v668
      %673 = vrot.lane.b32.xlu0 %v534, 109
      %v674 = vpop.permute.xlu0 %673
      %675 = vrot.lane.b32.xlu0 %v535, 109
      %v676 = vpop.permute.xlu0 %675
      %677 = vrot.lane.b32.xlu0 %v525, 109
      %v678 = vpop.permute.xlu0 %677
      %vm679 = vcmask 891904
      %v680 = vsel %vm679, %v674, %v676
      %v681 = vsel %vm679, %v676, %v678
      %vm684 = vcmask 891904
      %v687 = vsel %vm684, %v678, %v674
      %689 = vst [vmem:[#allocation2 + $0xc0] sm:$0xff] %v680
      %690 = vst [vmem:[#allocation2 + $0xc8] sm:$0xff] %v681
      %691 = vst [vmem:[#allocation2 + $0xd0] sm:$0xff] %v687
      %v692 = vld [vmem:[%s509] sm:$0xff]
      %v693 = vld [vmem:[%s509 + $0x8] sm:$0xff]
      %v694 = vld [vmem:[#allocation2] sm:$0xff]
      %v695 = vld [vmem:[#allocation2 + $0x8] sm:$0xff]
      %v696 = vld [vmem:[#allocation2 + $0x10] sm:$0xff]
      %v697 = vld [vmem:[#allocation2 + $0x18] sm:$0xff]
      %v698 = vld [vmem:[#allocation2 + $0x20] sm:$0xff]
      %v699 = vld [vmem:[#allocation2 + $0x28] sm:$0xff]
      %v700 = vld [vmem:[#allocation2 + $0x30] sm:$0xff]
      %v701 = vld [vmem:[#allocation2 + $0x38] sm:$0xff]
      %v702 = vld [vmem:[#allocation2 + $0x40] sm:$0xff]
      %v703 = vld [vmem:[#allocation2 + $0x48] sm:$0xff]
      %v704 = vld [vmem:[#allocation2 + $0x50] sm:$0xff]
      %v705 = vld [vmem:[#allocation2 + $0x58] sm:$0xff]
      %v706 = vld [vmem:[#allocation2 + $0x60] sm:$0xff]
      %v707 = vld [vmem:[#allocation2 + $0x68] sm:$0xff]
      %v708 = vld [vmem:[#allocation2 + $0x70] sm:$0xff]
      %v709 = vld [vmem:[#allocation2 + $0x78] sm:$0xff]
      %v710 = vld [vmem:[#allocation2 + $0x80] sm:$0xff]
      %v711 = vld [vmem:[#allocation2 + $0x88] sm:$0xff]
      %v712 = vld [vmem:[#allocation2 + $0x90] sm:$0xff]
      %v713 = vld [vmem:[#allocation2 + $0x98] sm:$0xff]
      %v714 = vld [vmem:[#allocation2 + $0xa0] sm:$0xff]
      %v715 = vld [vmem:[#allocation2 + $0xa8] sm:$0xff]
      %v716 = vld [vmem:[#allocation2 + $0xb0] sm:$0xff]
      %v717 = vld [vmem:[#allocation2 + $0xb8] sm:$0xff]
      %v718 = vld [vmem:[#allocation2 + $0xc0] sm:$0xff]
      %v719 = vld [vmem:[#allocation2 + $0xc8] sm:$0xff]
      %v720 = vld [vmem:[#allocation2 + $0xd0] sm:$0xff]
      %v721 = vld [vmem:[%s3] sm:$0xff]
      %v722 = vld [vmem:[%s3 + $0x8] sm:$0xff]
      %724 = vset.pattern.permute.xlu0 0
      %725 = vperm.xlu0 %724, %v721
      %v726 = vpop.permute.xlu0 %725
      %729 = vset.pattern.permute.xlu0 0
      %730 = vperm.xlu0 %729, %v722
      %v731 = vpop.permute.xlu0 %730
      %v735 = vunpack.c.l.b16 %v692
      %v736 = vunpack.c.h.b16 %v692
      %v737 = vunpack.c.l.b16 %v693
      %v738 = vunpack.c.h.b16 %v693
      %v739 = vpack.c.b16 %v737, %v735
      %v740 = vpack.c.b16 %v738, %v736
      %vm742 = vcmask 130048
      %v744 = vsel %vm742, %v740, 0
      %746 = vmatprep.subr.bf16.mxu0 %v695
      %747 = vmatpush1.bf16.msra.mxu0 %v694
      %748 = vmatprep.subr.bf16.mxu0 %v698
      %749 = vmatpush1.bf16.msra.mxu0 %v697
      %750 = vmatprep.subr.bf16.mxu0 %v701
      %751 = vmatpush1.bf16.msra.mxu0 %v700
      %752 = vmatprep.subr.bf16.mxu0 %v704
      %753 = vmatpush1.bf16.msra.mxu0 %v703
      %754 = vmatprep.subr.bf16.mxu0 %v707
      %755 = vmatpush1.bf16.msra.mxu0 %v706
      %756 = vmatprep.subr.bf16.mxu0 %v710
      %757 = vmatpush1.bf16.msra.mxu0 %v709
      %758 = vmatprep.subr.bf16.mxu0 %v713
      %759 = vmatpush1.bf16.msra.mxu0 %v712
      %760 = vmatprep.subr.bf16.mxu0 %v716
      %761 = vmatpush1.bf16.msra.mxu0 %v715
      %762 = vmatprep.subr.bf16.mxu0 %v719
      %763 = vmatpush1.bf16.msra.mxu0 %v718
      %764 = vmatprep.subr.bf16.mxu0 0
      %765 = vmatpush1.bf16.msra.mxu0 0
      %766 = vmatprep.subr.bf16.mxu0 0
      %767 = vmatpush1.bf16.msra.mxu0 0
      %768 = vmatprep.subr.bf16.mxu0 0
      %769 = vmatpush1.bf16.msra.mxu0 0
      %770 = vmatprep.subr.bf16.mxu0 0
      %771 = vmatpush1.bf16.msra.mxu0 0
      %772 = vmatprep.subr.bf16.mxu0 0
      %773 = vmatpush1.bf16.msra.mxu0 0
      %774 = vmatprep.subr.bf16.mxu0 0
      %775 = vmatpush1.bf16.msra.mxu0 0
      %776 = vmatprep.subr.bf16.mxu0 0
      %777 = vmatpush1.bf16.msra.mxu0 0
      %778 = vmatprep.mubr.bf16.mxu0 %v744
      %779 = vmatmul.mubr.bf16.gmra.mrb[0].mxu0 %v739
      %v780 = vpop.f32.mrb[0].mxu0
      %v781 = vadd.f32 %v726, %v780
      %v782 = vpop.f32.mrb[0].mxu0
      %v783 = vadd.f32 %v726, %v782
      %v784 = vpop.f32.mrb[0].mxu0
      %v785 = vadd.f32 %v731, %v784
      %v786 = vpop.f32.mrb[0].mxu0
      %v787 = vadd.f32 %v731, %v786
      %788 = vdwg.mxu0
      %789 = vmatprep.subr.bf16.mxu0 0
      %790 = vmatpush1.bf16.msra.mxu0 %v696
      %791 = vmatprep.subr.bf16.mxu0 0
      %792 = vmatpush1.bf16.msra.mxu0 %v699
      %793 = vmatprep.subr.bf16.mxu0 0
      %794 = vmatpush1.bf16.msra.mxu0 %v702
      %795 = vmatprep.subr.bf16.mxu0 0
      %796 = vmatpush1.bf16.msra.mxu0 %v705
      %797 = vmatprep.subr.bf16.mxu0 0
      %798 = vmatpush1.bf16.msra.mxu0 %v708
      %799 = vmatprep.subr.bf16.mxu0 0
      %800 = vmatpush1.bf16.msra.mxu0 %v711
      %801 = vmatprep.subr.bf16.mxu0 0
      %802 = vmatpush1.bf16.msra.mxu0 %v714
      %803 = vmatprep.subr.bf16.mxu0 0
      %804 = vmatpush1.bf16.msra.mxu0 %v717
      %805 = vmatprep.subr.bf16.mxu0 0
      %806 = vmatpush1.bf16.msra.mxu0 %v720
      %807 = vmatprep.subr.bf16.mxu0 0
      %808 = vmatpush1.bf16.msra.mxu0 0
      %809 = vmatprep.subr.bf16.mxu0 0
      %810 = vmatpush1.bf16.msra.mxu0 0
      %811 = vmatprep.subr.bf16.mxu0 0
      %812 = vmatpush1.bf16.msra.mxu0 0
      %813 = vmatprep.subr.bf16.mxu0 0
      %814 = vmatpush1.bf16.msra.mxu0 0
      %815 = vmatprep.subr.bf16.mxu0 0
      %816 = vmatpush1.bf16.msra.mxu0 0
      %817 = vmatprep.subr.bf16.mxu0 0
      %818 = vmatpush1.bf16.msra.mxu0 0
      %819 = vmatprep.subr.bf16.mxu0 0
      %820 = vmatpush1.bf16.msra.mxu0 0
      %821 = vmatprep.mubr.bf16.mxu0 %v744
      %822 = vmatmul.mubr.bf16.gmra.mrb[0].mxu0 %v739
      %v823 = vpop.f32.mrb[0].mxu0
      %v824 = vadd.f32 %v726, %v823
      %v825 = vpop.f32.mrb[0].mxu0
      %v826 = vpop.f32.mrb[0].mxu0
      %v827 = vadd.f32 %v731, %v826
      %v828 = vpop.f32.mrb[0].mxu0
      %829 = vdwg.mxu0
      %v830 = vmax.f32 %v781, 0.0
      %v831 = vmax.f32 %v783, 0.0
      %v832 = vmax.f32 %v824, 0.0
      %v833 = vmax.f32 %v785, 0.0
      %v834 = vmax.f32 %v787, 0.0
      %v835 = vmax.f32 %v827, 0.0
      %v837 = vlaneseq
      %v838 = vshrl.u32 %v837, 7
      %v839 = vsub.s32 0, %v838
      %v840 = vrot.slane %v520, %v839
      %v841 = vlaneseq
      %v842 = vshrl.u32 %v841, 7
      %v843 = vsub.s32 1, %v842
      %v844 = vrot.slane %v520, %v843
      %v845 = vlaneseq
      %v846 = vshrl.u32 %v845, 7
      %v847 = vsub.s32 2, %v846
      %v848 = vrot.slane %v520, %v847
      %v852 = vmul.f32 %v830, %v840
      %v853 = vmul.f32 %v831, %v844
      %v854 = vmul.f32 %v832, %v848
      %v855 = vmul.f32 %v833, %v840
      %v856 = vmul.f32 %v834, %v844
      %v857 = vmul.f32 %v835, %v848
      %v858 = vld [vmem:[%s5] sm:$0xff]
      %v859 = vld [vmem:[%s5 + $0x8] sm:$0xff]
      %v860 = vld [vmem:[%s5 + $0x10] sm:$0xff]
      %v861 = vld [vmem:[%s5 + $0x18] sm:$0xff]
      %v862 = vld [vmem:[%s5 + $0x20] sm:$0xff]
      %v863 = vld [vmem:[%s5 + $0x28] sm:$0xff]
      %v864 = vld [vmem:[%s5 + $0x30] sm:$0xff]
      %v865 = vld [vmem:[%s5 + $0x38] sm:$0xff]
      %v866 = vld [vmem:[%s5 + $0x40] sm:$0xff]
      %v867 = vld [vmem:[%s5 + $0x48] sm:$0xff]
      %v868 = vld [vmem:[%s5 + $0x50] sm:$0xff]
      %v869 = vld [vmem:[%s5 + $0x58] sm:$0xff]
      %v870 = vld [vmem:[%s5 + $0x60] sm:$0xff]
      %v871 = vld [vmem:[%s5 + $0x68] sm:$0xff]
      %v872 = vld [vmem:[%s5 + $0x70] sm:$0xff]
      %v873 = vld [vmem:[%s5 + $0x78] sm:$0xff]
      %v874 = vld [vmem:[%s5 + $0x80] sm:$0xff]
      %v875 = vld [vmem:[%s5 + $0x88] sm:$0xff]
      %v876 = vld [vmem:[%s5 + $0x90] sm:$0xff]
      %v877 = vld [vmem:[%s5 + $0x98] sm:$0xff]
      %v878 = vld [vmem:[%s5 + $0xa0] sm:$0xff]
      %v879 = vld [vmem:[%s5 + $0xa8] sm:$0xff]
      %v880 = vld [vmem:[%s5 + $0xb0] sm:$0xff]
      %v881 = vld [vmem:[%s5 + $0xb8] sm:$0xff]
      %v882 = vld [vmem:[%s5 + $0xc0] sm:$0xff]
      %v883 = vld [vmem:[%s5 + $0xc8] sm:$0xff]
      %v884 = vld [vmem:[%s5 + $0xd0] sm:$0xff]
      %v885 = vld [vmem:[%s5 + $0xd8] sm:$0xff]
      %v886 = vld [vmem:[%s5 + $0xe0] sm:$0xff]
      %v887 = vld [vmem:[%s5 + $0xe8] sm:$0xff]
      %v888 = vld [vmem:[%s5 + $0xf0] sm:$0xff]
      %v889 = vld [vmem:[%s5 + $0xf8] sm:$0xff]
      %v890 = vld [vmem:[%s5 + $0x100] sm:$0xff]
      %v891 = vld [vmem:[%s5 + $0x108] sm:$0xff]
      %v892 = vld [vmem:[%s5 + $0x110] sm:$0xff]
      %v893 = vld [vmem:[%s5 + $0x118] sm:$0xff]
      %v894 = vld [vmem:[%s5 + $0x120] sm:$0xff]
      %v895 = vld [vmem:[%s5 + $0x128] sm:$0xff]
      %v896 = vld [vmem:[%s5 + $0x130] sm:$0xff]
      %v897 = vld [vmem:[%s5 + $0x138] sm:$0xff]
      %v898 = vld [vmem:[%s5 + $0x140] sm:$0xff]
      %v899 = vld [vmem:[%s5 + $0x148] sm:$0xff]
      %v900 = vld [vmem:[%s5 + $0x150] sm:$0xff]
      %v901 = vld [vmem:[%s5 + $0x158] sm:$0xff]
      %v902 = vld [vmem:[%s5 + $0x160] sm:$0xff]
      %v903 = vld [vmem:[%s5 + $0x168] sm:$0xff]
      %v904 = vld [vmem:[%s5 + $0x170] sm:$0xff]
      %v905 = vld [vmem:[%s5 + $0x178] sm:$0xff]
      %906 = vmatprep.subr.mxu0 0.0
      %907 = vmatpush1.msra.mxu0 %v858
      %908 = vmatprep.subr.mxu0 0.0
      %909 = vmatpush1.msra.mxu0 %v859
      %910 = vmatprep.subr.mxu0 0.0
      %911 = vmatpush1.msra.mxu0 %v860
      %912 = vmatprep.subr.mxu0 0.0
      %913 = vmatpush1.msra.mxu0 %v861
      %914 = vmatprep.subr.mxu0 0.0
      %915 = vmatpush1.msra.mxu0 %v862
      %916 = vmatprep.subr.mxu0 0.0
      %917 = vmatpush1.msra.mxu0 %v863
      %918 = vmatprep.subr.mxu0 0.0
      %919 = vmatpush1.msra.mxu0 %v864
      %920 = vmatprep.subr.mxu0 0.0
      %921 = vmatpush1.msra.mxu0 %v865
      %922 = vmatprep.subr.mxu0 0.0
      %923 = vmatpush1.msra.mxu0 %v866
      %924 = vmatprep.subr.mxu0 0.0
      %925 = vmatpush1.msra.mxu0 %v867
      %926 = vmatprep.subr.mxu0 0.0
      %927 = vmatpush1.msra.mxu0 %v868
      %928 = vmatprep.subr.mxu0 0.0
      %929 = vmatpush1.msra.mxu0 %v869
      %930 = vmatprep.subr.mxu0 0.0
      %931 = vmatpush1.msra.mxu0 %v870
      %932 = vmatprep.subr.mxu0 0.0
      %933 = vmatpush1.msra.mxu0 %v871
      %934 = vmatprep.subr.mxu0 0.0
      %935 = vmatpush1.msra.mxu0 %v872
      %936 = vmatprep.subr.mxu0 0.0
      %937 = vmatpush1.msra.mxu0 %v873
      %938 = vmatprep.subr.mxu0 0.0
      %939 = vmatpush1.msra.mxu0 %v874
      %940 = vmatprep.subr.mxu0 0.0
      %941 = vmatpush1.msra.mxu0 %v875
      %942 = vmatprep.subr.mxu0 0.0
      %943 = vmatpush1.msra.mxu0 %v876
      %944 = vmatprep.subr.mxu0 0.0
      %945 = vmatpush1.msra.mxu0 %v877
      %946 = vmatprep.subr.mxu0 0.0
      %947 = vmatpush1.msra.mxu0 %v878
      %948 = vmatprep.subr.mxu0 0.0
      %949 = vmatpush1.msra.mxu0 %v879
      %950 = vmatprep.subr.mxu0 0.0
      %951 = vmatpush1.msra.mxu0 %v880
      %952 = vmatprep.subr.mxu0 0.0
      %953 = vmatpush1.msra.mxu0 %v881
      %954 = vmatprep.subr.mxu0 0.0
      %955 = vmatpush1.msra.mxu0 %v882
      %956 = vmatprep.subr.mxu0 0.0
      %957 = vmatpush1.msra.mxu0 %v883
      %958 = vmatprep.subr.mxu0 0.0
      %959 = vmatpush1.msra.mxu0 %v884
      %960 = vmatprep.subr.mxu0 0.0
      %961 = vmatpush1.msra.mxu0 %v885
      %962 = vmatprep.subr.mxu0 0.0
      %963 = vmatpush1.msra.mxu0 %v886
      %964 = vmatprep.subr.mxu0 0.0
      %965 = vmatpush1.msra.mxu0 %v887
      %966 = vmatprep.subr.mxu0 0.0
      %967 = vmatpush1.msra.mxu0 %v888
      %968 = vmatprep.subr.mxu0 0.0
      %969 = vmatpush1.msra.mxu0 %v889
      %970 = vmatprep.mubr.f32.mxu0 %v853
      %971 = vmatmul.mubr.f32.gmra.mrb[0].mxu0 %v852
      %v972 = vpop.f32.mrb[0].mxu0
      %v973 = vadd.f32 0.0, %v972
      %v974 = vpop.f32.mrb[0].mxu0
      %975 = vmatprep.mubr.f32.mxu0 %v856
      %976 = vmatmul.mubr.f32.gmra.mrb[0].mxu0 %v855
      %v977 = vpop.f32.mrb[0].mxu0
      %v978 = vadd.f32 0.0, %v977
      %v979 = vpop.f32.mrb[0].mxu0
      %980 = vdwg.mxu0
      %981 = vmatprep.subr.mxu0 0.0
      %982 = vmatpush1.msra.mxu0 %v890
      %983 = vmatprep.subr.mxu0 0.0
      %984 = vmatpush1.msra.mxu0 %v891
      %985 = vmatprep.subr.mxu0 0.0
      %986 = vmatpush1.msra.mxu0 %v892
      %987 = vmatprep.subr.mxu0 0.0
      %988 = vmatpush1.msra.mxu0 %v893
      %989 = vmatprep.subr.mxu0 0.0
      %990 = vmatpush1.msra.mxu0 %v894
      %991 = vmatprep.subr.mxu0 0.0
      %992 = vmatpush1.msra.mxu0 %v895
      %993 = vmatprep.subr.mxu0 0.0
      %994 = vmatpush1.msra.mxu0 %v896
      %995 = vmatprep.subr.mxu0 0.0
      %996 = vmatpush1.msra.mxu0 %v897
      %997 = vmatprep.subr.mxu0 0.0
      %998 = vmatpush1.msra.mxu0 %v898
      %999 = vmatprep.subr.mxu0 0.0
      %1000 = vmatpush1.msra.mxu0 %v899
      %1001 = vmatprep.subr.mxu0 0.0
      %1002 = vmatpush1.msra.mxu0 %v900
      %1003 = vmatprep.subr.mxu0 0.0
      %1004 = vmatpush1.msra.mxu0 %v901
      %1005 = vmatprep.subr.mxu0 0.0
      %1006 = vmatpush1.msra.mxu0 %v902
      %1007 = vmatprep.subr.mxu0 0.0
      %1008 = vmatpush1.msra.mxu0 %v903
      %1009 = vmatprep.subr.mxu0 0.0
      %1010 = vmatpush1.msra.mxu0 %v904
      %1011 = vmatprep.subr.mxu0 0.0
      %1012 = vmatpush1.msra.mxu0 %v905
      %1013 = vmatprep.subr.mxu0 0.0
      %1014 = vmatpush1.msra.mxu0 0.0
      %1015 = vmatprep.subr.mxu0 0.0
      %1016 = vmatpush1.msra.mxu0 0.0
      %1017 = vmatprep.subr.mxu0 0.0
      %1018 = vmatpush1.msra.mxu0 0.0
      %1019 = vmatprep.subr.mxu0 0.0
      %1020 = vmatpush1.msra.mxu0 0.0
      %1021 = vmatprep.subr.mxu0 0.0
      %1022 = vmatpush1.msra.mxu0 0.0
      %1023 = vmatprep.subr.mxu0 0.0
      %1024 = vmatpush1.msra.mxu0 0.0
      %1025 = vmatprep.subr.mxu0 0.0
      %1026 = vmatpush1.msra.mxu0 0.0
      %1027 = vmatprep.subr.mxu0 0.0
      %1028 = vmatpush1.msra.mxu0 0.0
      %1029 = vmatprep.subr.mxu0 0.0
      %1030 = vmatpush1.msra.mxu0 0.0
      %1031 = vmatprep.subr.mxu0 0.0
      %1032 = vmatpush1.msra.mxu0 0.0
      %1033 = vmatprep.subr.mxu0 0.0
      %1034 = vmatpush1.msra.mxu0 0.0
      %1035 = vmatprep.subr.mxu0 0.0
      %1036 = vmatpush1.msra.mxu0 0.0
      %1037 = vmatprep.subr.mxu0 0.0
      %1038 = vmatpush1.msra.mxu0 0.0
      %1039 = vmatprep.subr.mxu0 0.0
      %1040 = vmatpush1.msra.mxu0 0.0
      %1041 = vmatprep.subr.mxu0 0.0
      %1042 = vmatpush1.msra.mxu0 0.0
      %1043 = vmatprep.subr.mxu0 0.0
      %1044 = vmatpush1.msra.mxu0 0.0
      %1045 = vmatprep.mubr.f32.mxu0 0.0
      %1046 = vmatmul.mubr.f32.gmra.mrb[0].mxu0 %v854
      %v1047 = vpop.f32.mrb[0].mxu0
      %v1048 = vadd.f32 %v973, %v1047
      %v1049 = vpop.f32.mrb[0].mxu0
      %1050 = vmatprep.mubr.f32.mxu0 0.0
      %1051 = vmatmul.mubr.f32.gmra.mrb[0].mxu0 %v857
      %v1052 = vpop.f32.mrb[0].mxu0
      %v1053 = vadd.f32 %v978, %v1052
      %v1054 = vpop.f32.mrb[0].mxu0
      %1055 = vdwg.mxu0
      %v1056 = vld [vmem:[%s6] sm:$0xff]
      %v1057 = vld [vmem:[%s6 + $0x8] sm:$0xff]
      %v1058 = vld [vmem:[%s6 + $0x10] sm:$0xff]
      %v1059 = vld [vmem:[%s6 + $0x18] sm:$0xff]
      %v1060 = vld [vmem:[%s6 + $0x20] sm:$0xff]
      %v1061 = vld [vmem:[%s6 + $0x28] sm:$0xff]
      %v1062 = vld [vmem:[%s6 + $0x30] sm:$0xff]
      %v1063 = vld [vmem:[%s6 + $0x38] sm:$0xff]
      %v1064 = vld [vmem:[%s6 + $0x40] sm:$0xff]
      %v1065 = vld [vmem:[%s6 + $0x48] sm:$0xff]
      %v1066 = vld [vmem:[%s6 + $0x50] sm:$0xff]
      %v1067 = vld [vmem:[%s6 + $0x58] sm:$0xff]
      %v1068 = vld [vmem:[%s6 + $0x60] sm:$0xff]
      %v1069 = vld [vmem:[%s6 + $0x68] sm:$0xff]
      %v1070 = vld [vmem:[%s6 + $0x70] sm:$0xff]
      %v1071 = vld [vmem:[%s6 + $0x78] sm:$0xff]
      %v1072 = vld [vmem:[%s6 + $0x80] sm:$0xff]
      %v1073 = vld [vmem:[%s6 + $0x88] sm:$0xff]
      %v1074 = vld [vmem:[%s6 + $0x90] sm:$0xff]
      %v1075 = vld [vmem:[%s6 + $0x98] sm:$0xff]
      %v1076 = vld [vmem:[%s6 + $0xa0] sm:$0xff]
      %v1077 = vld [vmem:[%s6 + $0xa8] sm:$0xff]
      %v1078 = vld [vmem:[%s6 + $0xb0] sm:$0xff]
      %v1079 = vld [vmem:[%s6 + $0xb8] sm:$0xff]
      %v1080 = vld [vmem:[%s6 + $0xc0] sm:$0xff]
      %v1081 = vld [vmem:[%s6 + $0xc8] sm:$0xff]
      %v1082 = vld [vmem:[%s6 + $0xd0] sm:$0xff]
      %v1083 = vld [vmem:[%s6 + $0xd8] sm:$0xff]
      %v1084 = vld [vmem:[%s6 + $0xe0] sm:$0xff]
      %v1085 = vld [vmem:[%s6 + $0xe8] sm:$0xff]
      %v1086 = vld [vmem:[%s6 + $0xf0] sm:$0xff]
      %v1087 = vld [vmem:[%s6 + $0xf8] sm:$0xff]
      %v1088 = vld [vmem:[%s6 + $0x100] sm:$0xff]
      %v1089 = vld [vmem:[%s6 + $0x108] sm:$0xff]
      %v1090 = vld [vmem:[%s6 + $0x110] sm:$0xff]
      %v1091 = vld [vmem:[%s6 + $0x118] sm:$0xff]
      %v1092 = vld [vmem:[%s6 + $0x120] sm:$0xff]
      %v1093 = vld [vmem:[%s6 + $0x128] sm:$0xff]
      %v1094 = vld [vmem:[%s6 + $0x130] sm:$0xff]
      %v1095 = vld [vmem:[%s6 + $0x138] sm:$0xff]
      %v1096 = vld [vmem:[%s6 + $0x140] sm:$0xff]
      %v1097 = vld [vmem:[%s6 + $0x148] sm:$0xff]
      %v1098 = vld [vmem:[%s6 + $0x150] sm:$0xff]
      %v1099 = vld [vmem:[%s6 + $0x158] sm:$0xff]
      %v1100 = vld [vmem:[%s6 + $0x160] sm:$0xff]
      %v1101 = vld [vmem:[%s6 + $0x168] sm:$0xff]
      %v1102 = vld [vmem:[%s6 + $0x170] sm:$0xff]
      %v1103 = vld [vmem:[%s6 + $0x178] sm:$0xff]
      %1104 = vmatprep.subr.mxu0 0.0
      %1105 = vmatpush1.msra.mxu0 %v1056
      %1106 = vmatprep.subr.mxu0 0.0
      %1107 = vmatpush1.msra.mxu0 %v1057
      %1108 = vmatprep.subr.mxu0 0.0
      %1109 = vmatpush1.msra.mxu0 %v1058
      %1110 = vmatprep.subr.mxu0 0.0
      %1111 = vmatpush1.msra.mxu0 %v1059
      %1112 = vmatprep.subr.mxu0 0.0
      %1113 = vmatpush1.msra.mxu0 %v1060
      %1114 = vmatprep.subr.mxu0 0.0
      %1115 = vmatpush1.msra.mxu0 %v1061
      %1116 = vmatprep.subr.mxu0 0.0
      %1117 = vmatpush1.msra.mxu0 %v1062
      %1118 = vmatprep.subr.mxu0 0.0
      %1119 = vmatpush1.msra.mxu0 %v1063
      %1120 = vmatprep.subr.mxu0 0.0
      %1121 = vmatpush1.msra.mxu0 %v1064
      %1122 = vmatprep.subr.mxu0 0.0
      %1123 = vmatpush1.msra.mxu0 %v1065
      %1124 = vmatprep.subr.mxu0 0.0
      %1125 = vmatpush1.msra.mxu0 %v1066
      %1126 = vmatprep.subr.mxu0 0.0
      %1127 = vmatpush1.msra.mxu0 %v1067
      %1128 = vmatprep.subr.mxu0 0.0
      %1129 = vmatpush1.msra.mxu0 %v1068
      %1130 = vmatprep.subr.mxu0 0.0
      %1131 = vmatpush1.msra.mxu0 %v1069
      %1132 = vmatprep.subr.mxu0 0.0
      %1133 = vmatpush1.msra.mxu0 %v1070
      %1134 = vmatprep.subr.mxu0 0.0
      %1135 = vmatpush1.msra.mxu0 %v1071
      %1136 = vmatprep.subr.mxu0 0.0
      %1137 = vmatpush1.msra.mxu0 %v1072
      %1138 = vmatprep.subr.mxu0 0.0
      %1139 = vmatpush1.msra.mxu0 %v1073
      %1140 = vmatprep.subr.mxu0 0.0
      %1141 = vmatpush1.msra.mxu0 %v1074
      %1142 = vmatprep.subr.mxu0 0.0
      %1143 = vmatpush1.msra.mxu0 %v1075
      %1144 = vmatprep.subr.mxu0 0.0
      %1145 = vmatpush1.msra.mxu0 %v1076
      %1146 = vmatprep.subr.mxu0 0.0
      %1147 = vmatpush1.msra.mxu0 %v1077
      %1148 = vmatprep.subr.mxu0 0.0
      %1149 = vmatpush1.msra.mxu0 %v1078
      %1150 = vmatprep.subr.mxu0 0.0
      %1151 = vmatpush1.msra.mxu0 %v1079
      %1152 = vmatprep.subr.mxu0 0.0
      %1153 = vmatpush1.msra.mxu0 %v1080
      %1154 = vmatprep.subr.mxu0 0.0
      %1155 = vmatpush1.msra.mxu0 %v1081
      %1156 = vmatprep.subr.mxu0 0.0
      %1157 = vmatpush1.msra.mxu0 %v1082
      %1158 = vmatprep.subr.mxu0 0.0
      %1159 = vmatpush1.msra.mxu0 %v1083
      %1160 = vmatprep.subr.mxu0 0.0
      %1161 = vmatpush1.msra.mxu0 %v1084
      %1162 = vmatprep.subr.mxu0 0.0
      %1163 = vmatpush1.msra.mxu0 %v1085
      %1164 = vmatprep.subr.mxu0 0.0
      %1165 = vmatpush1.msra.mxu0 %v1086
      %1166 = vmatprep.subr.mxu0 0.0
      %1167 = vmatpush1.msra.mxu0 %v1087
      %1168 = vmatprep.mubr.f32.mxu0 %v853
      %1169 = vmatmul.mubr.f32.gmra.mrb[0].mxu0 %v852
      %v1170 = vpop.f32.mrb[0].mxu0
      %v1171 = vadd.f32 0.0, %v1170
      %v1172 = vpop.f32.mrb[0].mxu0
      %1173 = vmatprep.mubr.f32.mxu0 %v856
      %1174 = vmatmul.mubr.f32.gmra.mrb[0].mxu0 %v855
      %v1175 = vpop.f32.mrb[0].mxu0
      %v1176 = vadd.f32 0.0, %v1175
      %v1177 = vpop.f32.mrb[0].mxu0
      %1178 = vdwg.mxu0
      %1179 = vmatprep.subr.mxu0 0.0
      %1180 = vmatpush1.msra.mxu0 %v1088
      %1181 = vmatprep.subr.mxu0 0.0
      %1182 = vmatpush1.msra.mxu0 %v1089
      %1183 = vmatprep.subr.mxu0 0.0
      %1184 = vmatpush1.msra.mxu0 %v1090
      %1185 = vmatprep.subr.mxu0 0.0
      %1186 = vmatpush1.msra.mxu0 %v1091
      %1187 = vmatprep.subr.mxu0 0.0
      %1188 = vmatpush1.msra.mxu0 %v1092
      %1189 = vmatprep.subr.mxu0 0.0
      %1190 = vmatpush1.msra.mxu0 %v1093
      %1191 = vmatprep.subr.mxu0 0.0
      %1192 = vmatpush1.msra.mxu0 %v1094
      %1193 = vmatprep.subr.mxu0 0.0
      %1194 = vmatpush1.msra.mxu0 %v1095
      %1195 = vmatprep.subr.mxu0 0.0
      %1196 = vmatpush1.msra.mxu0 %v1096
      %1197 = vmatprep.subr.mxu0 0.0
      %1198 = vmatpush1.msra.mxu0 %v1097
      %1199 = vmatprep.subr.mxu0 0.0
      %1200 = vmatpush1.msra.mxu0 %v1098
      %1201 = vmatprep.subr.mxu0 0.0
      %1202 = vmatpush1.msra.mxu0 %v1099
      %1203 = vmatprep.subr.mxu0 0.0
      %1204 = vmatpush1.msra.mxu0 %v1100
      %1205 = vmatprep.subr.mxu0 0.0
      %1206 = vmatpush1.msra.mxu0 %v1101
      %1207 = vmatprep.subr.mxu0 0.0
      %1208 = vmatpush1.msra.mxu0 %v1102
      %1209 = vmatprep.subr.mxu0 0.0
      %1210 = vmatpush1.msra.mxu0 %v1103
      %1211 = vmatprep.subr.mxu0 0.0
      %1212 = vmatpush1.msra.mxu0 0.0
      %1213 = vmatprep.subr.mxu0 0.0
      %1214 = vmatpush1.msra.mxu0 0.0
      %1215 = vmatprep.subr.mxu0 0.0
      %1216 = vmatpush1.msra.mxu0 0.0
      %1217 = vmatprep.subr.mxu0 0.0
      %1218 = vmatpush1.msra.mxu0 0.0
      %1219 = vmatprep.subr.mxu0 0.0
      %1220 = vmatpush1.msra.mxu0 0.0
      %1221 = vmatprep.subr.mxu0 0.0
      %1222 = vmatpush1.msra.mxu0 0.0
      %1223 = vmatprep.subr.mxu0 0.0
      %1224 = vmatpush1.msra.mxu0 0.0
      %1225 = vmatprep.subr.mxu0 0.0
      %1226 = vmatpush1.msra.mxu0 0.0
      %1227 = vmatprep.subr.mxu0 0.0
      %1228 = vmatpush1.msra.mxu0 0.0
      %1229 = vmatprep.subr.mxu0 0.0
      %1230 = vmatpush1.msra.mxu0 0.0
      %1231 = vmatprep.subr.mxu0 0.0
      %1232 = vmatpush1.msra.mxu0 0.0
      %1233 = vmatprep.subr.mxu0 0.0
      %1234 = vmatpush1.msra.mxu0 0.0
      %1235 = vmatprep.subr.mxu0 0.0
      %1236 = vmatpush1.msra.mxu0 0.0
      %1237 = vmatprep.subr.mxu0 0.0
      %1238 = vmatpush1.msra.mxu0 0.0
      %1239 = vmatprep.subr.mxu0 0.0
      %1240 = vmatpush1.msra.mxu0 0.0
      %1241 = vmatprep.subr.mxu0 0.0
      %1242 = vmatpush1.msra.mxu0 0.0
      %1243 = vmatprep.mubr.f32.mxu0 0.0
      %1244 = vmatmul.mubr.f32.gmra.mrb[0].mxu0 %v854
      %v1245 = vpop.f32.mrb[0].mxu0
      %v1246 = vadd.f32 %v1171, %v1245
      %v1247 = vpop.f32.mrb[0].mxu0
      %1248 = vmatprep.mubr.f32.mxu0 0.0
      %1249 = vmatmul.mubr.f32.gmra.mrb[0].mxu0 %v857
      %v1250 = vpop.f32.mrb[0].mxu0
      %v1251 = vadd.f32 %v1176, %v1250
      %v1252 = vpop.f32.mrb[0].mxu0
      %1253 = vdwg.mxu0
      %v1254 = vlaneseq
      %v1255 = vshrl.u32 %v1254, 7
      %v1256 = vadd.s32 %v1255, 8
      %vm1257 = vcmp.lt.s32.totalorder %v1255, 4
      %vm1258 = vcmp.lt.s32.totalorder %v1256, 4
      %v1259 = vsel %vm1257, 1, 0
      %v1260 = vsel %vm1258, 1, 0
      %v1261 = vcvt.s32.f32 %v1259
      %v1262 = vcvt.s32.f32 %v1260
      %vm1265 = vcmask 1040384
      %v1266 = vrot.slane %v1048, 7
      %v1267 = vrot.slane %v1053, 7
      %v1268 = vsel %vm1265, %v1266, %v1267
      %v1271 = vsel %vm1265, 0.0, %v1266
      %vm1272 = vcmask 1046528
      %v1273 = vrot.slane %v1048, 1
      %v1274 = vrot.slane %v1053, 1
      %v1275 = vsel %vm1272, %v1273, %v1274
      %v1277 = vsel %vm1272, %v1274, 0.0
      %1278 = vrot.lane.b32.xlu0 %v1048, 16
      %v1279 = vpop.permute.xlu0 %1278
      %1280 = vrot.lane.b32.xlu0 %v1053, 16
      %v1281 = vpop.permute.xlu0 %1280
      %1285 = vrot.lane.b32.xlu0 %v1275, 32
      %v1286 = vpop.permute.xlu0 %1285
      %1287 = vrot.lane.b32.xlu0 %v1277, 32
      %v1288 = vpop.permute.xlu0 %1287
      %v1291 = vsel %vm742, %v1271, %v1279
      %v1292 = vsel %vm742, %v1268, %v1281
      %vm1293 = vcmask 261120
      %v1294 = vsel %vm1293, %v1291, %v1286
      %v1295 = vsel %vm1293, %v1292, %v1288
      %v1296 = vld [vmem:[%s7] sm:$0xff]
      %v1297 = vld [vmem:[%s7 + $0x8] sm:$0xff]
      %v1298 = vld [vmem:[%s7 + $0x10] sm:$0xff]
      %v1299 = vld [vmem:[%s7 + $0x18] sm:$0xff]
      %v1300 = vld [vmem:[%s7 + $0x20] sm:$0xff]
      %v1301 = vld [vmem:[%s7 + $0x28] sm:$0xff]
      %v1302 = vld [vmem:[%s8] sm:$0x1]
      %v1304 = vlaneseq
      %v1305 = vshrl.u32 %v1304, 7
      %v1306 = vsub.s32 0, %v1305
      %v1307 = vrot.slane %v1302, %v1306
      %vm1309 = vcmask 392192
      %v1311 = vsel %vm1309, %v1294, 0
      %v1314 = vsel %vm1309, %v1295, 0
      %1316 = vmatprep.subr.mxu0 0.0
      %1317 = vmatpush1.msra.mxu0 %v1296
      %1318 = vmatprep.subr.mxu0 0.0
      %1319 = vmatpush1.msra.mxu0 %v1297
      %1320 = vmatprep.subr.mxu0 0.0
      %1321 = vmatpush1.msra.mxu0 %v1298
      %1322 = vmatprep.subr.mxu0 0.0
      %1323 = vmatpush1.msra.mxu0 %v1299
      %1324 = vmatprep.subr.mxu0 0.0
      %1325 = vmatpush1.msra.mxu0 %v1300
      %1326 = vmatprep.subr.mxu0 0.0
      %1327 = vmatpush1.msra.mxu0 %v1301
      %1328 = vmatprep.subr.mxu0 0.0
      %1329 = vmatpush1.msra.mxu0 0.0
      %1330 = vmatprep.subr.mxu0 0.0
      %1331 = vmatpush1.msra.mxu0 0.0
      %1332 = vmatprep.subr.mxu0 0.0
      %1333 = vmatpush1.msra.mxu0 0.0
      %1334 = vmatprep.subr.mxu0 0.0
      %1335 = vmatpush1.msra.mxu0 0.0
      %1336 = vmatprep.subr.mxu0 0.0
      %1337 = vmatpush1.msra.mxu0 0.0
      %1338 = vmatprep.subr.mxu0 0.0
      %1339 = vmatpush1.msra.mxu0 0.0
      %1340 = vmatprep.subr.mxu0 0.0
      %1341 = vmatpush1.msra.mxu0 0.0
      %1342 = vmatprep.subr.mxu0 0.0
      %1343 = vmatpush1.msra.mxu0 0.0
      %1344 = vmatprep.subr.mxu0 0.0
      %1345 = vmatpush1.msra.mxu0 0.0
      %1346 = vmatprep.subr.mxu0 0.0
      %1347 = vmatpush1.msra.mxu0 0.0
      %1348 = vmatprep.subr.mxu0 0.0
      %1349 = vmatpush1.msra.mxu0 0.0
      %1350 = vmatprep.subr.mxu0 0.0
      %1351 = vmatpush1.msra.mxu0 0.0
      %1352 = vmatprep.subr.mxu0 0.0
      %1353 = vmatpush1.msra.mxu0 0.0
      %1354 = vmatprep.subr.mxu0 0.0
      %1355 = vmatpush1.msra.mxu0 0.0
      %1356 = vmatprep.subr.mxu0 0.0
      %1357 = vmatpush1.msra.mxu0 0.0
      %1358 = vmatprep.subr.mxu0 0.0
      %1359 = vmatpush1.msra.mxu0 0.0
      %1360 = vmatprep.subr.mxu0 0.0
      %1361 = vmatpush1.msra.mxu0 0.0
      %1362 = vmatprep.subr.mxu0 0.0
      %1363 = vmatpush1.msra.mxu0 0.0
      %1364 = vmatprep.subr.mxu0 0.0
      %1365 = vmatpush1.msra.mxu0 0.0
      %1366 = vmatprep.subr.mxu0 0.0
      %1367 = vmatpush1.msra.mxu0 0.0
      %1368 = vmatprep.subr.mxu0 0.0
      %1369 = vmatpush1.msra.mxu0 0.0
      %1370 = vmatprep.subr.mxu0 0.0
      %1371 = vmatpush1.msra.mxu0 0.0
      %1372 = vmatprep.subr.mxu0 0.0
      %1373 = vmatpush1.msra.mxu0 0.0
      %1374 = vmatprep.subr.mxu0 0.0
      %1375 = vmatpush1.msra.mxu0 0.0
      %1376 = vmatprep.subr.mxu0 0.0
      %1377 = vmatpush1.msra.mxu0 0.0
      %1378 = vmatprep.subr.mxu0 0.0
      %1379 = vmatpush1.msra.mxu0 0.0
      %1380 = vmatprep.mubr.f32.mxu0 0.0
      %1381 = vmatmul.mubr.f32.gmra.mrb[0].mxu0 %v1311
      %v1382 = vpop.f32.mrb[0].mxu0
      %v1383 = vadd.f32 %v1307, %v1382
      %v1384 = vpop.f32.mrb[0].mxu0
      %1385 = vmatprep.mubr.f32.mxu0 0.0
      %1386 = vmatmul.mubr.f32.gmra.mrb[0].mxu0 %v1314
      %v1387 = vpop.f32.mrb[0].mxu0
      %v1388 = vadd.f32 %v1307, %v1387
      %v1389 = vpop.f32.mrb[0].mxu0
      %1390 = vdwg.mxu0
      %v1391 = vmax.f32 %v1383, 0.0
      %v1392 = vmax.f32 %v1388, 0.0
      %v1393 = vmul.f32 %v1391, %v1261
      %v1394 = vmul.f32 %v1392, %v1262
      %v1397 = vrot.slane %v1393, 7
      %v1398 = vrot.slane %v1394, 7
      %v1399 = vsel %vm1265, %v1397, %v1398
      %v1402 = vsel %vm1265, 0.0, %v1397
      %v1403 = vrot.slane %v1393, 1
      %v1404 = vrot.slane %v1394, 1
      %v1405 = vsel %vm1272, %v1403, %v1404
      %v1407 = vsel %vm1272, %v1404, 0.0
      %1408 = vrot.lane.b32.xlu0 %v1393, 16
      %v1409 = vpop.permute.xlu0 %1408
      %1410 = vrot.lane.b32.xlu0 %v1394, 16
      %v1411 = vpop.permute.xlu0 %1410
      %1415 = vrot.lane.b32.xlu0 %v1405, 32
      %v1416 = vpop.permute.xlu0 %1415
      %1417 = vrot.lane.b32.xlu0 %v1407, 32
      %v1418 = vpop.permute.xlu0 %1417
      %v1421 = vsel %vm742, %v1402, %v1409
      %v1422 = vsel %vm742, %v1399, %v1411
      %v1423 = vsel %vm1293, %v1421, %v1416
      %v1424 = vsel %vm1293, %v1422, %v1418
      %v1425 = vld [vmem:[%s9] sm:$0xff]
      %v1426 = vld [vmem:[%s9 + $0x8] sm:$0xff]
      %v1427 = vld [vmem:[%s9 + $0x10] sm:$0xff]
      %v1428 = vld [vmem:[%s9 + $0x18] sm:$0xff]
      %v1429 = vld [vmem:[%s9 + $0x20] sm:$0xff]
      %v1430 = vld [vmem:[%s9 + $0x28] sm:$0xff]
      %v1431 = vld [vmem:[%s10] sm:$0x1]
      %v1433 = vlaneseq
      %v1434 = vshrl.u32 %v1433, 7
      %v1435 = vsub.s32 0, %v1434
      %v1436 = vrot.slane %v1431, %v1435
      %v1439 = vsel %vm1309, %v1423, 0
      %v1442 = vsel %vm1309, %v1424, 0
      %1444 = vmatprep.subr.mxu0 0.0
      %1445 = vmatpush1.msra.mxu0 %v1425
      %1446 = vmatprep.subr.mxu0 0.0
      %1447 = vmatpush1.msra.mxu0 %v1426
      %1448 = vmatprep.subr.mxu0 0.0
      %1449 = vmatpush1.msra.mxu0 %v1427
      %1450 = vmatprep.subr.mxu0 0.0
      %1451 = vmatpush1.msra.mxu0 %v1428
      %1452 = vmatprep.subr.mxu0 0.0
      %1453 = vmatpush1.msra.mxu0 %v1429
      %1454 = vmatprep.subr.mxu0 0.0
      %1455 = vmatpush1.msra.mxu0 %v1430
      %1456 = vmatprep.subr.mxu0 0.0
      %1457 = vmatpush1.msra.mxu0 0.0
      %1458 = vmatprep.subr.mxu0 0.0
      %1459 = vmatpush1.msra.mxu0 0.0
      %1460 = vmatprep.subr.mxu0 0.0
      %1461 = vmatpush1.msra.mxu0 0.0
      %1462 = vmatprep.subr.mxu0 0.0
      %1463 = vmatpush1.msra.mxu0 0.0
      %1464 = vmatprep.subr.mxu0 0.0
      %1465 = vmatpush1.msra.mxu0 0.0
      %1466 = vmatprep.subr.mxu0 0.0
      %1467 = vmatpush1.msra.mxu0 0.0
      %1468 = vmatprep.subr.mxu0 0.0
      %1469 = vmatpush1.msra.mxu0 0.0
      %1470 = vmatprep.subr.mxu0 0.0
      %1471 = vmatpush1.msra.mxu0 0.0
      %1472 = vmatprep.subr.mxu0 0.0
      %1473 = vmatpush1.msra.mxu0 0.0
      %1474 = vmatprep.subr.mxu0 0.0
      %1475 = vmatpush1.msra.mxu0 0.0
      %1476 = vmatprep.subr.mxu0 0.0
      %1477 = vmatpush1.msra.mxu0 0.0
      %1478 = vmatprep.subr.mxu0 0.0
      %1479 = vmatpush1.msra.mxu0 0.0
      %1480 = vmatprep.subr.mxu0 0.0
      %1481 = vmatpush1.msra.mxu0 0.0
      %1482 = vmatprep.subr.mxu0 0.0
      %1483 = vmatpush1.msra.mxu0 0.0
      %1484 = vmatprep.subr.mxu0 0.0
      %1485 = vmatpush1.msra.mxu0 0.0
      %1486 = vmatprep.subr.mxu0 0.0
      %1487 = vmatpush1.msra.mxu0 0.0
      %1488 = vmatprep.subr.mxu0 0.0
      %1489 = vmatpush1.msra.mxu0 0.0
      %1490 = vmatprep.subr.mxu0 0.0
      %1491 = vmatpush1.msra.mxu0 0.0
      %1492 = vmatprep.subr.mxu0 0.0
      %1493 = vmatpush1.msra.mxu0 0.0
      %1494 = vmatprep.subr.mxu0 0.0
      %1495 = vmatpush1.msra.mxu0 0.0
      %1496 = vmatprep.subr.mxu0 0.0
      %1497 = vmatpush1.msra.mxu0 0.0
      %1498 = vmatprep.subr.mxu0 0.0
      %1499 = vmatpush1.msra.mxu0 0.0
      %1500 = vmatprep.subr.mxu0 0.0
      %1501 = vmatpush1.msra.mxu0 0.0
      %1502 = vmatprep.subr.mxu0 0.0
      %1503 = vmatpush1.msra.mxu0 0.0
      %1504 = vmatprep.subr.mxu0 0.0
      %1505 = vmatpush1.msra.mxu0 0.0
      %1506 = vmatprep.subr.mxu0 0.0
      %1507 = vmatpush1.msra.mxu0 0.0
      %1508 = vmatprep.mubr.f32.mxu0 0.0
      %1509 = vmatmul.mubr.f32.gmra.mrb[0].mxu0 %v1439
      %v1510 = vpop.f32.mrb[0].mxu0
      %v1511 = vadd.f32 %v1436, %v1510
      %v1512 = vpop.f32.mrb[0].mxu0
      %1513 = vmatprep.mubr.f32.mxu0 0.0
      %1514 = vmatmul.mubr.f32.gmra.mrb[0].mxu0 %v1442
      %v1515 = vpop.f32.mrb[0].mxu0
      %v1516 = vadd.f32 %v1436, %v1515
      %v1517 = vpop.f32.mrb[0].mxu0
      %1518 = vdwg.mxu0
      %v1521 = vrot.slane %v1246, 7
      %v1522 = vrot.slane %v1251, 7
      %v1523 = vsel %vm1265, %v1521, %v1522
      %v1526 = vsel %vm1265, 0.0, %v1521
      %v1527 = vrot.slane %v1246, 1
      %v1528 = vrot.slane %v1251, 1
      %v1529 = vsel %vm1272, %v1527, %v1528
      %v1531 = vsel %vm1272, %v1528, 0.0
      %1532 = vrot.lane.b32.xlu0 %v1246, 16
      %v1533 = vpop.permute.xlu0 %1532
      %1534 = vrot.lane.b32.xlu0 %v1251, 16
      %v1535 = vpop.permute.xlu0 %1534
      %1539 = vrot.lane.b32.xlu0 %v1529, 32
      %v1540 = vpop.permute.xlu0 %1539
      %1541 = vrot.lane.b32.xlu0 %v1531, 32
      %v1542 = vpop.permute.xlu0 %1541
      %v1545 = vsel %vm742, %v1526, %v1533
      %v1546 = vsel %vm742, %v1523, %v1535
      %v1547 = vsel %vm1293, %v1545, %v1540
      %v1548 = vsel %vm1293, %v1546, %v1542
      %v1549 = vld [vmem:[%s11] sm:$0xff]
      %v1550 = vld [vmem:[%s11 + $0x8] sm:$0xff]
      %v1551 = vld [vmem:[%s11 + $0x10] sm:$0xff]
      %v1552 = vld [vmem:[%s11 + $0x18] sm:$0xff]
      %v1553 = vld [vmem:[%s11 + $0x20] sm:$0xff]
      %v1554 = vld [vmem:[%s11 + $0x28] sm:$0xff]
      %v1555 = vld [vmem:[%s12] sm:$0x1]
      %v1557 = vlaneseq
      %v1558 = vshrl.u32 %v1557, 7
      %v1559 = vsub.s32 0, %v1558
      %v1560 = vrot.slane %v1555, %v1559
      %v1563 = vsel %vm1309, %v1547, 0
      %v1566 = vsel %vm1309, %v1548, 0
      %1568 = vmatprep.subr.mxu0 0.0
      %1569 = vmatpush1.msra.mxu0 %v1549
      %1570 = vmatprep.subr.mxu0 0.0
      %1571 = vmatpush1.msra.mxu0 %v1550
      %1572 = vmatprep.subr.mxu0 0.0
      %1573 = vmatpush1.msra.mxu0 %v1551
      %1574 = vmatprep.subr.mxu0 0.0
      %1575 = vmatpush1.msra.mxu0 %v1552
      %1576 = vmatprep.subr.mxu0 0.0
      %1577 = vmatpush1.msra.mxu0 %v1553
      %1578 = vmatprep.subr.mxu0 0.0
      %1579 = vmatpush1.msra.mxu0 %v1554
      %1580 = vmatprep.subr.mxu0 0.0
      %1581 = vmatpush1.msra.mxu0 0.0
      %1582 = vmatprep.subr.mxu0 0.0
      %1583 = vmatpush1.msra.mxu0 0.0
      %1584 = vmatprep.subr.mxu0 0.0
      %1585 = vmatpush1.msra.mxu0 0.0
      %1586 = vmatprep.subr.mxu0 0.0
      %1587 = vmatpush1.msra.mxu0 0.0
      %1588 = vmatprep.subr.mxu0 0.0
      %1589 = vmatpush1.msra.mxu0 0.0
      %1590 = vmatprep.subr.mxu0 0.0
      %1591 = vmatpush1.msra.mxu0 0.0
      %1592 = vmatprep.subr.mxu0 0.0
      %1593 = vmatpush1.msra.mxu0 0.0
      %1594 = vmatprep.subr.mxu0 0.0
      %1595 = vmatpush1.msra.mxu0 0.0
      %1596 = vmatprep.subr.mxu0 0.0
      %1597 = vmatpush1.msra.mxu0 0.0
      %1598 = vmatprep.subr.mxu0 0.0
      %1599 = vmatpush1.msra.mxu0 0.0
      %1600 = vmatprep.subr.mxu0 0.0
      %1601 = vmatpush1.msra.mxu0 0.0
      %1602 = vmatprep.subr.mxu0 0.0
      %1603 = vmatpush1.msra.mxu0 0.0
      %1604 = vmatprep.subr.mxu0 0.0
      %1605 = vmatpush1.msra.mxu0 0.0
      %1606 = vmatprep.subr.mxu0 0.0
      %1607 = vmatpush1.msra.mxu0 0.0
      %1608 = vmatprep.subr.mxu0 0.0
      %1609 = vmatpush1.msra.mxu0 0.0
      %1610 = vmatprep.subr.mxu0 0.0
      %1611 = vmatpush1.msra.mxu0 0.0
      %1612 = vmatprep.subr.mxu0 0.0
      %1613 = vmatpush1.msra.mxu0 0.0
      %1614 = vmatprep.subr.mxu0 0.0
      %1615 = vmatpush1.msra.mxu0 0.0
      %1616 = vmatprep.subr.mxu0 0.0
      %1617 = vmatpush1.msra.mxu0 0.0
      %1618 = vmatprep.subr.mxu0 0.0
      %1619 = vmatpush1.msra.mxu0 0.0
      %1620 = vmatprep.subr.mxu0 0.0
      %1621 = vmatpush1.msra.mxu0 0.0
      %1622 = vmatprep.subr.mxu0 0.0
      %1623 = vmatpush1.msra.mxu0 0.0
      %1624 = vmatprep.subr.mxu0 0.0
      %1625 = vmatpush1.msra.mxu0 0.0
      %1626 = vmatprep.subr.mxu0 0.0
      %1627 = vmatpush1.msra.mxu0 0.0
      %1628 = vmatprep.subr.mxu0 0.0
      %1629 = vmatpush1.msra.mxu0 0.0
      %1630 = vmatprep.subr.mxu0 0.0
      %1631 = vmatpush1.msra.mxu0 0.0
      %1632 = vmatprep.mubr.f32.mxu0 0.0
      %1633 = vmatmul.mubr.f32.gmra.mrb[0].mxu0 %v1563
      %v1634 = vpop.f32.mrb[0].mxu0
      %v1635 = vadd.f32 %v1560, %v1634
      %v1636 = vpop.f32.mrb[0].mxu0
      %1637 = vmatprep.mubr.f32.mxu0 0.0
      %1638 = vmatmul.mubr.f32.gmra.mrb[0].mxu0 %v1566
      %v1639 = vpop.f32.mrb[0].mxu0
      %v1640 = vadd.f32 %v1560, %v1639
      %v1641 = vpop.f32.mrb[0].mxu0
      %1642 = vdwg.mxu0
      %v1643 = vmax.f32 %v1635, 0.0
      %v1644 = vmax.f32 %v1640, 0.0
      %v1645 = vmul.f32 %v1643, %v1261
      %v1646 = vmul.f32 %v1644, %v1262
      %v1649 = vrot.slane %v1645, 7
      %v1650 = vrot.slane %v1646, 7
      %v1651 = vsel %vm1265, %v1649, %v1650
      %v1654 = vsel %vm1265, 0.0, %v1649
      %v1655 = vrot.slane %v1645, 1
      %v1656 = vrot.slane %v1646, 1
      %v1657 = vsel %vm1272, %v1655, %v1656
      %v1659 = vsel %vm1272, %v1656, 0.0
      %1660 = vrot.lane.b32.xlu0 %v1645, 16
      %v1661 = vpop.permute.xlu0 %1660
      %1662 = vrot.lane.b32.xlu0 %v1646, 16
      %v1663 = vpop.permute.xlu0 %1662
      %1667 = vrot.lane.b32.xlu0 %v1657, 32
      %v1668 = vpop.permute.xlu0 %1667
      %1669 = vrot.lane.b32.xlu0 %v1659, 32
      %v1670 = vpop.permute.xlu0 %1669
      %v1673 = vsel %vm742, %v1654, %v1661
      %v1674 = vsel %vm742, %v1651, %v1663
      %v1675 = vsel %vm1293, %v1673, %v1668
      %v1676 = vsel %vm1293, %v1674, %v1670
      %v1677 = vld [vmem:[%s13] sm:$0xff]
      %v1678 = vld [vmem:[%s13 + $0x8] sm:$0xff]
      %v1679 = vld [vmem:[%s13 + $0x10] sm:$0xff]
      %v1680 = vld [vmem:[%s13 + $0x18] sm:$0xff]
      %v1681 = vld [vmem:[%s13 + $0x20] sm:$0xff]
      %v1682 = vld [vmem:[%s13 + $0x28] sm:$0xff]
      %v1683 = vld [vmem:[%s14] sm:$0x1]
      %v1685 = vlaneseq
      %v1686 = vshrl.u32 %v1685, 7
      %v1687 = vsub.s32 0, %v1686
      %v1688 = vrot.slane %v1683, %v1687
      %v1691 = vsel %vm1309, %v1675, 0
      %v1694 = vsel %vm1309, %v1676, 0
      %1696 = vmatprep.subr.mxu0 0.0
      %1697 = vmatpush1.msra.mxu0 %v1677
      %1698 = vmatprep.subr.mxu0 0.0
      %1699 = vmatpush1.msra.mxu0 %v1678
      %1700 = vmatprep.subr.mxu0 0.0
      %1701 = vmatpush1.msra.mxu0 %v1679
      %1702 = vmatprep.subr.mxu0 0.0
      %1703 = vmatpush1.msra.mxu0 %v1680
      %1704 = vmatprep.subr.mxu0 0.0
      %1705 = vmatpush1.msra.mxu0 %v1681
      %1706 = vmatprep.subr.mxu0 0.0
      %1707 = vmatpush1.msra.mxu0 %v1682
      %1708 = vmatprep.subr.mxu0 0.0
      %1709 = vmatpush1.msra.mxu0 0.0
      %1710 = vmatprep.subr.mxu0 0.0
      %1711 = vmatpush1.msra.mxu0 0.0
      %1712 = vmatprep.subr.mxu0 0.0
      %1713 = vmatpush1.msra.mxu0 0.0
      %1714 = vmatprep.subr.mxu0 0.0
      %1715 = vmatpush1.msra.mxu0 0.0
      %1716 = vmatprep.subr.mxu0 0.0
      %1717 = vmatpush1.msra.mxu0 0.0
      %1718 = vmatprep.subr.mxu0 0.0
      %1719 = vmatpush1.msra.mxu0 0.0
      %1720 = vmatprep.subr.mxu0 0.0
      %1721 = vmatpush1.msra.mxu0 0.0
      %1722 = vmatprep.subr.mxu0 0.0
      %1723 = vmatpush1.msra.mxu0 0.0
      %1724 = vmatprep.subr.mxu0 0.0
      %1725 = vmatpush1.msra.mxu0 0.0
      %1726 = vmatprep.subr.mxu0 0.0
      %1727 = vmatpush1.msra.mxu0 0.0
      %1728 = vmatprep.subr.mxu0 0.0
      %1729 = vmatpush1.msra.mxu0 0.0
      %1730 = vmatprep.subr.mxu0 0.0
      %1731 = vmatpush1.msra.mxu0 0.0
      %1732 = vmatprep.subr.mxu0 0.0
      %1733 = vmatpush1.msra.mxu0 0.0
      %1734 = vmatprep.subr.mxu0 0.0
      %1735 = vmatpush1.msra.mxu0 0.0
      %1736 = vmatprep.subr.mxu0 0.0
      %1737 = vmatpush1.msra.mxu0 0.0
      %1738 = vmatprep.subr.mxu0 0.0
      %1739 = vmatpush1.msra.mxu0 0.0
      %1740 = vmatprep.subr.mxu0 0.0
      %1741 = vmatpush1.msra.mxu0 0.0
      %1742 = vmatprep.subr.mxu0 0.0
      %1743 = vmatpush1.msra.mxu0 0.0
      %1744 = vmatprep.subr.mxu0 0.0
      %1745 = vmatpush1.msra.mxu0 0.0
      %1746 = vmatprep.subr.mxu0 0.0
      %1747 = vmatpush1.msra.mxu0 0.0
      %1748 = vmatprep.subr.mxu0 0.0
      %1749 = vmatpush1.msra.mxu0 0.0
      %1750 = vmatprep.subr.mxu0 0.0
      %1751 = vmatpush1.msra.mxu0 0.0
      %1752 = vmatprep.subr.mxu0 0.0
      %1753 = vmatpush1.msra.mxu0 0.0
      %1754 = vmatprep.subr.mxu0 0.0
      %1755 = vmatpush1.msra.mxu0 0.0
      %1756 = vmatprep.subr.mxu0 0.0
      %1757 = vmatpush1.msra.mxu0 0.0
      %1758 = vmatprep.subr.mxu0 0.0
      %1759 = vmatpush1.msra.mxu0 0.0
      %1760 = vmatprep.mubr.f32.mxu0 0.0
      %1761 = vmatmul.mubr.f32.gmra.mrb[0].mxu0 %v1691
      %v1762 = vpop.f32.mrb[0].mxu0
      %v1763 = vadd.f32 %v1688, %v1762
      %v1764 = vpop.f32.mrb[0].mxu0
      %1765 = vmatprep.mubr.f32.mxu0 0.0
      %1766 = vmatmul.mubr.f32.gmra.mrb[0].mxu0 %v1694
      %v1767 = vpop.f32.mrb[0].mxu0
      %v1768 = vadd.f32 %v1688, %v1767
      %v1769 = vpop.f32.mrb[0].mxu0
      %1770 = vdwg.mxu0
      %v1771 = vpack.c.bf16 %v855, %v852
      %v1772 = vpack.c.bf16 %v856, %v853
      %v1773 = vpack.c.bf16 %v857, %v854
      %1775 = vrot.lane.b32.xlu0 %v1773, 19
      %v1776 = vpop.permute.xlu0 %1775
      %1779 = vrot.lane.b32.xlu0 %v1771, 19
      %v1780 = vpop.permute.xlu0 %1779
      %1781 = vrot.lane.b32.xlu0 %v1772, 19
      %v1782 = vpop.permute.xlu0 %1781
      %v1783 = vsel %vm540, %v1780, %v1782
      %v1784 = vsel %vm540, %v1782, %v1776
      %v1789 = vsel %vm545, %v1776, %v1780
      %1791 = vst [vmem:[#allocation3] sm:$0xff] %v1789
      %1792 = vst [vmem:[#allocation3 + $0x8] sm:$0xff] %v1783
      %1793 = vst [vmem:[#allocation3 + $0x10] sm:$0xff] %v1784
      %1794 = vrot.lane.b32.xlu0 %v1773, 18
      %v1795 = vpop.permute.xlu0 %1794
      %1796 = vrot.lane.b32.xlu0 %v1771, 18
      %v1797 = vpop.permute.xlu0 %1796
      %1798 = vrot.lane.b32.xlu0 %v1772, 18
      %v1799 = vpop.permute.xlu0 %1798
      %v1800 = vsel %vm559, %v1797, %v1799
      %v1801 = vsel %vm559, %v1799, %v1795
      %v1806 = vsel %vm564, %v1795, %v1797
      %1808 = vst [vmem:[#allocation3 + $0x18] sm:$0xff] %v1806
      %1809 = vst [vmem:[#allocation3 + $0x20] sm:$0xff] %v1800
      %1810 = vst [vmem:[#allocation3 + $0x28] sm:$0xff] %v1801
      %1811 = vrot.lane.b32.xlu0 %v1773, 17
      %v1812 = vpop.permute.xlu0 %1811
      %1813 = vrot.lane.b32.xlu0 %v1771, 17
      %v1814 = vpop.permute.xlu0 %1813
      %1815 = vrot.lane.b32.xlu0 %v1772, 17
      %v1816 = vpop.permute.xlu0 %1815
      %v1817 = vsel %vm578, %v1814, %v1816
      %v1818 = vsel %vm578, %v1816, %v1812
      %v1823 = vsel %vm583, %v1812, %v1814
      %1825 = vst [vmem:[#allocation3 + $0x30] sm:$0xff] %v1823
      %1826 = vst [vmem:[#allocation3 + $0x38] sm:$0xff] %v1817
      %1827 = vst [vmem:[#allocation3 + $0x40] sm:$0xff] %v1818
      %1828 = vrot.lane.b32.xlu0 %v1773, 1
      %v1829 = vpop.permute.xlu0 %1828
      %1830 = vrot.lane.b32.xlu0 %v1771, 1
      %v1831 = vpop.permute.xlu0 %1830
      %1832 = vrot.lane.b32.xlu0 %v1772, 1
      %v1833 = vpop.permute.xlu0 %1832
      %v1834 = vsel %vm597, %v1831, %v1833
      %v1835 = vsel %vm597, %v1833, %v1829
      %v1840 = vsel %vm602, %v1829, %v1831
      %1842 = vst [vmem:[#allocation3 + $0x48] sm:$0xff] %v1840
      %1843 = vst [vmem:[#allocation3 + $0x50] sm:$0xff] %v1834
      %1844 = vst [vmem:[#allocation3 + $0x58] sm:$0xff] %v1835
      %1845 = vst [vmem:[#allocation3 + $0x60] sm:$0xff] %v1771
      %1846 = vst [vmem:[#allocation3 + $0x68] sm:$0xff] %v1772
      %1847 = vst [vmem:[#allocation3 + $0x70] sm:$0xff] %v1773
      %1848 = vrot.lane.b32.xlu0 %v1771, 127
      %v1849 = vpop.permute.xlu0 %1848
      %1850 = vrot.lane.b32.xlu0 %v1772, 127
      %v1851 = vpop.permute.xlu0 %1850
      %1852 = vrot.lane.b32.xlu0 %v1773, 127
      %v1853 = vpop.permute.xlu0 %1852
      %v1854 = vsel %vm622, %v1849, %v1851
      %v1855 = vsel %vm622, %v1851, %v1853
      %v1860 = vsel %vm627, %v1853, %v1849
      %1862 = vst [vmem:[#allocation3 + $0x78] sm:$0xff] %v1854
      %1863 = vst [vmem:[#allocation3 + $0x80] sm:$0xff] %v1855
      %1864 = vst [vmem:[#allocation3 + $0x88] sm:$0xff] %v1860
      %1865 = vrot.lane.b32.xlu0 %v1771, 111
      %v1866 = vpop.permute.xlu0 %1865
      %1867 = vrot.lane.b32.xlu0 %v1772, 111
      %v1868 = vpop.permute.xlu0 %1867
      %1869 = vrot.lane.b32.xlu0 %v1773, 111
      %v1870 = vpop.permute.xlu0 %1869
      %v1871 = vsel %vm641, %v1866, %v1868
      %v1872 = vsel %vm641, %v1868, %v1870
      %v1877 = vsel %vm646, %v1870, %v1866
      %1879 = vst [vmem:[#allocation3 + $0x90] sm:$0xff] %v1871
      %1880 = vst [vmem:[#allocation3 + $0x98] sm:$0xff] %v1872
      %1881 = vst [vmem:[#allocation3 + $0xa0] sm:$0xff] %v1877
      %1882 = vrot.lane.b32.xlu0 %v1771, 110
      %v1883 = vpop.permute.xlu0 %1882
      %1884 = vrot.lane.b32.xlu0 %v1772, 110
      %v1885 = vpop.permute.xlu0 %1884
      %1886 = vrot.lane.b32.xlu0 %v1773, 110
      %v1887 = vpop.permute.xlu0 %1886
      %v1888 = vsel %vm660, %v1883, %v1885
      %v1889 = vsel %vm660, %v1885, %v1887
      %v1894 = vsel %vm665, %v1887, %v1883
      %1896 = vst [vmem:[#allocation3 + $0xa8] sm:$0xff] %v1888
      %1897 = vst [vmem:[#allocation3 + $0xb0] sm:$0xff] %v1889
      %1898 = vst [vmem:[#allocation3 + $0xb8] sm:$0xff] %v1894
      %1899 = vrot.lane.b32.xlu0 %v1771, 109
      %v1900 = vpop.permute.xlu0 %1899
      %1901 = vrot.lane.b32.xlu0 %v1772, 109
      %v1902 = vpop.permute.xlu0 %1901
      %1903 = vrot.lane.b32.xlu0 %v1773, 109
      %v1904 = vpop.permute.xlu0 %1903
      %v1905 = vsel %vm679, %v1900, %v1902
      %v1906 = vsel %vm679, %v1902, %v1904
      %v1911 = vsel %vm684, %v1904, %v1900
      %1913 = vst [vmem:[#allocation3 + $0xc0] sm:$0xff] %v1905
      %1914 = vst [vmem:[#allocation3 + $0xc8] sm:$0xff] %v1906
      %1915 = vst [vmem:[#allocation3 + $0xd0] sm:$0xff] %v1911
      %v1916 = vadd.f32 %v1511, %v1763
      %v1917 = vadd.f32 %v1516, %v1768
      %v1918 = vxor.u32 %v1916, 2147483648
      %v1919 = vxor.u32 %v1917, 2147483648
      %v1920 = vmul.f32 %v1918, 1.442695
      %v1921 = vpow.pop %v1920
      %v1922 = vmul.f32 %v1919, 1.442695
      %v1923 = vpow.pop %v1922
      %v1924 = vadd.f32 %v1921, 1.0
      %v1925 = vadd.f32 %v1923, 1.0
      %v1926 = vrcp.pop %v1924
      %v1927 = vmul.f32 1.0, %v1926
      %v1928 = vrcp.pop %v1925
      %v1929 = vmul.f32 1.0, %v1928
      %v1930 = vld [vmem:[%s2] sm:$0xff]
      %v1931 = vld [vmem:[%s2 + $0x8] sm:$0xff]
      %1933 = vset.pattern.permute.xlu0 0
      %1934 = vperm.xlu0 %1933, %v1927
      %v1935 = vpop.permute.xlu0 %1934
      %1938 = vset.pattern.permute.xlu0 0
      %1939 = vperm.xlu0 %1938, %v1929
      %v1940 = vpop.permute.xlu0 %1939
      %v1942 = vmul.f32 %v1930, %v1935
      %v1943 = vmul.f32 %v1931, %v1940
      %1946 = vrot.lane.b32.xlu0 %v1763, 127
      %v1947 = vpop.permute.xlu0 %1946
      %1948 = vrot.lane.b32.xlu0 %v1768, 127
      %v1949 = vpop.permute.xlu0 %1948
      %v1952 = vadd.f32 %v1511, %v1947
      %v1953 = vadd.f32 %v1516, %v1949
      %v1954 = vxor.u32 %v1952, 2147483648
      %v1955 = vxor.u32 %v1953, 2147483648
      %v1956 = vmul.f32 %v1954, 1.442695
      %v1957 = vpow.pop %v1956
      %v1958 = vmul.f32 %v1955, 1.442695
      %v1959 = vpow.pop %v1958
      %v1960 = vadd.f32 %v1957, 1.0
      %v1961 = vadd.f32 %v1959, 1.0
      %v1962 = vrcp.pop %v1960
      %v1963 = vmul.f32 1.0, %v1962
      %v1964 = vrcp.pop %v1961
      %v1965 = vmul.f32 1.0, %v1964
      %v1966 = vld [vmem:[%s2 + $0x10] sm:$0xff]
      %v1967 = vld [vmem:[%s2 + $0x18] sm:$0xff]
      %1969 = vset.pattern.permute.xlu0 0
      %1970 = vperm.xlu0 %1969, %v1963
      %v1971 = vpop.permute.xlu0 %1970
      %1974 = vset.pattern.permute.xlu0 0
      %1975 = vperm.xlu0 %1974, %v1965
      %v1976 = vpop.permute.xlu0 %1975
      %v1978 = vmul.f32 %v1966, %v1971
      %v1979 = vmul.f32 %v1967, %v1976
      %1980 = vrot.lane.b32.xlu0 %v1763, 126
      %v1981 = vpop.permute.xlu0 %1980
      %1982 = vrot.lane.b32.xlu0 %v1768, 126
      %v1983 = vpop.permute.xlu0 %1982
      %v1986 = vadd.f32 %v1511, %v1981
      %v1987 = vadd.f32 %v1516, %v1983
      %v1988 = vxor.u32 %v1986, 2147483648
      %v1989 = vxor.u32 %v1987, 2147483648
      %v1990 = vmul.f32 %v1988, 1.442695
      %v1991 = vpow.pop %v1990
      %v1992 = vmul.f32 %v1989, 1.442695
      %v1993 = vpow.pop %v1992
      %v1994 = vadd.f32 %v1991, 1.0
      %v1995 = vadd.f32 %v1993, 1.0
      %v1996 = vrcp.pop %v1994
      %v1997 = vmul.f32 1.0, %v1996
      %v1998 = vrcp.pop %v1995
      %v1999 = vmul.f32 1.0, %v1998
      %v2000 = vld [vmem:[%s2 + $0x20] sm:$0xff]
      %v2001 = vld [vmem:[%s2 + $0x28] sm:$0xff]
      %2003 = vset.pattern.permute.xlu0 0
      %2004 = vperm.xlu0 %2003, %v1997
      %v2005 = vpop.permute.xlu0 %2004
      %2008 = vset.pattern.permute.xlu0 0
      %2009 = vperm.xlu0 %2008, %v1999
      %v2010 = vpop.permute.xlu0 %2009
      %v2012 = vmul.f32 %v2000, %v2005
      %v2013 = vmul.f32 %v2001, %v2010
      %2014 = vrot.lane.b32.xlu0 %v1763, 1
      %v2015 = vpop.permute.xlu0 %2014
      %2016 = vrot.lane.b32.xlu0 %v1768, 1
      %v2017 = vpop.permute.xlu0 %2016
      %v2020 = vadd.f32 %v1511, %v2015
      %v2021 = vadd.f32 %v1516, %v2017
      %v2022 = vxor.u32 %v2020, 2147483648
      %v2023 = vxor.u32 %v2021, 2147483648
      %v2024 = vmul.f32 %v2022, 1.442695
      %v2025 = vpow.pop %v2024
      %v2026 = vmul.f32 %v2023, 1.442695
      %v2027 = vpow.pop %v2026
      %v2028 = vadd.f32 %v2025, 1.0
      %v2029 = vadd.f32 %v2027, 1.0
      %v2030 = vrcp.pop %v2028
      %v2031 = vmul.f32 1.0, %v2030
      %v2032 = vrcp.pop %v2029
      %v2033 = vmul.f32 1.0, %v2032
      %v2034 = vld [vmem:[%s2 + $0x30] sm:$0xff]
      %v2035 = vld [vmem:[%s2 + $0x38] sm:$0xff]
      %2037 = vset.pattern.permute.xlu0 1
      %2038 = vperm.xlu0 %2037, %v2031
      %v2039 = vpop.permute.xlu0 %2038
      %2042 = vset.pattern.permute.xlu0 1
      %2043 = vperm.xlu0 %2042, %v2033
      %v2044 = vpop.permute.xlu0 %2043
      %v2046 = vmul.f32 %v2034, %v2039
      %v2047 = vmul.f32 %v2035, %v2044
      %v2048 = vld [vmem:[%s2 + $0x40] sm:$0xff]
      %v2049 = vld [vmem:[%s2 + $0x48] sm:$0xff]
      %2050 = vset.pattern.permute.xlu0 1
      %2051 = vperm.xlu0 %2050, %v1927
      %v2052 = vpop.permute.xlu0 %2051
      %2054 = vset.pattern.permute.xlu0 1
      %2055 = vperm.xlu0 %2054, %v1929
      %v2056 = vpop.permute.xlu0 %2055
      %v2058 = vmul.f32 %v2048, %v2052
      %v2059 = vmul.f32 %v2049, %v2056
      %v2060 = vld [vmem:[%s2 + $0x50] sm:$0xff]
      %v2061 = vld [vmem:[%s2 + $0x58] sm:$0xff]
      %2062 = vset.pattern.permute.xlu0 1
      %2063 = vperm.xlu0 %2062, %v1963
      %v2064 = vpop.permute.xlu0 %2063
      %2066 = vset.pattern.permute.xlu0 1
      %2067 = vperm.xlu0 %2066, %v1965
      %v2068 = vpop.permute.xlu0 %2067
      %v2070 = vmul.f32 %v2060, %v2064
      %v2071 = vmul.f32 %v2061, %v2068
      %2072 = vrot.lane.b32.xlu0 %v1763, 2
      %v2073 = vpop.permute.xlu0 %2072
      %2074 = vrot.lane.b32.xlu0 %v1768, 2
      %v2075 = vpop.permute.xlu0 %2074
      %v2078 = vadd.f32 %v1511, %v2073
      %v2079 = vadd.f32 %v1516, %v2075
      %v2080 = vxor.u32 %v2078, 2147483648
      %v2081 = vxor.u32 %v2079, 2147483648
      %v2082 = vmul.f32 %v2080, 1.442695
      %v2083 = vpow.pop %v2082
      %v2084 = vmul.f32 %v2081, 1.442695
      %v2085 = vpow.pop %v2084
      %v2086 = vadd.f32 %v2083, 1.0
      %v2087 = vadd.f32 %v2085, 1.0
      %v2088 = vrcp.pop %v2086
      %v2089 = vmul.f32 1.0, %v2088
      %v2090 = vrcp.pop %v2087
      %v2091 = vmul.f32 1.0, %v2090
      %v2092 = vld [vmem:[%s2 + $0x60] sm:$0xff]
      %v2093 = vld [vmem:[%s2 + $0x68] sm:$0xff]
      %2095 = vset.pattern.permute.xlu0 2
      %2096 = vperm.xlu0 %2095, %v2089
      %v2097 = vpop.permute.xlu0 %2096
      %2100 = vset.pattern.permute.xlu0 2
      %2101 = vperm.xlu0 %2100, %v2091
      %v2102 = vpop.permute.xlu0 %2101
      %v2104 = vmul.f32 %v2092, %v2097
      %v2105 = vmul.f32 %v2093, %v2102
      %v2106 = vld [vmem:[%s2 + $0x70] sm:$0xff]
      %v2107 = vld [vmem:[%s2 + $0x78] sm:$0xff]
      %2108 = vset.pattern.permute.xlu0 2
      %2109 = vperm.xlu0 %2108, %v2031
      %v2110 = vpop.permute.xlu0 %2109
      %2112 = vset.pattern.permute.xlu0 2
      %2113 = vperm.xlu0 %2112, %v2033
      %v2114 = vpop.permute.xlu0 %2113
      %v2116 = vmul.f32 %v2106, %v2110
      %v2117 = vmul.f32 %v2107, %v2114
      %v2118 = vld [vmem:[%s2 + $0x80] sm:$0xff]
      %v2119 = vld [vmem:[%s2 + $0x88] sm:$0xff]
      %2120 = vset.pattern.permute.xlu0 2
      %2121 = vperm.xlu0 %2120, %v1927
      %v2122 = vpop.permute.xlu0 %2121
      %2124 = vset.pattern.permute.xlu0 2
      %2125 = vperm.xlu0 %2124, %v1929
      %v2126 = vpop.permute.xlu0 %2125
      %v2128 = vmul.f32 %v2118, %v2122
      %v2129 = vmul.f32 %v2119, %v2126
      %v2130 = vpack.c.bf16 %v1943, %v1942
      %v2131 = vpack.c.bf16 %v1979, %v1978
      %v2132 = vpack.c.bf16 %v2013, %v2012
      %v2133 = vpack.c.bf16 %v2047, %v2046
      %v2134 = vpack.c.bf16 %v2059, %v2058
      %v2135 = vpack.c.bf16 %v2071, %v2070
      %v2136 = vpack.c.bf16 %v2105, %v2104
      %v2137 = vpack.c.bf16 %v2117, %v2116
      %v2138 = vpack.c.bf16 %v2129, %v2128
      %v2139 = vld [vmem:[#allocation3] sm:$0xff]
      %v2140 = vld [vmem:[#allocation3 + $0x8] sm:$0xff]
      %v2141 = vld [vmem:[#allocation3 + $0x10] sm:$0xff]
      %v2142 = vld [vmem:[#allocation3 + $0x18] sm:$0xff]
      %v2143 = vld [vmem:[#allocation3 + $0x20] sm:$0xff]
      %v2144 = vld [vmem:[#allocation3 + $0x28] sm:$0xff]
      %v2145 = vld [vmem:[#allocation3 + $0x30] sm:$0xff]
      %v2146 = vld [vmem:[#allocation3 + $0x38] sm:$0xff]
      %v2147 = vld [vmem:[#allocation3 + $0x40] sm:$0xff]
      %v2148 = vld [vmem:[#allocation3 + $0x48] sm:$0xff]
      %v2149 = vld [vmem:[#allocation3 + $0x50] sm:$0xff]
      %v2150 = vld [vmem:[#allocation3 + $0x58] sm:$0xff]
      %v2151 = vld [vmem:[#allocation3 + $0x60] sm:$0xff]
      %v2152 = vld [vmem:[#allocation3 + $0x68] sm:$0xff]
      %v2153 = vld [vmem:[#allocation3 + $0x70] sm:$0xff]
      %v2154 = vld [vmem:[#allocation3 + $0x78] sm:$0xff]
      %v2155 = vld [vmem:[#allocation3 + $0x80] sm:$0xff]
      %v2156 = vld [vmem:[#allocation3 + $0x88] sm:$0xff]
      %v2157 = vld [vmem:[#allocation3 + $0x90] sm:$0xff]
      %v2158 = vld [vmem:[#allocation3 + $0x98] sm:$0xff]
      %v2159 = vld [vmem:[#allocation3 + $0xa0] sm:$0xff]
      %v2160 = vld [vmem:[#allocation3 + $0xa8] sm:$0xff]
      %v2161 = vld [vmem:[#allocation3 + $0xb0] sm:$0xff]
      %v2162 = vld [vmem:[#allocation3 + $0xb8] sm:$0xff]
      %v2163 = vld [vmem:[#allocation3 + $0xc0] sm:$0xff]
      %v2164 = vld [vmem:[#allocation3 + $0xc8] sm:$0xff]
      %v2165 = vld [vmem:[#allocation3 + $0xd0] sm:$0xff]
      %v2166 = vunpack.c.l.bf16 %v516
      %v2167 = vunpack.c.h.bf16 %v516
      %v2168 = vunpack.c.l.bf16 %v517
      %v2169 = vunpack.c.l.bf16 %v518
      %v2170 = vunpack.c.h.bf16 %v518
      %v2171 = vunpack.c.l.bf16 %v519
      %v2172 = vld [vmem:[%s3] sm:$0xff]
      %v2173 = vld [vmem:[%s3 + $0x8] sm:$0xff]
      %2175 = vset.pattern.permute.xlu0 1
      %2176 = vperm.xlu0 %2175, %v2172
      %v2177 = vpop.permute.xlu0 %2176
      %2180 = vset.pattern.permute.xlu0 1
      %2181 = vperm.xlu0 %2180, %v2173
      %v2182 = vpop.permute.xlu0 %2181
      %2184 = vxpose.xlu0.c.b16.start [1/8] %v2130, 128
      %2185 = vxpose.xlu0.c.b16.cont [2/8] %v2131, 128
      %2186 = vxpose.xlu0.c.b16.cont [3/8] %v2132, 128
      %2187 = vxpose.xlu0.c.b16.cont [4/8] %v2133, 128
      %2188 = vxpose.xlu0.c.b16.cont [5/8] %v2134, 128
      %2189 = vxpose.xlu0.c.b16.cont [6/8] %v2135, 128
      %2190 = vxpose.xlu0.c.b16.cont [7/8] %v2136, 128
      %2191 = vxpose.xlu0.c.b16.end [8/8] %v2137, 128
      %v2192 = vpop.trf.xlu0
      %v2193 = vpop.trf.xlu0
      %v2194 = vpop.trf.xlu0
      %v2195 = vpop.trf.xlu0
      %v2196 = vpop.trf.xlu0
      %v2197 = vpop.trf.xlu0
      %v2198 = vpop.trf.xlu0
      %v2199 = vpop.trf.xlu0
      %2200 = vxpose.xlu0.c.b16.start [1/8] %v2138, 128
      %2201 = vxpose.xlu0.c.b16.cont [2/8] 0, 128
      %2202 = vxpose.xlu0.c.b16.cont [3/8] 0, 128
      %2203 = vxpose.xlu0.c.b16.cont [4/8] 0, 128
      %2204 = vxpose.xlu0.c.b16.cont [5/8] 0, 128
      %2205 = vxpose.xlu0.c.b16.cont [6/8] 0, 128
      %2206 = vxpose.xlu0.c.b16.cont [7/8] 0, 128
      %2207 = vxpose.xlu0.c.b16.end [8/8] 0, 128
      %v2208 = vpop.trf.xlu0
      %v2209 = vpop.trf.xlu0
      %v2210 = vpop.trf.xlu0
      %v2211 = vpop.trf.xlu0
      %v2212 = vpop.trf.xlu0
      %v2213 = vpop.trf.xlu0
      %v2214 = vpop.trf.xlu0
      %v2215 = vpop.trf.xlu0
      %v2217 = vsel %vm742, %v2208, 0
      %2219 = vmatprep.subr.bf16.mxu0 %v2140
      %2220 = vmatpush1.bf16.msra.mxu0 %v2139
      %2221 = vmatprep.subr.bf16.mxu0 %v2143
      %2222 = vmatpush1.bf16.msra.mxu0 %v2142
      %2223 = vmatprep.subr.bf16.mxu0 %v2146
      %2224 = vmatpush1.bf16.msra.mxu0 %v2145
      %2225 = vmatprep.subr.bf16.mxu0 %v2149
      %2226 = vmatpush1.bf16.msra.mxu0 %v2148
      %2227 = vmatprep.subr.bf16.mxu0 %v2152
      %2228 = vmatpush1.bf16.msra.mxu0 %v2151
      %2229 = vmatprep.subr.bf16.mxu0 %v2155
      %2230 = vmatpush1.bf16.msra.mxu0 %v2154
      %2231 = vmatprep.subr.bf16.mxu0 %v2158
      %2232 = vmatpush1.bf16.msra.mxu0 %v2157
      %2233 = vmatprep.subr.bf16.mxu0 %v2161
      %2234 = vmatpush1.bf16.msra.mxu0 %v2160
      %2235 = vmatprep.subr.bf16.mxu0 %v2164
      %2236 = vmatpush1.bf16.msra.mxu0 %v2163
      %2237 = vmatprep.subr.bf16.mxu0 0
      %2238 = vmatpush1.bf16.msra.mxu0 0
      %2239 = vmatprep.subr.bf16.mxu0 0
      %2240 = vmatpush1.bf16.msra.mxu0 0
      %2241 = vmatprep.subr.bf16.mxu0 0
      %2242 = vmatpush1.bf16.msra.mxu0 0
      %2243 = vmatprep.subr.bf16.mxu0 0
      %2244 = vmatpush1.bf16.msra.mxu0 0
      %2245 = vmatprep.subr.bf16.mxu0 0
      %2246 = vmatpush1.bf16.msra.mxu0 0
      %2247 = vmatprep.subr.bf16.mxu0 0
      %2248 = vmatpush1.bf16.msra.mxu0 0
      %2249 = vmatprep.subr.bf16.mxu0 0
      %2250 = vmatpush1.bf16.msra.mxu0 0
      %2251 = vmatprep.mubr.bf16.mxu0 %v2217
      %2252 = vmatmul.mubr.bf16.gmra.mrb[0].mxu0 %v2192
      %v2253 = vpop.f32.mrb[0].mxu0
      %v2254 = vadd.f32 %v2177, %v2253
      %v2255 = vpop.f32.mrb[0].mxu0
      %v2256 = vadd.f32 %v2177, %v2255
      %v2257 = vpop.f32.mrb[0].mxu0
      %v2258 = vadd.f32 %v2182, %v2257
      %v2259 = vpop.f32.mrb[0].mxu0
      %v2260 = vadd.f32 %v2182, %v2259
      %2261 = vdwg.mxu0
      %2262 = vmatprep.subr.bf16.mxu0 0
      %2263 = vmatpush1.bf16.msra.mxu0 %v2141
      %2264 = vmatprep.subr.bf16.mxu0 0
      %2265 = vmatpush1.bf16.msra.mxu0 %v2144
      %2266 = vmatprep.subr.bf16.mxu0 0
      %2267 = vmatpush1.bf16.msra.mxu0 %v2147
      %2268 = vmatprep.subr.bf16.mxu0 0
      %2269 = vmatpush1.bf16.msra.mxu0 %v2150
      %2270 = vmatprep.subr.bf16.mxu0 0
      %2271 = vmatpush1.bf16.msra.mxu0 %v2153
      %2272 = vmatprep.subr.bf16.mxu0 0
      %2273 = vmatpush1.bf16.msra.mxu0 %v2156
      %2274 = vmatprep.subr.bf16.mxu0 0
      %2275 = vmatpush1.bf16.msra.mxu0 %v2159
      %2276 = vmatprep.subr.bf16.mxu0 0
      %2277 = vmatpush1.bf16.msra.mxu0 %v2162
      %2278 = vmatprep.subr.bf16.mxu0 0
      %2279 = vmatpush1.bf16.msra.mxu0 %v2165
      %2280 = vmatprep.subr.bf16.mxu0 0
      %2281 = vmatpush1.bf16.msra.mxu0 0
      %2282 = vmatprep.subr.bf16.mxu0 0
      %2283 = vmatpush1.bf16.msra.mxu0 0
      %2284 = vmatprep.subr.bf16.mxu0 0
      %2285 = vmatpush1.bf16.msra.mxu0 0
      %2286 = vmatprep.subr.bf16.mxu0 0
      %2287 = vmatpush1.bf16.msra.mxu0 0
      %2288 = vmatprep.subr.bf16.mxu0 0
      %2289 = vmatpush1.bf16.msra.mxu0 0
      %2290 = vmatprep.subr.bf16.mxu0 0
      %2291 = vmatpush1.bf16.msra.mxu0 0
      %2292 = vmatprep.subr.bf16.mxu0 0
      %2293 = vmatpush1.bf16.msra.mxu0 0
      %2294 = vmatprep.mubr.bf16.mxu0 %v2217
      %2295 = vmatmul.mubr.bf16.gmra.mrb[0].mxu0 %v2192
      %v2296 = vpop.f32.mrb[0].mxu0
      %v2297 = vadd.f32 %v2177, %v2296
      %v2298 = vpop.f32.mrb[0].mxu0
      %v2299 = vpop.f32.mrb[0].mxu0
      %v2300 = vadd.f32 %v2182, %v2299
      %v2301 = vpop.f32.mrb[0].mxu0
      %2302 = vdwg.mxu0
      %v2303 = vadd.f32 %v2254, %v2166
      %v2304 = vadd.f32 %v2256, %v2167
      %v2305 = vadd.f32 %v2297, %v2168
      %v2306 = vadd.f32 %v2258, %v2169
      %v2307 = vadd.f32 %v2260, %v2170
      %v2308 = vadd.f32 %v2300, %v2171
      %v2309 = vmax.f32 %v2303, 0.0
      %v2310 = vmax.f32 %v2304, 0.0
      %v2311 = vmax.f32 %v2305, 0.0
      %v2312 = vmax.f32 %v2306, 0.0
      %v2313 = vmax.f32 %v2307, 0.0
      %v2314 = vmax.f32 %v2308, 0.0
      %2315 = vst [vmem:[%s514] sm:$0xff] %v2309
      %2316 = vst [vmem:[%s514 + $0x8] sm:$0xff] %v2310
      %2317 = vst [vmem:[%s514 + $0x10] sm:$0xff] %v2311
      %2318 = vst [vmem:[%s514 + $0x18] sm:$0xff] %v2312
      %2319 = vst [vmem:[%s514 + $0x20] sm:$0xff] %v2313
      %2320 = vst [vmem:[%s514 + $0x28] sm:$0xff] %v2314
      %p2321 = scmp.lt.s32.totalorder %s26, 1
      %s2322 = scalar_select %p2321, %s26, 1
      %s2323 = smul.addr %s2322, 6
      %s2324 = smul.addr %s2323, 8
      %s2325 = scalar_lea.vmem %s15, %s2324
      // Predicated region
      $region81: #{basic_block_forward.1} parent=79 // pred_check
        %p2326 = pneg %p369
      $region82: #{basic_block_forward.1} parent=79 // pred_check_branch
        %2328 = sbr.rel (%p2326) target = $region84
      $region83: #{basic_block_forward.1} parent=79 // pred_region
        _
      $region84: #{basic_block_forward.1} parent=79 // pred_fallthru
        _
    $region80: #{basic_block_forward.1} parent=5 // pred_fallthru
      _
    %p2329 = scmp.le.s32.totalorder 2, %s21
    // Predicated region
    $region85: #{basic_block_forward.1} parent=5 // pred_check
      %p2330 = pneg %p2329
    $region86: #{basic_block_forward.1} parent=5 // pred_check_branch
      %2332 = sbr.rel (%p2330) target = $region88
    $region87: #{basic_block_forward.1} parent=5 // pred_region
      %s2333 = ssub.s32 %s21, 2
      // Predicated region
      $region89: #{basic_block_forward.1} parent=87 // pred_check
        %p2334 = pneg %p375
      $region90: #{basic_block_forward.1} parent=87 // pred_check_branch
        %2336 = sbr.rel (%p2334) target = $region92
      $region91: #{basic_block_forward.1} parent=87 // pred_region
        %p2337 = scmp.lt.s32.totalorder %s27, 1
        %s2338 = scalar_select %p2337, %s27, 1
        %s2339 = smul.addr %s2338, 6
        %s2340 = smul.addr %s2339, 8
        %s2341 = scalar_lea.vmem %s15, %s2340
      $region92: #{basic_block_forward.1} parent=87 // pred_fallthru
        _
    $region88: #{basic_block_forward.1} parent=5 // pred_fallthru
      _
  $region6: #{basic_block_forward.1} parent=0 // loop_footer
    %s25 = sadd.s32 1, %s21
  $region7: #{basic_block_forward.1} parent=0 // loop_footer_branch
    %20 = sbr.rel target = $region3
  $region8: #{basic_block_forward.1} parent=0 // loop_exit
    _

</llo_original>
